<compile_context>
chip_gen: v7x
topology: tpu7x:2x2x1
jax: 0.10.0
libtpu: 0.0.40
codegen_flags: <defaults>
</compile_context>

<pallas_src>
import jax
import jax.numpy as jnp
from jax.experimental import pallas as pl
from jax.experimental.pallas import tpu as pltpu


# ----------------------------------------------------------------------------
# Fused full-decode kernel (all T steps inside one grid invocation)
# ----------------------------------------------------------------------------
def decode_kernel(emb_ref, hid0_ref, enc_ref,
                  wah_ref, wae_ref, ba_ref, v_ref,
                  wih_e_ref, wih_w_ref, whh_ref, bih_ref, bhh_ref,
                  wfc_h_ref, wfc_w_ref, wfc_e_ref, bfc_ref,
                  pred_ref, hid_ref, attn_ref):
    T = emb_ref.shape[0]
    BB, S, EH2 = enc_ref.shape
    H = hid0_ref.shape[1]
    Vp = bfc_ref.shape[1]

    # ---- per-sequence work, hoisted out of the decode loop ------------------
    enc = enc_ref[...]                                         # (BB, S, EH2) f32
    # Encoder-side attention projection (+ attn bias), computed once.
    proje = (jnp.dot(enc.reshape(BB * S, EH2), wae_ref[...],
                     preferred_element_type=jnp.float32)
             + ba_ref[...]).reshape(BB, S, H)                  # (BB, S, H)
    # Hoisted broadcasts (JAX does not CSE broadcast_in_dim inside a loop).
    v_b = jnp.broadcast_to(v_ref[...].reshape(1, 1, H), (BB, S, H))
    bih = jnp.broadcast_to(bih_ref[...], (BB, 3 * H))
    bhh = jnp.broadcast_to(bhh_ref[...], (BB, 3 * H))
    bfc = jnp.broadcast_to(bfc_ref[...], (BB, Vp))
    # Resident weights, read once.
    wah = wah_ref[...]
    wih_e = wih_e_ref[...]
    wih_w = wih_w_ref[...]
    whh = whh_ref[...]
    wfc_h = wfc_h_ref[...]
    wfc_w = wfc_w_ref[...]
    wfc_e = wfc_e_ref[...]

    def step(t, carry):
        hid, hid_bf = carry                                    # (BB,H) f32 / bf16
        emb = emb_ref[t]                                       # (BB, E) bf16

        # ---- attention: softmax_s( v . tanh(W_h h + W_e enc + b) ) ----------
        proj_h = jnp.dot(hid_bf, wah, preferred_element_type=jnp.float32)
        energy = jnp.tanh(proje + proj_h[:, None, :])          # (BB, S, H)
        scores = jnp.sum(energy * v_b, axis=-1)                # (BB, S)
        scores = scores - jnp.max(scores, axis=-1, keepdims=True)
        exp_s = jnp.exp(scores)
        denom = jnp.sum(exp_s, axis=-1, keepdims=True)
        a = exp_s * pl.reciprocal(denom, approx=False)         # EUP reciprocal
        attn_ref[t] = a

        # ---- weighted context (tiny: VPU mult + sublane reduce) -------------
        weighted = jnp.sum(a[:, :, None] * enc, axis=1)        # (BB, EH2) f32
        weighted_bf = weighted.astype(jnp.bfloat16)

        # ---- single-step GRU (PyTorch gate order r, z, n), split dots -------
        gi = (jnp.dot(emb, wih_e, preferred_element_type=jnp.float32)
              + jnp.dot(weighted_bf, wih_w, preferred_element_type=jnp.float32)
              + bih)                                           # (BB, 3H)
        gh = jnp.dot(hid_bf, whh, preferred_element_type=jnp.float32) + bhh
        r = jax.nn.sigmoid(gi[:, 0:H] + gh[:, 0:H])
        z = jax.nn.sigmoid(gi[:, H:2 * H] + gh[:, H:2 * H])
        n = jnp.tanh(gi[:, 2 * H:3 * H] + r * gh[:, 2 * H:3 * H])
        h_new = (1.0 - z) * n + z * hid                        # (BB, H) f32
        h_new_bf = h_new.astype(jnp.bfloat16)                  # bf16 shadow

        # ---- fc_out on (output, weighted, embedded): split dots, lane-dense -
        pred = (jnp.dot(h_new_bf, wfc_h, preferred_element_type=jnp.float32)
                + jnp.dot(weighted_bf, wfc_w, preferred_element_type=jnp.float32)
                + jnp.dot(emb, wfc_e, preferred_element_type=jnp.float32)
                + bfc)                                         # (BB, Vp)
        pred_ref[t] = pred
        return (h_new, h_new_bf)

    hid0 = hid0_ref[...]
    h_final, _ = jax.lax.fori_loop(
        0, T, step, (hid0, hid0.astype(jnp.bfloat16)), unroll=(T <= 16))
    hid_ref[...] = h_final


def _decode_pallas(dp, emb_all, hidden0, enc_b):
    """Run the whole decode in one pallas_call.
    emb_all: (T,B,E) bf16, hidden0: (B,H) f32, enc_b: (B,S,EH2) f32."""
    T, B, E = emb_all.shape
    _, S, EH2 = enc_b.shape
    H = hidden0.shape[1]
    Vp = dp['b_fc'].shape[1]

    # Pad batch to a multiple of 8 (sublane alignment); slice back afterwards.
    B_orig = B
    pad = (-B) % 8
    if pad:
        emb_all = jnp.pad(emb_all, ((0, 0), (0, pad), (0, 0)))
        hidden0 = jnp.pad(hidden0, ((0, pad), (0, 0)))
        enc_b = jnp.pad(enc_b, ((0, pad), (0, 0), (0, 0)))
        B = B + pad

    # Batch block: as large as possible (fill MXU rows), but keep >= 2 programs
    # on the parallel axis when possible so both v7x TensorCores get work.
    BB = B // 2 if (B >= 16 and B % 16 == 0) else B
    NB = pl.cdiv(B, BB)

    full_t = lambda b: (0, b, 0)
    per_b2 = lambda b: (b, 0)
    per_b3 = lambda b: (b, 0, 0)
    const2 = lambda b: (0, 0)

    in_specs = [
        pl.BlockSpec((T, BB, E), full_t),          # embedded tokens (all T)
        pl.BlockSpec((BB, H), per_b2),             # initial hidden
        pl.BlockSpec((BB, S, EH2), per_b3),        # encoder outputs (resident)
        pl.BlockSpec((H, H), const2),              # attn W_h (bf16)
        pl.BlockSpec((EH2, H), const2),            # attn W_e (f32, used once)
        pl.BlockSpec((1, H), const2),              # attn bias
        pl.BlockSpec((1, H), const2),              # v
        pl.BlockSpec((E, 3 * H), const2),          # GRU W_ih (embedded part)
        pl.BlockSpec((EH2, 3 * H), const2),        # GRU W_ih (weighted part)
        pl.BlockSpec((H, 3 * H), const2),          # GRU W_hh
        pl.BlockSpec((1, 3 * H), const2),          # b_ih
        pl.BlockSpec((1, 3 * H), const2),          # b_hh
        pl.BlockSpec((H, Vp), const2),             # fc W (hidden part, padded)
        pl.BlockSpec((EH2, Vp), const2),           # fc W (weighted part, padded)
        pl.BlockSpec((E, Vp), const2),             # fc W (embedded part, padded)
        pl.BlockSpec((1, Vp), const2),             # fc bias (padded)
    ]
    out_specs = (
        pl.BlockSpec((T, BB, Vp), full_t),         # predictions (all T)
        pl.BlockSpec((BB, H), per_b2),             # final hidden
        pl.BlockSpec((T, BB, S), full_t),          # attention weights (all T)
    )
    out_shape = (
        jax.ShapeDtypeStruct((T, B, Vp), jnp.float32),
        jax.ShapeDtypeStruct((B, H), jnp.float32),
        jax.ShapeDtypeStruct((T, B, S), jnp.float32),
    )

    preds, h_final, attn = pl.pallas_call(
        decode_kernel,
        out_shape=out_shape,
        grid_spec=pltpu.PrefetchScalarGridSpec(
            num_scalar_prefetch=0,
            grid=(NB,),
            in_specs=in_specs,
            out_specs=out_specs,
        ),
        compiler_params=pltpu.CompilerParams(
            dimension_semantics=("parallel",),
            vmem_limit_bytes=32 * 1024 * 1024,     # well under v7x's 64 MiB/TC
        ),
    )(emb_all, hidden0, enc_b,
      dp['w_ah'], dp['w_ae'], dp['b_a'], dp['v'],
      dp['w_ih_e'], dp['w_ih_w'], dp['w_hh'], dp['b_ih'], dp['b_hh'],
      dp['w_fc_h'], dp['w_fc_w'], dp['w_fc_e'], dp['b_fc'])

    return preds[:, :B_orig], h_final[:B_orig], attn[:, :B_orig]


# ----------------------------------------------------------------------------
# Pure-JAX glue: encoder (fused bidirectional GRU) and parameter preparation
# ----------------------------------------------------------------------------
def encoder_forward(params, src):
    """src: (S, B, C). Fused fwd+bwd GRU in ONE lax.scan (stacked direction
    weights). Returns encoder_outputs (S, B, 2*EH), hidden (B, H)."""
    S, B, C = src.shape
    EH = params['enc_w_hh'].shape[-1]
    w_ih = params['enc_w_ih']                      # (2, 3EH, C)
    w_hh = params['enc_w_hh']                      # (2, 3EH, EH)
    b_ih = params['enc_b_ih'][:, None, :]          # (2, 1, 3EH)
    b_hh = params['enc_b_hh'][:, None, :]
    h0 = jnp.zeros((2, B, EH), jnp.float32)
    # direction 0 sees src[t], direction 1 sees src[S-1-t]
    x_seq = jnp.stack([src, src[::-1]], axis=1)    # (S, 2, B, C)

    def step(h, x):
        gi = jnp.einsum('dbc,dgc->dbg', x, w_ih) + b_ih
        gh = jnp.einsum('dbe,dge->dbg', h, w_hh) + b_hh
        r = jax.nn.sigmoid(gi[..., :EH] + gh[..., :EH])
        z = jax.nn.sigmoid(gi[..., EH:2 * EH] + gh[..., EH:2 * EH])
        n = jnp.tanh(gi[..., 2 * EH:] + r * gh[..., 2 * EH:])
        h2 = (1.0 - z) * n + z * h
        return h2, h2

    h_fin, outs = jax.lax.scan(step, h0, x_seq)    # outs: (S, 2, B, EH)
    enc_outputs = jnp.concatenate([outs[:, 0], outs[::-1, 1]], axis=-1)
    hidden = jnp.tanh(
        jnp.concatenate([h_fin[0], h_fin[1]], axis=-1) @ params['enc_fc_w'].T
        + params['enc_fc_b'])
    return enc_outputs, hidden


def preprocess_decoder(params):
    """One-time weight preparation: transpose, split the fused matmul weights
    (removes per-step lane-offset concats), zero-pad fc columns to a 128-lane
    multiple (lane-dense stores), bf16 cast. Hoisted out of the decode loop."""
    H = params['w_hh'].shape[1]
    E = params['embedding'].shape[1]
    V = params['fc_b'].shape[0]
    EH2 = params['attn_w'].shape[1] - H
    Vp = ((V + 127) // 128) * 128

    attn_wt = params['attn_w'].T                   # (H+EH2, H), rows=[hidden|enc]
    w_ih_t = params['w_ih'].T                      # (E+EH2, 3H), rows=[emb|weighted]
    fc_wt = params['fc_w'].T                       # (H+EH2+E, V), rows=[out|weighted|emb]

    def pad_v(w):
        return jnp.pad(w, ((0, 0), (0, Vp - V)))

    return dict(
        vocab=V,
        embedding=params['embedding'].astype(jnp.bfloat16),
        w_ah=attn_wt[:H].astype(jnp.bfloat16),
        w_ae=attn_wt[H:],                          # f32: used once per sequence
        b_a=params['attn_b'].reshape(1, -1),
        v=params['v_w'].reshape(1, -1),
        w_ih_e=w_ih_t[:E].astype(jnp.bfloat16),
        w_ih_w=w_ih_t[E:].astype(jnp.bfloat16),
        w_hh=params['w_hh'].T.astype(jnp.bfloat16),
        b_ih=params['b_ih'].reshape(1, -1),
        b_hh=params['b_hh'].reshape(1, -1),
        w_fc_h=pad_v(fc_wt[:H]).astype(jnp.bfloat16),
        w_fc_w=pad_v(fc_wt[H:H + EH2]).astype(jnp.bfloat16),
        w_fc_e=pad_v(fc_wt[H + EH2:]).astype(jnp.bfloat16),
        b_fc=pad_v(params['fc_b'].reshape(1, -1)),
    )


def seq2seq_forward(params, dec_prep, src, trg):
    """Matches Seq2Seq.forward: src (S,B,C) float, trg (T,B) int.
    Returns outputs (B, T, V), final hidden (B, H), attention (T, B, S)."""
    enc_outputs, hidden = encoder_forward(params, src)
    enc_b = jnp.transpose(enc_outputs, (1, 0, 2))              # (B,S,EH2) f32
    emb_all = jnp.take(dec_prep['embedding'], trg, axis=0)     # (T,B,E) bf16
    # nn.Dropout is identity in eval mode.
    preds, h_final, attn = _decode_pallas(dec_prep, emb_all, hidden, enc_b)
    V = dec_prep['vocab']
    return jnp.transpose(preds[..., :V], (1, 0, 2)), h_final, attn


# ----------------------------------------------------------------------------
# Pure-JAX reference (faithful f32 transcription of the PyTorch module)
# ----------------------------------------------------------------------------
def _decoder_step_ref(params, tok, hidden, enc_b):
    H = hidden.shape[1]
    B, S, _ = enc_b.shape
    embedded = params['embedding'][tok]
    hid_rep = jnp.broadcast_to(hidden[:, None, :], (B, S, H))
    energy = jnp.tanh(jnp.concatenate([hid_rep, enc_b], axis=2) @ params['attn_w'].T
                      + params['attn_b'])
    a = jax.nn.softmax((energy @ params['v_w'].T)[..., 0], axis=1)
    weighted = jnp.einsum('bs,bse->be', a, enc_b)
    x = jnp.concatenate([embedded, weighted], axis=1)
    gi = x @ params['w_ih'].T + params['b_ih']
    gh = hidden @ params['w_hh'].T + params['b_hh']
    r = jax.nn.sigmoid(gi[:, :H] + gh[:, :H])
    z = jax.nn.sigmoid(gi[:, H:2 * H] + gh[:, H:2 * H])
    n = jnp.tanh(gi[:, 2 * H:] + r * gh[:, 2 * H:])
    h_new = (1.0 - z) * n + z * hidden
    pred = (jnp.concatenate([h_new, weighted, embedded], axis=1) @ params['fc_w'].T
            + params['fc_b'])
    return pred, h_new, a


def seq2seq_reference(params, src, trg):
    enc_outputs, hidden = encoder_forward(params, src)
    enc_b = jnp.transpose(enc_outputs, (1, 0, 2))
    preds, attns = [], []
    for t in range(trg.shape[0]):
        pred, hidden, a = _decoder_step_ref(params, trg[t], hidden, enc_b)
        preds.append(pred)
        attns.append(a)
    outputs = jnp.transpose(jnp.stack(preds, axis=0), (1, 0, 2))   # (B, T, V)
    return outputs, hidden, jnp.stack(attns, axis=0)


# ----------------------------------------------------------------------------
# Parameter init
# ----------------------------------------------------------------------------
def init_params(key, vocab_size, enc_hid, dec_hid, img_channel, emb_dim):
    eh2 = 2 * enc_hid
    ks = jax.random.split(key, 16)

    def w(k, shape, scale=0.1):
        return (scale * jax.random.normal(k, shape)).astype(jnp.float32)

    return dict(
        # encoder bidirectional GRU (stacked fwd/bwd weights) + fc
        enc_w_ih=w(ks[0], (2, 3 * enc_hid, img_channel)),
        enc_w_hh=w(ks[1], (2, 3 * enc_hid, enc_hid)),
        enc_b_ih=w(ks[2], (2, 3 * enc_hid)),
        enc_b_hh=w(ks[3], (2, 3 * enc_hid)),
        enc_fc_w=w(ks[4], (dec_hid, eh2)),
        enc_fc_b=w(ks[5], (dec_hid,)),
        # attention (cols = [hidden | enc])
        attn_w=w(ks[6], (dec_hid, dec_hid + eh2)),
        attn_b=w(ks[7], (dec_hid,)),
        v_w=w(ks[8], (1, dec_hid)),
        # decoder (GRU cols = [embedded | weighted]; fc cols = [out|weighted|emb])
        embedding=w(ks[9], (vocab_size, emb_dim)),
        w_ih=w(ks[10], (3 * dec_hid, emb_dim + eh2)),
        w_hh=w(ks[11], (3 * dec_hid, dec_hid)),
        b_ih=w(ks[12], (3 * dec_hid,)),
        b_hh=w(ks[13], (3 * dec_hid,)),
        fc_w=w(ks[14], (vocab_size, dec_hid + eh2 + emb_dim)),
        fc_b=w(ks[15], (vocab_size,)),
    )


if __name__ == "__main__":
    vocab_size, enc_hid, dec_hid = 64, 16, 32
    img_channel, emb_dim = 8, 16
    src_len, trg_len, batch = 8, 5, 16    # batch=16 -> 2 parallel batch blocks

    key = jax.random.PRNGKey(0)
    kp, ksrc, ktrg = jax.random.split(key, 3)
    params = init_params(kp, vocab_size, enc_hid, dec_hid, img_channel, emb_dim)
    dec_prep = preprocess_decoder(params)   # one-time weight split/pad/bf16

    src = jax.random.normal(ksrc, (src_len, batch, img_channel), dtype=jnp.float32)
    trg = jax.random.randint(ktrg, (trg_len, batch), 0, vocab_size, dtype=jnp.int32)

    out, h_final, attn = seq2seq_forward(params, dec_prep, src, trg)
    jax.block_until_ready((out, h_final, attn))

    assert out.shape == (batch, trg_len, vocab_size)
    assert h_final.shape == (batch, dec_hid)
    assert attn.shape == (trg_len, batch, src_len)

    out_r, h_r, attn_r = seq2seq_reference(params, src, trg)
    assert jnp.allclose(out, out_r, atol=5e-2, rtol=5e-2), \
        float(jnp.max(jnp.abs(out - out_r)))
    assert jnp.allclose(h_final, h_r, atol=5e-2, rtol=5e-2), \
        float(jnp.max(jnp.abs(h_final - h_r)))
    assert jnp.allclose(attn, attn_r, atol=5e-2, rtol=5e-2), \
        float(jnp.max(jnp.abs(attn - attn_r)))

    print("KERNEL_OK")
</pallas_src>

<mosaic_0001>
module attributes {stable_mosaic.version = 11 : i64} {
  func.func @decode_kernel(%arg0: i32, %arg1: memref<5x8x16xbf16, #tpu.memory_space<vmem>>, %arg2: memref<8x32xf32, #tpu.memory_space<vmem>>, %arg3: memref<8x8x32xf32, #tpu.memory_space<vmem>>, %arg4: memref<32x32xbf16, #tpu.memory_space<vmem>>, %arg5: memref<32x32xf32, #tpu.memory_space<vmem>>, %arg6: memref<1x32xf32, #tpu.memory_space<vmem>>, %arg7: memref<1x32xf32, #tpu.memory_space<vmem>>, %arg8: memref<16x96xbf16, #tpu.memory_space<vmem>>, %arg9: memref<32x96xbf16, #tpu.memory_space<vmem>>, %arg10: memref<32x96xbf16, #tpu.memory_space<vmem>>, %arg11: memref<1x96xf32, #tpu.memory_space<vmem>>, %arg12: memref<1x96xf32, #tpu.memory_space<vmem>>, %arg13: memref<32x128xbf16, #tpu.memory_space<vmem>>, %arg14: memref<32x128xbf16, #tpu.memory_space<vmem>>, %arg15: memref<16x128xbf16, #tpu.memory_space<vmem>>, %arg16: memref<1x128xf32, #tpu.memory_space<vmem>>, %arg17: memref<5x8x128xf32, #tpu.memory_space<vmem>>, %arg18: memref<8x32xf32, #tpu.memory_space<vmem>>, %arg19: memref<5x8x8xf32, #tpu.memory_space<vmem>>) attributes {dimension_semantics = [#tpu.dimension_semantics<parallel>], iteration_bounds = array<i64: 2>, scalar_prefetch = 0 : i64, scratch_operands = 0 : i64, tpu.core_type = #tpu.core_type<tc>, window_params = [{transform_indices = @transform_0, window_bounds = array<i64: 5, 8, 16>}, {transform_indices = @transform_1, window_bounds = array<i64: 8, 32>}, {transform_indices = @transform_2, window_bounds = array<i64: 8, 8, 32>}, {pipeline_mode = #tpu.pipeline_mode<synchronous>, transform_indices = @transform_3, window_bounds = array<i64: 32, 32>}, {pipeline_mode = #tpu.pipeline_mode<synchronous>, transform_indices = @transform_4, window_bounds = array<i64: 32, 32>}, {pipeline_mode = #tpu.pipeline_mode<synchronous>, transform_indices = @transform_5, window_bounds = array<i64: 1, 32>}, {pipeline_mode = #tpu.pipeline_mode<synchronous>, transform_indices = @transform_6, window_bounds = array<i64: 1, 32>}, {pipeline_mode = #tpu.pipeline_mode<synchronous>, transform_indices = @transform_7, window_bounds = array<i64: 16, 96>}, {pipeline_mode = #tpu.pipeline_mode<synchronous>, transform_indices = @transform_8, window_bounds = array<i64: 32, 96>}, {pipeline_mode = #tpu.pipeline_mode<synchronous>, transform_indices = @transform_9, window_bounds = array<i64: 32, 96>}, {pipeline_mode = #tpu.pipeline_mode<synchronous>, transform_indices = @transform_10, window_bounds = array<i64: 1, 96>}, {pipeline_mode = #tpu.pipeline_mode<synchronous>, transform_indices = @transform_11, window_bounds = array<i64: 1, 96>}, {pipeline_mode = #tpu.pipeline_mode<synchronous>, transform_indices = @transform_12, window_bounds = array<i64: 32, 128>}, {pipeline_mode = #tpu.pipeline_mode<synchronous>, transform_indices = @transform_13, window_bounds = array<i64: 32, 128>}, {pipeline_mode = #tpu.pipeline_mode<synchronous>, transform_indices = @transform_14, window_bounds = array<i64: 16, 128>}, {pipeline_mode = #tpu.pipeline_mode<synchronous>, transform_indices = @transform_15, window_bounds = array<i64: 1, 128>}, {transform_indices = @transform_16, window_bounds = array<i64: 5, 8, 128>}, {transform_indices = @transform_17, window_bounds = array<i64: 8, 32>}, {transform_indices = @transform_18, window_bounds = array<i64: 5, 8, 8>}]} {
    %c0 = arith.constant 0 : index
    %c0_0 = arith.constant 0 : index
    %c0_1 = arith.constant 0 : index
    %0 = vector.load %arg3[%c0, %c0_0, %c0_1] : memref<8x8x32xf32, #tpu.memory_space<vmem>>, vector<8x8x32xf32>
    %1 = vector.shape_cast %0 : vector<8x8x32xf32> to vector<64x32xf32>
    %c0_2 = arith.constant 0 : index
    %c0_3 = arith.constant 0 : index
    %2 = vector.load %arg5[%c0_2, %c0_3] : memref<32x32xf32, #tpu.memory_space<vmem>>, vector<32x32xf32>
    %cst = arith.constant dense<0.000000e+00> : vector<64x32xf32>
    %3 = tpu.matmul %1, %2, %cst {dimension_numbers = #tpu.dot_dimension_numbers<[1], [0], [0], [1], [0, 0, 1, 1], [], []>} : vector<64x32xf32>, vector<32x32xf32>, vector<64x32xf32> -> vector<64x32xf32>
    %c0_4 = arith.constant 0 : index
    %c0_5 = arith.constant 0 : index
    %4 = vector.load %arg6[%c0_4, %c0_5] : memref<1x32xf32, #tpu.memory_space<vmem>>, vector<1x32xf32>
    %5 = vector.broadcast %4 : vector<1x32xf32> to vector<64x32xf32>
    %6 = arith.addf %3, %5 : vector<64x32xf32>
    %7 = vector.shape_cast %6 : vector<64x32xf32> to vector<8x8x32xf32>
    %c0_6 = arith.constant 0 : index
    %c0_7 = arith.constant 0 : index
    %8 = vector.load %arg7[%c0_6, %c0_7] : memref<1x32xf32, #tpu.memory_space<vmem>>, vector<1x32xf32>
    %9 = vector.shape_cast %8 : vector<1x32xf32> to vector<1x1x32xf32>
    %10 = vector.shape_cast %9 : vector<1x1x32xf32> to vector<1x1x32xf32>
    %11 = vector.broadcast %10 : vector<1x1x32xf32> to vector<8x8x32xf32>
    %c0_8 = arith.constant 0 : index
    %c0_9 = arith.constant 0 : index
    %12 = vector.load %arg11[%c0_8, %c0_9] : memref<1x96xf32, #tpu.memory_space<vmem>>, vector<1x96xf32>
    %13 = vector.shape_cast %12 : vector<1x96xf32> to vector<1x96xf32>
    %14 = vector.broadcast %13 : vector<1x96xf32> to vector<8x96xf32>
    %c0_10 = arith.constant 0 : index
    %c0_11 = arith.constant 0 : index
    %15 = vector.load %arg12[%c0_10, %c0_11] : memref<1x96xf32, #tpu.memory_space<vmem>>, vector<1x96xf32>
    %16 = vector.shape_cast %15 : vector<1x96xf32> to vector<1x96xf32>
    %17 = vector.broadcast %16 : vector<1x96xf32> to vector<8x96xf32>
    %c0_12 = arith.constant 0 : index
    %c0_13 = arith.constant 0 : index
    %18 = vector.load %arg16[%c0_12, %c0_13] : memref<1x128xf32, #tpu.memory_space<vmem>>, vector<1x128xf32>
    %19 = vector.shape_cast %18 : vector<1x128xf32> to vector<1x128xf32>
    %20 = vector.broadcast %19 : vector<1x128xf32> to vector<8x128xf32>
    %c0_14 = arith.constant 0 : index
    %c0_15 = arith.constant 0 : index
    %21 = vector.load %arg4[%c0_14, %c0_15] : memref<32x32xbf16, #tpu.memory_space<vmem>>, vector<32x32xbf16>
    %c0_16 = arith.constant 0 : index
    %c0_17 = arith.constant 0 : index
    %22 = vector.load %arg8[%c0_16, %c0_17] : memref<16x96xbf16, #tpu.memory_space<vmem>>, vector<16x96xbf16>
    %c0_18 = arith.constant 0 : index
    %c0_19 = arith.constant 0 : index
    %23 = vector.load %arg9[%c0_18, %c0_19] : memref<32x96xbf16, #tpu.memory_space<vmem>>, vector<32x96xbf16>
    %c0_20 = arith.constant 0 : index
    %c0_21 = arith.constant 0 : index
    %24 = vector.load %arg10[%c0_20, %c0_21] : memref<32x96xbf16, #tpu.memory_space<vmem>>, vector<32x96xbf16>
    %c0_22 = arith.constant 0 : index
    %c0_23 = arith.constant 0 : index
    %25 = vector.load %arg13[%c0_22, %c0_23] : memref<32x128xbf16, #tpu.memory_space<vmem>>, vector<32x128xbf16>
    %c0_24 = arith.constant 0 : index
    %c0_25 = arith.constant 0 : index
    %26 = vector.load %arg14[%c0_24, %c0_25] : memref<32x128xbf16, #tpu.memory_space<vmem>>, vector<32x128xbf16>
    %c0_26 = arith.constant 0 : index
    %c0_27 = arith.constant 0 : index
    %27 = vector.load %arg15[%c0_26, %c0_27] : memref<16x128xbf16, #tpu.memory_space<vmem>>, vector<16x128xbf16>
    %c0_28 = arith.constant 0 : index
    %c0_29 = arith.constant 0 : index
    %28 = vector.load %arg2[%c0_28, %c0_29] : memref<8x32xf32, #tpu.memory_space<vmem>>, vector<8x32xf32>
    %29 = arith.truncf %28 : vector<8x32xf32> to vector<8x32xbf16>
    %c0_i32 = arith.constant 0 : i32
    %30 = arith.index_cast %c0_i32 : i32 to index
    %c0_30 = arith.constant 0 : index
    %c0_31 = arith.constant 0 : index
    %31 = vector.load %arg1[%30, %c0_30, %c0_31] : memref<5x8x16xbf16, #tpu.memory_space<vmem>>, vector<1x8x16xbf16>
    %32 = vector.shape_cast %31 : vector<1x8x16xbf16> to vector<8x16xbf16>
    %cst_32 = arith.constant dense<0.000000e+00> : vector<8x32xf32>
    %33 = tpu.matmul %29, %21, %cst_32 {dimension_numbers = #tpu.dot_dimension_numbers<[1], [0], [0], [1], [0, 0, 1, 1], [], []>} : vector<8x32xbf16>, vector<32x32xbf16>, vector<8x32xf32> -> vector<8x32xf32>
    %34 = vector.shape_cast %33 : vector<8x32xf32> to vector<8x1x32xf32>
    %35 = vector.broadcast %34 : vector<8x1x32xf32> to vector<8x8x32xf32>
    %36 = arith.addf %7, %35 : vector<8x8x32xf32>
    %37 = math.tanh %36 : vector<8x8x32xf32>
    %38 = arith.mulf %37, %11 : vector<8x8x32xf32>
    %cst_33 = arith.constant dense<0.000000e+00> : vector<8x8xf32>
    %39 = vector.multi_reduction <add>, %38, %cst_33 [2] : vector<8x8x32xf32> to vector<8x8xf32>
    %cst_34 = arith.constant dense<0xFF800000> : vector<8xf32>
    %40 = vector.multi_reduction <maximumf>, %39, %cst_34 [1] : vector<8x8xf32> to vector<8xf32>
    %41 = vector.shape_cast %40 : vector<8xf32> to vector<8x1xf32>
    %42 = vector.broadcast %41 : vector<8x1xf32> to vector<8x8xf32>
    %43 = arith.subf %39, %42 : vector<8x8xf32>
    %44 = math.exp %43 : vector<8x8xf32>
    %cst_35 = arith.constant dense<0.000000e+00> : vector<8xf32>
    %45 = vector.multi_reduction <add>, %44, %cst_35 [1] : vector<8x8xf32> to vector<8xf32>
    %46 = vector.shape_cast %45 : vector<8xf32> to vector<8x1xf32>
    %47 = tpu.reciprocal %46 : vector<8x1xf32> -> vector<8x1xf32>
    %48 = vector.broadcast %47 : vector<8x1xf32> to vector<8x8xf32>
    %49 = arith.mulf %44, %48 : vector<8x8xf32>
    %50 = arith.index_cast %c0_i32 : i32 to index
    %c0_36 = arith.constant 0 : index
    %c0_37 = arith.constant 0 : index
    %51 = vector.load %arg19[%50, %c0_36, %c0_37] : memref<5x8x8xf32, #tpu.memory_space<vmem>>, vector<1x8x8xf32>
    %52 = vector.shape_cast %51 : vector<1x8x8xf32> to vector<8x8xf32>
    %53 = vector.shape_cast %49 : vector<8x8xf32> to vector<1x8x8xf32>
    tpu.vector_store %arg19[%50, %c0_36, %c0_37], %53 {strides = array<i32>} : memref<5x8x8xf32, #tpu.memory_space<vmem>>, vector<1x8x8xf32>,
    %54 = vector.shape_cast %49 : vector<8x8xf32> to vector<8x8x1xf32>
    %55 = vector.broadcast %54 : vector<8x8x1xf32> to vector<8x8x32xf32>
    %56 = arith.mulf %55, %0 : vector<8x8x32xf32>
    %cst_38 = arith.constant dense<0.000000e+00> : vector<8x32xf32>
    %57 = vector.multi_reduction <add>, %56, %cst_38 [1] : vector<8x8x32xf32> to vector<8x32xf32>
    %58 = arith.truncf %57 : vector<8x32xf32> to vector<8x32xbf16>
    %cst_39 = arith.constant dense<0.000000e+00> : vector<8x96xf32>
    %59 = tpu.matmul %32, %22, %cst_39 {dimension_numbers = #tpu.dot_dimension_numbers<[1], [0], [0], [1], [0, 0, 1, 1], [], []>} : vector<8x16xbf16>, vector<16x96xbf16>, vector<8x96xf32> -> vector<8x96xf32>
    %cst_40 = arith.constant dense<0.000000e+00> : vector<8x96xf32>
    %60 = tpu.matmul %58, %23, %cst_40 {dimension_numbers = #tpu.dot_dimension_numbers<[1], [0], [0], [1], [0, 0, 1, 1], [], []>} : vector<8x32xbf16>, vector<32x96xbf16>, vector<8x96xf32> -> vector<8x96xf32>
    %61 = arith.addf %59, %60 : vector<8x96xf32>
    %62 = arith.addf %61, %14 : vector<8x96xf32>
    %cst_41 = arith.constant dense<0.000000e+00> : vector<8x96xf32>
    %63 = tpu.matmul %29, %24, %cst_41 {dimension_numbers = #tpu.dot_dimension_numbers<[1], [0], [0], [1], [0, 0, 1, 1], [], []>} : vector<8x32xbf16>, vector<32x96xbf16>, vector<8x96xf32> -> vector<8x96xf32>
    %64 = arith.addf %63, %17 : vector<8x96xf32>
    %65 = vector.extract_strided_slice %62 {offsets = [0, 0], sizes = [8, 32], strides = [1, 1]} : vector<8x96xf32> to vector<8x32xf32>
    %66 = vector.extract_strided_slice %64 {offsets = [0, 0], sizes = [8, 32], strides = [1, 1]} : vector<8x96xf32> to vector<8x32xf32>
    %67 = arith.addf %65, %66 : vector<8x32xf32>
    %68 = arith.negf %67 : vector<8x32xf32>
    %69 = math.exp %68 : vector<8x32xf32>
    %cst_42 = arith.constant 1.000000e+00 : f32
    %70 = vector.broadcast %cst_42 : f32 to vector<8x32xf32>
    %71 = arith.addf %70, %69 : vector<8x32xf32>
    %72 = arith.divf %70, %71 : vector<8x32xf32>
    %73 = vector.extract_strided_slice %62 {offsets = [0, 32], sizes = [8, 32], strides = [1, 1]} : vector<8x96xf32> to vector<8x32xf32>
    %74 = vector.extract_strided_slice %64 {offsets = [0, 32], sizes = [8, 32], strides = [1, 1]} : vector<8x96xf32> to vector<8x32xf32>
    %75 = arith.addf %73, %74 : vector<8x32xf32>
    %76 = arith.negf %75 : vector<8x32xf32>
    %77 = math.exp %76 : vector<8x32xf32>
    %cst_43 = arith.constant 1.000000e+00 : f32
    %78 = vector.broadcast %cst_43 : f32 to vector<8x32xf32>
    %79 = arith.addf %78, %77 : vector<8x32xf32>
    %80 = arith.divf %78, %79 : vector<8x32xf32>
    %81 = vector.extract_strided_slice %62 {offsets = [0, 64], sizes = [8, 32], strides = [1, 1]} : vector<8x96xf32> to vector<8x32xf32>
    %82 = vector.extract_strided_slice %64 {offsets = [0, 64], sizes = [8, 32], strides = [1, 1]} : vector<8x96xf32> to vector<8x32xf32>
    %83 = arith.mulf %72, %82 : vector<8x32xf32>
    %84 = arith.addf %81, %83 : vector<8x32xf32>
    %85 = math.tanh %84 : vector<8x32xf32>
    %cst_44 = arith.constant 1.000000e+00 : f32
    %86 = vector.broadcast %cst_44 : f32 to vector<8x32xf32>
    %87 = arith.subf %86, %80 : vector<8x32xf32>
    %88 = arith.mulf %87, %85 : vector<8x32xf32>
    %89 = arith.mulf %80, %28 : vector<8x32xf32>
    %90 = arith.addf %88, %89 : vector<8x32xf32>
    %91 = arith.truncf %90 : vector<8x32xf32> to vector<8x32xbf16>
    %cst_45 = arith.constant dense<0.000000e+00> : vector<8x128xf32>
    %92 = tpu.matmul %91, %25, %cst_45 {dimension_numbers = #tpu.dot_dimension_numbers<[1], [0], [0], [1], [0, 0, 1, 1], [], []>} : vector<8x32xbf16>, vector<32x128xbf16>, vector<8x128xf32> -> vector<8x128xf32>
    %cst_46 = arith.constant dense<0.000000e+00> : vector<8x128xf32>
    %93 = tpu.matmul %58, %26, %cst_46 {dimension_numbers = #tpu.dot_dimension_numbers<[1], [0], [0], [1], [0, 0, 1, 1], [], []>} : vector<8x32xbf16>, vector<32x128xbf16>, vector<8x128xf32> -> vector<8x128xf32>
    %94 = arith.addf %92, %93 : vector<8x128xf32>
    %cst_47 = arith.constant dense<0.000000e+00> : vector<8x128xf32>
    %95 = tpu.matmul %32, %27, %cst_47 {dimension_numbers = #tpu.dot_dimension_numbers<[1], [0], [0], [1], [0, 0, 1, 1], [], []>} : vector<8x16xbf16>, vector<16x128xbf16>, vector<8x128xf32> -> vector<8x128xf32>
    %96 = arith.addf %94, %95 : vector<8x128xf32>
    %97 = arith.addf %96, %20 : vector<8x128xf32>
    %98 = arith.index_cast %c0_i32 : i32 to index
    %c0_48 = arith.constant 0 : index
    %c0_49 = arith.constant 0 : index
    %99 = vector.load %arg17[%98, %c0_48, %c0_49] : memref<5x8x128xf32, #tpu.memory_space<vmem>>, vector<1x8x128xf32>
    %100 = vector.shape_cast %99 : vector<1x8x128xf32> to vector<8x128xf32>
    %101 = vector.shape_cast %97 : vector<8x128xf32> to vector<1x8x128xf32>
    tpu.vector_store %arg17[%98, %c0_48, %c0_49], %101 {strides = array<i32>} : memref<5x8x128xf32, #tpu.memory_space<vmem>>, vector<1x8x128xf32>,
    %c1_i32 = arith.constant 1 : i32
    %102 = arith.index_cast %c1_i32 : i32 to index
    %c0_50 = arith.constant 0 : index
    %c0_51 = arith.constant 0 : index
    %103 = vector.load %arg1[%102, %c0_50, %c0_51] : memref<5x8x16xbf16, #tpu.memory_space<vmem>>, vector<1x8x16xbf16>
    %104 = vector.shape_cast %103 : vector<1x8x16xbf16> to vector<8x16xbf16>
    %cst_52 = arith.constant dense<0.000000e+00> : vector<8x32xf32>
    %105 = tpu.matmul %91, %21, %cst_52 {dimension_numbers = #tpu.dot_dimension_numbers<[1], [0], [0], [1], [0, 0, 1, 1], [], []>} : vector<8x32xbf16>, vector<32x32xbf16>, vector<8x32xf32> -> vector<8x32xf32>
    %106 = vector.shape_cast %105 : vector<8x32xf32> to vector<8x1x32xf32>
    %107 = vector.broadcast %106 : vector<8x1x32xf32> to vector<8x8x32xf32>
    %108 = arith.addf %7, %107 : vector<8x8x32xf32>
    %109 = math.tanh %108 : vector<8x8x32xf32>
    %110 = arith.mulf %109, %11 : vector<8x8x32xf32>
    %cst_53 = arith.constant dense<0.000000e+00> : vector<8x8xf32>
    %111 = vector.multi_reduction <add>, %110, %cst_53 [2] : vector<8x8x32xf32> to vector<8x8xf32>
    %cst_54 = arith.constant dense<0xFF800000> : vector<8xf32>
    %112 = vector.multi_reduction <maximumf>, %111, %cst_54 [1] : vector<8x8xf32> to vector<8xf32>
    %113 = vector.shape_cast %112 : vector<8xf32> to vector<8x1xf32>
    %114 = vector.broadcast %113 : vector<8x1xf32> to vector<8x8xf32>
    %115 = arith.subf %111, %114 : vector<8x8xf32>
    %116 = math.exp %115 : vector<8x8xf32>
    %cst_55 = arith.constant dense<0.000000e+00> : vector<8xf32>
    %117 = vector.multi_reduction <add>, %116, %cst_55 [1] : vector<8x8xf32> to vector<8xf32>
    %118 = vector.shape_cast %117 : vector<8xf32> to vector<8x1xf32>
    %119 = tpu.reciprocal %118 : vector<8x1xf32> -> vector<8x1xf32>
    %120 = vector.broadcast %119 : vector<8x1xf32> to vector<8x8xf32>
    %121 = arith.mulf %116, %120 : vector<8x8xf32>
    %122 = arith.index_cast %c1_i32 : i32 to index
    %c0_56 = arith.constant 0 : index
    %c0_57 = arith.constant 0 : index
    %123 = vector.load %arg19[%122, %c0_56, %c0_57] : memref<5x8x8xf32, #tpu.memory_space<vmem>>, vector<1x8x8xf32>
    %124 = vector.shape_cast %123 : vector<1x8x8xf32> to vector<8x8xf32>
    %125 = vector.shape_cast %121 : vector<8x8xf32> to vector<1x8x8xf32>
    tpu.vector_store %arg19[%122, %c0_56, %c0_57], %125 {strides = array<i32>} : memref<5x8x8xf32, #tpu.memory_space<vmem>>, vector<1x8x8xf32>,
    %126 = vector.shape_cast %121 : vector<8x8xf32> to vector<8x8x1xf32>
    %127 = vector.broadcast %126 : vector<8x8x1xf32> to vector<8x8x32xf32>
    %128 = arith.mulf %127, %0 : vector<8x8x32xf32>
    %cst_58 = arith.constant dense<0.000000e+00> : vector<8x32xf32>
    %129 = vector.multi_reduction <add>, %128, %cst_58 [1] : vector<8x8x32xf32> to vector<8x32xf32>
    %130 = arith.truncf %129 : vector<8x32xf32> to vector<8x32xbf16>
    %cst_59 = arith.constant dense<0.000000e+00> : vector<8x96xf32>
    %131 = tpu.matmul %104, %22, %cst_59 {dimension_numbers = #tpu.dot_dimension_numbers<[1], [0], [0], [1], [0, 0, 1, 1], [], []>} : vector<8x16xbf16>, vector<16x96xbf16>, vector<8x96xf32> -> vector<8x96xf32>
    %cst_60 = arith.constant dense<0.000000e+00> : vector<8x96xf32>
    %132 = tpu.matmul %130, %23, %cst_60 {dimension_numbers = #tpu.dot_dimension_numbers<[1], [0], [0], [1], [0, 0, 1, 1], [], []>} : vector<8x32xbf16>, vector<32x96xbf16>, vector<8x96xf32> -> vector<8x96xf32>
    %133 = arith.addf %131, %132 : vector<8x96xf32>
    %134 = arith.addf %133, %14 : vector<8x96xf32>
    %cst_61 = arith.constant dense<0.000000e+00> : vector<8x96xf32>
    %135 = tpu.matmul %91, %24, %cst_61 {dimension_numbers = #tpu.dot_dimension_numbers<[1], [0], [0], [1], [0, 0, 1, 1], [], []>} : vector<8x32xbf16>, vector<32x96xbf16>, vector<8x96xf32> -> vector<8x96xf32>
    %136 = arith.addf %135, %17 : vector<8x96xf32>
    %137 = vector.extract_strided_slice %134 {offsets = [0, 0], sizes = [8, 32], strides = [1, 1]} : vector<8x96xf32> to vector<8x32xf32>
    %138 = vector.extract_strided_slice %136 {offsets = [0, 0], sizes = [8, 32], strides = [1, 1]} : vector<8x96xf32> to vector<8x32xf32>
    %139 = arith.addf %137, %138 : vector<8x32xf32>
    %140 = arith.negf %139 : vector<8x32xf32>
    %141 = math.exp %140 : vector<8x32xf32>
    %cst_62 = arith.constant 1.000000e+00 : f32
    %142 = vector.broadcast %cst_62 : f32 to vector<8x32xf32>
    %143 = arith.addf %142, %141 : vector<8x32xf32>
    %144 = arith.divf %142, %143 : vector<8x32xf32>
    %145 = vector.extract_strided_slice %134 {offsets = [0, 32], sizes = [8, 32], strides = [1, 1]} : vector<8x96xf32> to vector<8x32xf32>
    %146 = vector.extract_strided_slice %136 {offsets = [0, 32], sizes = [8, 32], strides = [1, 1]} : vector<8x96xf32> to vector<8x32xf32>
    %147 = arith.addf %145, %146 : vector<8x32xf32>
    %148 = arith.negf %147 : vector<8x32xf32>
    %149 = math.exp %148 : vector<8x32xf32>
    %cst_63 = arith.constant 1.000000e+00 : f32
    %150 = vector.broadcast %cst_63 : f32 to vector<8x32xf32>
    %151 = arith.addf %150, %149 : vector<8x32xf32>
    %152 = arith.divf %150, %151 : vector<8x32xf32>
    %153 = vector.extract_strided_slice %134 {offsets = [0, 64], sizes = [8, 32], strides = [1, 1]} : vector<8x96xf32> to vector<8x32xf32>
    %154 = vector.extract_strided_slice %136 {offsets = [0, 64], sizes = [8, 32], strides = [1, 1]} : vector<8x96xf32> to vector<8x32xf32>
    %155 = arith.mulf %144, %154 : vector<8x32xf32>
    %156 = arith.addf %153, %155 : vector<8x32xf32>
    %157 = math.tanh %156 : vector<8x32xf32>
    %cst_64 = arith.constant 1.000000e+00 : f32
    %158 = vector.broadcast %cst_64 : f32 to vector<8x32xf32>
    %159 = arith.subf %158, %152 : vector<8x32xf32>
    %160 = arith.mulf %159, %157 : vector<8x32xf32>
    %161 = arith.mulf %152, %90 : vector<8x32xf32>
    %162 = arith.addf %160, %161 : vector<8x32xf32>
    %163 = arith.truncf %162 : vector<8x32xf32> to vector<8x32xbf16>
    %cst_65 = arith.constant dense<0.000000e+00> : vector<8x128xf32>
    %164 = tpu.matmul %163, %25, %cst_65 {dimension_numbers = #tpu.dot_dimension_numbers<[1], [0], [0], [1], [0, 0, 1, 1], [], []>} : vector<8x32xbf16>, vector<32x128xbf16>, vector<8x128xf32> -> vector<8x128xf32>
    %cst_66 = arith.constant dense<0.000000e+00> : vector<8x128xf32>
    %165 = tpu.matmul %130, %26, %cst_66 {dimension_numbers = #tpu.dot_dimension_numbers<[1], [0], [0], [1], [0, 0, 1, 1], [], []>} : vector<8x32xbf16>, vector<32x128xbf16>, vector<8x128xf32> -> vector<8x128xf32>
    %166 = arith.addf %164, %165 : vector<8x128xf32>
    %cst_67 = arith.constant dense<0.000000e+00> : vector<8x128xf32>
    %167 = tpu.matmul %104, %27, %cst_67 {dimension_numbers = #tpu.dot_dimension_numbers<[1], [0], [0], [1], [0, 0, 1, 1], [], []>} : vector<8x16xbf16>, vector<16x128xbf16>, vector<8x128xf32> -> vector<8x128xf32>
    %168 = arith.addf %166, %167 : vector<8x128xf32>
    %169 = arith.addf %168, %20 : vector<8x128xf32>
    %170 = arith.index_cast %c1_i32 : i32 to index
    %c0_68 = arith.constant 0 : index
    %c0_69 = arith.constant 0 : index
    %171 = vector.load %arg17[%170, %c0_68, %c0_69] : memref<5x8x128xf32, #tpu.memory_space<vmem>>, vector<1x8x128xf32>
    %172 = vector.shape_cast %171 : vector<1x8x128xf32> to vector<8x128xf32>
    %173 = vector.shape_cast %169 : vector<8x128xf32> to vector<1x8x128xf32>
    tpu.vector_store %arg17[%170, %c0_68, %c0_69], %173 {strides = array<i32>} : memref<5x8x128xf32, #tpu.memory_space<vmem>>, vector<1x8x128xf32>,
    %c2_i32 = arith.constant 2 : i32
    %174 = arith.index_cast %c2_i32 : i32 to index
    %c0_70 = arith.constant 0 : index
    %c0_71 = arith.constant 0 : index
    %175 = vector.load %arg1[%174, %c0_70, %c0_71] : memref<5x8x16xbf16, #tpu.memory_space<vmem>>, vector<1x8x16xbf16>
    %176 = vector.shape_cast %175 : vector<1x8x16xbf16> to vector<8x16xbf16>
    %cst_72 = arith.constant dense<0.000000e+00> : vector<8x32xf32>
    %177 = tpu.matmul %163, %21, %cst_72 {dimension_numbers = #tpu.dot_dimension_numbers<[1], [0], [0], [1], [0, 0, 1, 1], [], []>} : vector<8x32xbf16>, vector<32x32xbf16>, vector<8x32xf32> -> vector<8x32xf32>
    %178 = vector.shape_cast %177 : vector<8x32xf32> to vector<8x1x32xf32>
    %179 = vector.broadcast %178 : vector<8x1x32xf32> to vector<8x8x32xf32>
    %180 = arith.addf %7, %179 : vector<8x8x32xf32>
    %181 = math.tanh %180 : vector<8x8x32xf32>
    %182 = arith.mulf %181, %11 : vector<8x8x32xf32>
    %cst_73 = arith.constant dense<0.000000e+00> : vector<8x8xf32>
    %183 = vector.multi_reduction <add>, %182, %cst_73 [2] : vector<8x8x32xf32> to vector<8x8xf32>
    %cst_74 = arith.constant dense<0xFF800000> : vector<8xf32>
    %184 = vector.multi_reduction <maximumf>, %183, %cst_74 [1] : vector<8x8xf32> to vector<8xf32>
    %185 = vector.shape_cast %184 : vector<8xf32> to vector<8x1xf32>
    %186 = vector.broadcast %185 : vector<8x1xf32> to vector<8x8xf32>
    %187 = arith.subf %183, %186 : vector<8x8xf32>
    %188 = math.exp %187 : vector<8x8xf32>
    %cst_75 = arith.constant dense<0.000000e+00> : vector<8xf32>
    %189 = vector.multi_reduction <add>, %188, %cst_75 [1] : vector<8x8xf32> to vector<8xf32>
    %190 = vector.shape_cast %189 : vector<8xf32> to vector<8x1xf32>
    %191 = tpu.reciprocal %190 : vector<8x1xf32> -> vector<8x1xf32>
    %192 = vector.broadcast %191 : vector<8x1xf32> to vector<8x8xf32>
    %193 = arith.mulf %188, %192 : vector<8x8xf32>
    %194 = arith.index_cast %c2_i32 : i32 to index
    %c0_76 = arith.constant 0 : index
    %c0_77 = arith.constant 0 : index
    %195 = vector.load %arg19[%194, %c0_76, %c0_77] : memref<5x8x8xf32, #tpu.memory_space<vmem>>, vector<1x8x8xf32>
    %196 = vector.shape_cast %195 : vector<1x8x8xf32> to vector<8x8xf32>
    %197 = vector.shape_cast %193 : vector<8x8xf32> to vector<1x8x8xf32>
    tpu.vector_store %arg19[%194, %c0_76, %c0_77], %197 {strides = array<i32>} : memref<5x8x8xf32, #tpu.memory_space<vmem>>, vector<1x8x8xf32>,
    %198 = vector.shape_cast %193 : vector<8x8xf32> to vector<8x8x1xf32>
    %199 = vector.broadcast %198 : vector<8x8x1xf32> to vector<8x8x32xf32>
    %200 = arith.mulf %199, %0 : vector<8x8x32xf32>
    %cst_78 = arith.constant dense<0.000000e+00> : vector<8x32xf32>
    %201 = vector.multi_reduction <add>, %200, %cst_78 [1] : vector<8x8x32xf32> to vector<8x32xf32>
    %202 = arith.truncf %201 : vector<8x32xf32> to vector<8x32xbf16>
    %cst_79 = arith.constant dense<0.000000e+00> : vector<8x96xf32>
    %203 = tpu.matmul %176, %22, %cst_79 {dimension_numbers = #tpu.dot_dimension_numbers<[1], [0], [0], [1], [0, 0, 1, 1], [], []>} : vector<8x16xbf16>, vector<16x96xbf16>, vector<8x96xf32> -> vector<8x96xf32>
    %cst_80 = arith.constant dense<0.000000e+00> : vector<8x96xf32>
    %204 = tpu.matmul %202, %23, %cst_80 {dimension_numbers = #tpu.dot_dimension_numbers<[1], [0], [0], [1], [0, 0, 1, 1], [], []>} : vector<8x32xbf16>, vector<32x96xbf16>, vector<8x96xf32> -> vector<8x96xf32>
    %205 = arith.addf %203, %204 : vector<8x96xf32>
    %206 = arith.addf %205, %14 : vector<8x96xf32>
    %cst_81 = arith.constant dense<0.000000e+00> : vector<8x96xf32>
    %207 = tpu.matmul %163, %24, %cst_81 {dimension_numbers = #tpu.dot_dimension_numbers<[1], [0], [0], [1], [0, 0, 1, 1], [], []>} : vector<8x32xbf16>, vector<32x96xbf16>, vector<8x96xf32> -> vector<8x96xf32>
    %208 = arith.addf %207, %17 : vector<8x96xf32>
    %209 = vector.extract_strided_slice %206 {offsets = [0, 0], sizes = [8, 32], strides = [1, 1]} : vector<8x96xf32> to vector<8x32xf32>
    %210 = vector.extract_strided_slice %208 {offsets = [0, 0], sizes = [8, 32], strides = [1, 1]} : vector<8x96xf32> to vector<8x32xf32>
    %211 = arith.addf %209, %210 : vector<8x32xf32>
    %212 = arith.negf %211 : vector<8x32xf32>
    %213 = math.exp %212 : vector<8x32xf32>
    %cst_82 = arith.constant 1.000000e+00 : f32
    %214 = vector.broadcast %cst_82 : f32 to vector<8x32xf32>
    %215 = arith.addf %214, %213 : vector<8x32xf32>
    %216 = arith.divf %214, %215 : vector<8x32xf32>
    %217 = vector.extract_strided_slice %206 {offsets = [0, 32], sizes = [8, 32], strides = [1, 1]} : vector<8x96xf32> to vector<8x32xf32>
    %218 = vector.extract_strided_slice %208 {offsets = [0, 32], sizes = [8, 32], strides = [1, 1]} : vector<8x96xf32> to vector<8x32xf32>
    %219 = arith.addf %217, %218 : vector<8x32xf32>
    %220 = arith.negf %219 : vector<8x32xf32>
    %221 = math.exp %220 : vector<8x32xf32>
    %cst_83 = arith.constant 1.000000e+00 : f32
    %222 = vector.broadcast %cst_83 : f32 to vector<8x32xf32>
    %223 = arith.addf %222, %221 : vector<8x32xf32>
    %224 = arith.divf %222, %223 : vector<8x32xf32>
    %225 = vector.extract_strided_slice %206 {offsets = [0, 64], sizes = [8, 32], strides = [1, 1]} : vector<8x96xf32> to vector<8x32xf32>
    %226 = vector.extract_strided_slice %208 {offsets = [0, 64], sizes = [8, 32], strides = [1, 1]} : vector<8x96xf32> to vector<8x32xf32>
    %227 = arith.mulf %216, %226 : vector<8x32xf32>
    %228 = arith.addf %225, %227 : vector<8x32xf32>
    %229 = math.tanh %228 : vector<8x32xf32>
    %cst_84 = arith.constant 1.000000e+00 : f32
    %230 = vector.broadcast %cst_84 : f32 to vector<8x32xf32>
    %231 = arith.subf %230, %224 : vector<8x32xf32>
    %232 = arith.mulf %231, %229 : vector<8x32xf32>
    %233 = arith.mulf %224, %162 : vector<8x32xf32>
    %234 = arith.addf %232, %233 : vector<8x32xf32>
    %235 = arith.truncf %234 : vector<8x32xf32> to vector<8x32xbf16>
    %cst_85 = arith.constant dense<0.000000e+00> : vector<8x128xf32>
    %236 = tpu.matmul %235, %25, %cst_85 {dimension_numbers = #tpu.dot_dimension_numbers<[1], [0], [0], [1], [0, 0, 1, 1], [], []>} : vector<8x32xbf16>, vector<32x128xbf16>, vector<8x128xf32> -> vector<8x128xf32>
    %cst_86 = arith.constant dense<0.000000e+00> : vector<8x128xf32>
    %237 = tpu.matmul %202, %26, %cst_86 {dimension_numbers = #tpu.dot_dimension_numbers<[1], [0], [0], [1], [0, 0, 1, 1], [], []>} : vector<8x32xbf16>, vector<32x128xbf16>, vector<8x128xf32> -> vector<8x128xf32>
    %238 = arith.addf %236, %237 : vector<8x128xf32>
    %cst_87 = arith.constant dense<0.000000e+00> : vector<8x128xf32>
    %239 = tpu.matmul %176, %27, %cst_87 {dimension_numbers = #tpu.dot_dimension_numbers<[1], [0], [0], [1], [0, 0, 1, 1], [], []>} : vector<8x16xbf16>, vector<16x128xbf16>, vector<8x128xf32> -> vector<8x128xf32>
    %240 = arith.addf %238, %239 : vector<8x128xf32>
    %241 = arith.addf %240, %20 : vector<8x128xf32>
    %242 = arith.index_cast %c2_i32 : i32 to index
    %c0_88 = arith.constant 0 : index
    %c0_89 = arith.constant 0 : index
    %243 = vector.load %arg17[%242, %c0_88, %c0_89] : memref<5x8x128xf32, #tpu.memory_space<vmem>>, vector<1x8x128xf32>
    %244 = vector.shape_cast %243 : vector<1x8x128xf32> to vector<8x128xf32>
    %245 = vector.shape_cast %241 : vector<8x128xf32> to vector<1x8x128xf32>
    tpu.vector_store %arg17[%242, %c0_88, %c0_89], %245 {strides = array<i32>} : memref<5x8x128xf32, #tpu.memory_space<vmem>>, vector<1x8x128xf32>,
    %c3_i32 = arith.constant 3 : i32
    %246 = arith.index_cast %c3_i32 : i32 to index
    %c0_90 = arith.constant 0 : index
    %c0_91 = arith.constant 0 : index
    %247 = vector.load %arg1[%246, %c0_90, %c0_91] : memref<5x8x16xbf16, #tpu.memory_space<vmem>>, vector<1x8x16xbf16>
    %248 = vector.shape_cast %247 : vector<1x8x16xbf16> to vector<8x16xbf16>
    %cst_92 = arith.constant dense<0.000000e+00> : vector<8x32xf32>
    %249 = tpu.matmul %235, %21, %cst_92 {dimension_numbers = #tpu.dot_dimension_numbers<[1], [0], [0], [1], [0, 0, 1, 1], [], []>} : vector<8x32xbf16>, vector<32x32xbf16>, vector<8x32xf32> -> vector<8x32xf32>
    %250 = vector.shape_cast %249 : vector<8x32xf32> to vector<8x1x32xf32>
    %251 = vector.broadcast %250 : vector<8x1x32xf32> to vector<8x8x32xf32>
    %252 = arith.addf %7, %251 : vector<8x8x32xf32>
    %253 = math.tanh %252 : vector<8x8x32xf32>
    %254 = arith.mulf %253, %11 : vector<8x8x32xf32>
    %cst_93 = arith.constant dense<0.000000e+00> : vector<8x8xf32>
    %255 = vector.multi_reduction <add>, %254, %cst_93 [2] : vector<8x8x32xf32> to vector<8x8xf32>
    %cst_94 = arith.constant dense<0xFF800000> : vector<8xf32>
    %256 = vector.multi_reduction <maximumf>, %255, %cst_94 [1] : vector<8x8xf32> to vector<8xf32>
    %257 = vector.shape_cast %256 : vector<8xf32> to vector<8x1xf32>
    %258 = vector.broadcast %257 : vector<8x1xf32> to vector<8x8xf32>
    %259 = arith.subf %255, %258 : vector<8x8xf32>
    %260 = math.exp %259 : vector<8x8xf32>
    %cst_95 = arith.constant dense<0.000000e+00> : vector<8xf32>
    %261 = vector.multi_reduction <add>, %260, %cst_95 [1] : vector<8x8xf32> to vector<8xf32>
    %262 = vector.shape_cast %261 : vector<8xf32> to vector<8x1xf32>
    %263 = tpu.reciprocal %262 : vector<8x1xf32> -> vector<8x1xf32>
    %264 = vector.broadcast %263 : vector<8x1xf32> to vector<8x8xf32>
    %265 = arith.mulf %260, %264 : vector<8x8xf32>
    %266 = arith.index_cast %c3_i32 : i32 to index
    %c0_96 = arith.constant 0 : index
    %c0_97 = arith.constant 0 : index
    %267 = vector.load %arg19[%266, %c0_96, %c0_97] : memref<5x8x8xf32, #tpu.memory_space<vmem>>, vector<1x8x8xf32>
    %268 = vector.shape_cast %267 : vector<1x8x8xf32> to vector<8x8xf32>
    %269 = vector.shape_cast %265 : vector<8x8xf32> to vector<1x8x8xf32>
    tpu.vector_store %arg19[%266, %c0_96, %c0_97], %269 {strides = array<i32>} : memref<5x8x8xf32, #tpu.memory_space<vmem>>, vector<1x8x8xf32>,
    %270 = vector.shape_cast %265 : vector<8x8xf32> to vector<8x8x1xf32>
    %271 = vector.broadcast %270 : vector<8x8x1xf32> to vector<8x8x32xf32>
    %272 = arith.mulf %271, %0 : vector<8x8x32xf32>
    %cst_98 = arith.constant dense<0.000000e+00> : vector<8x32xf32>
    %273 = vector.multi_reduction <add>, %272, %cst_98 [1] : vector<8x8x32xf32> to vector<8x32xf32>
    %274 = arith.truncf %273 : vector<8x32xf32> to vector<8x32xbf16>
    %cst_99 = arith.constant dense<0.000000e+00> : vector<8x96xf32>
    %275 = tpu.matmul %248, %22, %cst_99 {dimension_numbers = #tpu.dot_dimension_numbers<[1], [0], [0], [1], [0, 0, 1, 1], [], []>} : vector<8x16xbf16>, vector<16x96xbf16>, vector<8x96xf32> -> vector<8x96xf32>
    %cst_100 = arith.constant dense<0.000000e+00> : vector<8x96xf32>
    %276 = tpu.matmul %274, %23, %cst_100 {dimension_numbers = #tpu.dot_dimension_numbers<[1], [0], [0], [1], [0, 0, 1, 1], [], []>} : vector<8x32xbf16>, vector<32x96xbf16>, vector<8x96xf32> -> vector<8x96xf32>
    %277 = arith.addf %275, %276 : vector<8x96xf32>
    %278 = arith.addf %277, %14 : vector<8x96xf32>
    %cst_101 = arith.constant dense<0.000000e+00> : vector<8x96xf32>
    %279 = tpu.matmul %235, %24, %cst_101 {dimension_numbers = #tpu.dot_dimension_numbers<[1], [0], [0], [1], [0, 0, 1, 1], [], []>} : vector<8x32xbf16>, vector<32x96xbf16>, vector<8x96xf32> -> vector<8x96xf32>
    %280 = arith.addf %279, %17 : vector<8x96xf32>
    %281 = vector.extract_strided_slice %278 {offsets = [0, 0], sizes = [8, 32], strides = [1, 1]} : vector<8x96xf32> to vector<8x32xf32>
    %282 = vector.extract_strided_slice %280 {offsets = [0, 0], sizes = [8, 32], strides = [1, 1]} : vector<8x96xf32> to vector<8x32xf32>
    %283 = arith.addf %281, %282 : vector<8x32xf32>
    %284 = arith.negf %283 : vector<8x32xf32>
    %285 = math.exp %284 : vector<8x32xf32>
    %cst_102 = arith.constant 1.000000e+00 : f32
    %286 = vector.broadcast %cst_102 : f32 to vector<8x32xf32>
    %287 = arith.addf %286, %285 : vector<8x32xf32>
    %288 = arith.divf %286, %287 : vector<8x32xf32>
    %289 = vector.extract_strided_slice %278 {offsets = [0, 32], sizes = [8, 32], strides = [1, 1]} : vector<8x96xf32> to vector<8x32xf32>
    %290 = vector.extract_strided_slice %280 {offsets = [0, 32], sizes = [8, 32], strides = [1, 1]} : vector<8x96xf32> to vector<8x32xf32>
    %291 = arith.addf %289, %290 : vector<8x32xf32>
    %292 = arith.negf %291 : vector<8x32xf32>
    %293 = math.exp %292 : vector<8x32xf32>
    %cst_103 = arith.constant 1.000000e+00 : f32
    %294 = vector.broadcast %cst_103 : f32 to vector<8x32xf32>
    %295 = arith.addf %294, %293 : vector<8x32xf32>
    %296 = arith.divf %294, %295 : vector<8x32xf32>
    %297 = vector.extract_strided_slice %278 {offsets = [0, 64], sizes = [8, 32], strides = [1, 1]} : vector<8x96xf32> to vector<8x32xf32>
    %298 = vector.extract_strided_slice %280 {offsets = [0, 64], sizes = [8, 32], strides = [1, 1]} : vector<8x96xf32> to vector<8x32xf32>
    %299 = arith.mulf %288, %298 : vector<8x32xf32>
    %300 = arith.addf %297, %299 : vector<8x32xf32>
    %301 = math.tanh %300 : vector<8x32xf32>
    %cst_104 = arith.constant 1.000000e+00 : f32
    %302 = vector.broadcast %cst_104 : f32 to vector<8x32xf32>
    %303 = arith.subf %302, %296 : vector<8x32xf32>
    %304 = arith.mulf %303, %301 : vector<8x32xf32>
    %305 = arith.mulf %296, %234 : vector<8x32xf32>
    %306 = arith.addf %304, %305 : vector<8x32xf32>
    %307 = arith.truncf %306 : vector<8x32xf32> to vector<8x32xbf16>
    %cst_105 = arith.constant dense<0.000000e+00> : vector<8x128xf32>
    %308 = tpu.matmul %307, %25, %cst_105 {dimension_numbers = #tpu.dot_dimension_numbers<[1], [0], [0], [1], [0, 0, 1, 1], [], []>} : vector<8x32xbf16>, vector<32x128xbf16>, vector<8x128xf32> -> vector<8x128xf32>
    %cst_106 = arith.constant dense<0.000000e+00> : vector<8x128xf32>
    %309 = tpu.matmul %274, %26, %cst_106 {dimension_numbers = #tpu.dot_dimension_numbers<[1], [0], [0], [1], [0, 0, 1, 1], [], []>} : vector<8x32xbf16>, vector<32x128xbf16>, vector<8x128xf32> -> vector<8x128xf32>
    %310 = arith.addf %308, %309 : vector<8x128xf32>
    %cst_107 = arith.constant dense<0.000000e+00> : vector<8x128xf32>
    %311 = tpu.matmul %248, %27, %cst_107 {dimension_numbers = #tpu.dot_dimension_numbers<[1], [0], [0], [1], [0, 0, 1, 1], [], []>} : vector<8x16xbf16>, vector<16x128xbf16>, vector<8x128xf32> -> vector<8x128xf32>
    %312 = arith.addf %310, %311 : vector<8x128xf32>
    %313 = arith.addf %312, %20 : vector<8x128xf32>
    %314 = arith.index_cast %c3_i32 : i32 to index
    %c0_108 = arith.constant 0 : index
    %c0_109 = arith.constant 0 : index
    %315 = vector.load %arg17[%314, %c0_108, %c0_109] : memref<5x8x128xf32, #tpu.memory_space<vmem>>, vector<1x8x128xf32>
    %316 = vector.shape_cast %315 : vector<1x8x128xf32> to vector<8x128xf32>
    %317 = vector.shape_cast %313 : vector<8x128xf32> to vector<1x8x128xf32>
    tpu.vector_store %arg17[%314, %c0_108, %c0_109], %317 {strides = array<i32>} : memref<5x8x128xf32, #tpu.memory_space<vmem>>, vector<1x8x128xf32>,
    %c4_i32 = arith.constant 4 : i32
    %318 = arith.index_cast %c4_i32 : i32 to index
    %c0_110 = arith.constant 0 : index
    %c0_111 = arith.constant 0 : index
    %319 = vector.load %arg1[%318, %c0_110, %c0_111] : memref<5x8x16xbf16, #tpu.memory_space<vmem>>, vector<1x8x16xbf16>
    %320 = vector.shape_cast %319 : vector<1x8x16xbf16> to vector<8x16xbf16>
    %cst_112 = arith.constant dense<0.000000e+00> : vector<8x32xf32>
    %321 = tpu.matmul %307, %21, %cst_112 {dimension_numbers = #tpu.dot_dimension_numbers<[1], [0], [0], [1], [0, 0, 1, 1], [], []>} : vector<8x32xbf16>, vector<32x32xbf16>, vector<8x32xf32> -> vector<8x32xf32>
    %322 = vector.shape_cast %321 : vector<8x32xf32> to vector<8x1x32xf32>
    %323 = vector.broadcast %322 : vector<8x1x32xf32> to vector<8x8x32xf32>
    %324 = arith.addf %7, %323 : vector<8x8x32xf32>
    %325 = math.tanh %324 : vector<8x8x32xf32>
    %326 = arith.mulf %325, %11 : vector<8x8x32xf32>
    %cst_113 = arith.constant dense<0.000000e+00> : vector<8x8xf32>
    %327 = vector.multi_reduction <add>, %326, %cst_113 [2] : vector<8x8x32xf32> to vector<8x8xf32>
    %cst_114 = arith.constant dense<0xFF800000> : vector<8xf32>
    %328 = vector.multi_reduction <maximumf>, %327, %cst_114 [1] : vector<8x8xf32> to vector<8xf32>
    %329 = vector.shape_cast %328 : vector<8xf32> to vector<8x1xf32>
    %330 = vector.broadcast %329 : vector<8x1xf32> to vector<8x8xf32>
    %331 = arith.subf %327, %330 : vector<8x8xf32>
    %332 = math.exp %331 : vector<8x8xf32>
    %cst_115 = arith.constant dense<0.000000e+00> : vector<8xf32>
    %333 = vector.multi_reduction <add>, %332, %cst_115 [1] : vector<8x8xf32> to vector<8xf32>
    %334 = vector.shape_cast %333 : vector<8xf32> to vector<8x1xf32>
    %335 = tpu.reciprocal %334 : vector<8x1xf32> -> vector<8x1xf32>
    %336 = vector.broadcast %335 : vector<8x1xf32> to vector<8x8xf32>
    %337 = arith.mulf %332, %336 : vector<8x8xf32>
    %338 = arith.index_cast %c4_i32 : i32 to index
    %c0_116 = arith.constant 0 : index
    %c0_117 = arith.constant 0 : index
    %339 = vector.load %arg19[%338, %c0_116, %c0_117] : memref<5x8x8xf32, #tpu.memory_space<vmem>>, vector<1x8x8xf32>
    %340 = vector.shape_cast %339 : vector<1x8x8xf32> to vector<8x8xf32>
    %341 = vector.shape_cast %337 : vector<8x8xf32> to vector<1x8x8xf32>
    tpu.vector_store %arg19[%338, %c0_116, %c0_117], %341 {strides = array<i32>} : memref<5x8x8xf32, #tpu.memory_space<vmem>>, vector<1x8x8xf32>,
    %342 = vector.shape_cast %337 : vector<8x8xf32> to vector<8x8x1xf32>
    %343 = vector.broadcast %342 : vector<8x8x1xf32> to vector<8x8x32xf32>
    %344 = arith.mulf %343, %0 : vector<8x8x32xf32>
    %cst_118 = arith.constant dense<0.000000e+00> : vector<8x32xf32>
    %345 = vector.multi_reduction <add>, %344, %cst_118 [1] : vector<8x8x32xf32> to vector<8x32xf32>
    %346 = arith.truncf %345 : vector<8x32xf32> to vector<8x32xbf16>
    %cst_119 = arith.constant dense<0.000000e+00> : vector<8x96xf32>
    %347 = tpu.matmul %320, %22, %cst_119 {dimension_numbers = #tpu.dot_dimension_numbers<[1], [0], [0], [1], [0, 0, 1, 1], [], []>} : vector<8x16xbf16>, vector<16x96xbf16>, vector<8x96xf32> -> vector<8x96xf32>
    %cst_120 = arith.constant dense<0.000000e+00> : vector<8x96xf32>
    %348 = tpu.matmul %346, %23, %cst_120 {dimension_numbers = #tpu.dot_dimension_numbers<[1], [0], [0], [1], [0, 0, 1, 1], [], []>} : vector<8x32xbf16>, vector<32x96xbf16>, vector<8x96xf32> -> vector<8x96xf32>
    %349 = arith.addf %347, %348 : vector<8x96xf32>
    %350 = arith.addf %349, %14 : vector<8x96xf32>
    %cst_121 = arith.constant dense<0.000000e+00> : vector<8x96xf32>
    %351 = tpu.matmul %307, %24, %cst_121 {dimension_numbers = #tpu.dot_dimension_numbers<[1], [0], [0], [1], [0, 0, 1, 1], [], []>} : vector<8x32xbf16>, vector<32x96xbf16>, vector<8x96xf32> -> vector<8x96xf32>
    %352 = arith.addf %351, %17 : vector<8x96xf32>
    %353 = vector.extract_strided_slice %350 {offsets = [0, 0], sizes = [8, 32], strides = [1, 1]} : vector<8x96xf32> to vector<8x32xf32>
    %354 = vector.extract_strided_slice %352 {offsets = [0, 0], sizes = [8, 32], strides = [1, 1]} : vector<8x96xf32> to vector<8x32xf32>
    %355 = arith.addf %353, %354 : vector<8x32xf32>
    %356 = arith.negf %355 : vector<8x32xf32>
    %357 = math.exp %356 : vector<8x32xf32>
    %cst_122 = arith.constant 1.000000e+00 : f32
    %358 = vector.broadcast %cst_122 : f32 to vector<8x32xf32>
    %359 = arith.addf %358, %357 : vector<8x32xf32>
    %360 = arith.divf %358, %359 : vector<8x32xf32>
    %361 = vector.extract_strided_slice %350 {offsets = [0, 32], sizes = [8, 32], strides = [1, 1]} : vector<8x96xf32> to vector<8x32xf32>
    %362 = vector.extract_strided_slice %352 {offsets = [0, 32], sizes = [8, 32], strides = [1, 1]} : vector<8x96xf32> to vector<8x32xf32>
    %363 = arith.addf %361, %362 : vector<8x32xf32>
    %364 = arith.negf %363 : vector<8x32xf32>
    %365 = math.exp %364 : vector<8x32xf32>
    %cst_123 = arith.constant 1.000000e+00 : f32
    %366 = vector.broadcast %cst_123 : f32 to vector<8x32xf32>
    %367 = arith.addf %366, %365 : vector<8x32xf32>
    %368 = arith.divf %366, %367 : vector<8x32xf32>
    %369 = vector.extract_strided_slice %350 {offsets = [0, 64], sizes = [8, 32], strides = [1, 1]} : vector<8x96xf32> to vector<8x32xf32>
    %370 = vector.extract_strided_slice %352 {offsets = [0, 64], sizes = [8, 32], strides = [1, 1]} : vector<8x96xf32> to vector<8x32xf32>
    %371 = arith.mulf %360, %370 : vector<8x32xf32>
    %372 = arith.addf %369, %371 : vector<8x32xf32>
    %373 = math.tanh %372 : vector<8x32xf32>
    %cst_124 = arith.constant 1.000000e+00 : f32
    %374 = vector.broadcast %cst_124 : f32 to vector<8x32xf32>
    %375 = arith.subf %374, %368 : vector<8x32xf32>
    %376 = arith.mulf %375, %373 : vector<8x32xf32>
    %377 = arith.mulf %368, %306 : vector<8x32xf32>
    %378 = arith.addf %376, %377 : vector<8x32xf32>
    %379 = arith.truncf %378 : vector<8x32xf32> to vector<8x32xbf16>
    %cst_125 = arith.constant dense<0.000000e+00> : vector<8x128xf32>
    %380 = tpu.matmul %379, %25, %cst_125 {dimension_numbers = #tpu.dot_dimension_numbers<[1], [0], [0], [1], [0, 0, 1, 1], [], []>} : vector<8x32xbf16>, vector<32x128xbf16>, vector<8x128xf32> -> vector<8x128xf32>
    %cst_126 = arith.constant dense<0.000000e+00> : vector<8x128xf32>
    %381 = tpu.matmul %346, %26, %cst_126 {dimension_numbers = #tpu.dot_dimension_numbers<[1], [0], [0], [1], [0, 0, 1, 1], [], []>} : vector<8x32xbf16>, vector<32x128xbf16>, vector<8x128xf32> -> vector<8x128xf32>
    %382 = arith.addf %380, %381 : vector<8x128xf32>
    %cst_127 = arith.constant dense<0.000000e+00> : vector<8x128xf32>
    %383 = tpu.matmul %320, %27, %cst_127 {dimension_numbers = #tpu.dot_dimension_numbers<[1], [0], [0], [1], [0, 0, 1, 1], [], []>} : vector<8x16xbf16>, vector<16x128xbf16>, vector<8x128xf32> -> vector<8x128xf32>
    %384 = arith.addf %382, %383 : vector<8x128xf32>
    %385 = arith.addf %384, %20 : vector<8x128xf32>
    %386 = arith.index_cast %c4_i32 : i32 to index
    %c0_128 = arith.constant 0 : index
    %c0_129 = arith.constant 0 : index
    %387 = vector.load %arg17[%386, %c0_128, %c0_129] : memref<5x8x128xf32, #tpu.memory_space<vmem>>, vector<1x8x128xf32>
    %388 = vector.shape_cast %387 : vector<1x8x128xf32> to vector<8x128xf32>
    %389 = vector.shape_cast %385 : vector<8x128xf32> to vector<1x8x128xf32>
    tpu.vector_store %arg17[%386, %c0_128, %c0_129], %389 {strides = array<i32>} : memref<5x8x128xf32, #tpu.memory_space<vmem>>, vector<1x8x128xf32>,
    %c5_i32 = arith.constant 5 : i32
    %c0_130 = arith.constant 0 : index
    %c0_131 = arith.constant 0 : index
    %390 = vector.load %arg18[%c0_130, %c0_131] : memref<8x32xf32, #tpu.memory_space<vmem>>, vector<8x32xf32>
    tpu.vector_store %arg18[%c0_130, %c0_131], %378 {strides = array<i32>} : memref<8x32xf32, #tpu.memory_space<vmem>>, vector<8x32xf32>,
    return
  }
  func.func @transform_0(%arg0: i32) -> (i32, i32, i32) {
    %c0_i32 = arith.constant 0 : i32
    %c0_i32_0 = arith.constant 0 : i32
    %c0_i32_1 = arith.constant 0 : i32
    return %c0_i32, %arg0, %c0_i32_0 : i32, i32, i32
  }
  func.func @transform_1(%arg0: i32) -> (i32, i32) {
    %c0_i32 = arith.constant 0 : i32
    %c0_i32_0 = arith.constant 0 : i32
    return %arg0, %c0_i32 : i32, i32
  }
  func.func @transform_2(%arg0: i32) -> (i32, i32, i32) {
    %c0_i32 = arith.constant 0 : i32
    %c0_i32_0 = arith.constant 0 : i32
    %c0_i32_1 = arith.constant 0 : i32
    return %arg0, %c0_i32, %c0_i32_0 : i32, i32, i32
  }
  func.func @transform_3(%arg0: i32) -> (i32, i32) {
    %c0_i32 = arith.constant 0 : i32
    %c0_i32_0 = arith.constant 0 : i32
    %c0_i32_1 = arith.constant 0 : i32
    return %c0_i32, %c0_i32_0 : i32, i32
  }
  func.func @transform_4(%arg0: i32) -> (i32, i32) {
    %c0_i32 = arith.constant 0 : i32
    %c0_i32_0 = arith.constant 0 : i32
    %c0_i32_1 = arith.constant 0 : i32
    return %c0_i32, %c0_i32_0 : i32, i32
  }
  func.func @transform_5(%arg0: i32) -> (i32, i32) {
    %c0_i32 = arith.constant 0 : i32
    %c0_i32_0 = arith.constant 0 : i32
    %c0_i32_1 = arith.constant 0 : i32
    return %c0_i32, %c0_i32_0 : i32, i32
  }
  func.func @transform_6(%arg0: i32) -> (i32, i32) {
    %c0_i32 = arith.constant 0 : i32
    %c0_i32_0 = arith.constant 0 : i32
    %c0_i32_1 = arith.constant 0 : i32
    return %c0_i32, %c0_i32_0 : i32, i32
  }
  func.func @transform_7(%arg0: i32) -> (i32, i32) {
    %c0_i32 = arith.constant 0 : i32
    %c0_i32_0 = arith.constant 0 : i32
    %c0_i32_1 = arith.constant 0 : i32
    return %c0_i32, %c0_i32_0 : i32, i32
  }
  func.func @transform_8(%arg0: i32) -> (i32, i32) {
    %c0_i32 = arith.constant 0 : i32
    %c0_i32_0 = arith.constant 0 : i32
    %c0_i32_1 = arith.constant 0 : i32
    return %c0_i32, %c0_i32_0 : i32, i32
  }
  func.func @transform_9(%arg0: i32) -> (i32, i32) {
    %c0_i32 = arith.constant 0 : i32
    %c0_i32_0 = arith.constant 0 : i32
    %c0_i32_1 = arith.constant 0 : i32
    return %c0_i32, %c0_i32_0 : i32, i32
  }
  func.func @transform_10(%arg0: i32) -> (i32, i32) {
    %c0_i32 = arith.constant 0 : i32
    %c0_i32_0 = arith.constant 0 : i32
    %c0_i32_1 = arith.constant 0 : i32
    return %c0_i32, %c0_i32_0 : i32, i32
  }
  func.func @transform_11(%arg0: i32) -> (i32, i32) {
    %c0_i32 = arith.constant 0 : i32
    %c0_i32_0 = arith.constant 0 : i32
    %c0_i32_1 = arith.constant 0 : i32
    return %c0_i32, %c0_i32_0 : i32, i32
  }
  func.func @transform_12(%arg0: i32) -> (i32, i32) {
    %c0_i32 = arith.constant 0 : i32
    %c0_i32_0 = arith.constant 0 : i32
    %c0_i32_1 = arith.constant 0 : i32
    return %c0_i32, %c0_i32_0 : i32, i32
  }
  func.func @transform_13(%arg0: i32) -> (i32, i32) {
    %c0_i32 = arith.constant 0 : i32
    %c0_i32_0 = arith.constant 0 : i32
    %c0_i32_1 = arith.constant 0 : i32
    return %c0_i32, %c0_i32_0 : i32, i32
  }
  func.func @transform_14(%arg0: i32) -> (i32, i32) {
    %c0_i32 = arith.constant 0 : i32
    %c0_i32_0 = arith.constant 0 : i32
    %c0_i32_1 = arith.constant 0 : i32
    return %c0_i32, %c0_i32_0 : i32, i32
  }
  func.func @transform_15(%arg0: i32) -> (i32, i32) {
    %c0_i32 = arith.constant 0 : i32
    %c0_i32_0 = arith.constant 0 : i32
    %c0_i32_1 = arith.constant 0 : i32
    return %c0_i32, %c0_i32_0 : i32, i32
  }
  func.func @transform_16(%arg0: i32) -> (i32, i32, i32) {
    %c0_i32 = arith.constant 0 : i32
    %c0_i32_0 = arith.constant 0 : i32
    %c0_i32_1 = arith.constant 0 : i32
    return %c0_i32, %arg0, %c0_i32_0 : i32, i32, i32
  }
  func.func @transform_17(%arg0: i32) -> (i32, i32) {
    %c0_i32 = arith.constant 0 : i32
    %c0_i32_0 = arith.constant 0 : i32
    return %arg0, %c0_i32 : i32, i32
  }
  func.func @transform_18(%arg0: i32) -> (i32, i32, i32) {
    %c0_i32 = arith.constant 0 : i32
    %c0_i32_0 = arith.constant 0 : i32
    %c0_i32_1 = arith.constant 0 : i32
    return %c0_i32, %arg0, %c0_i32_0 : i32, i32, i32
  }
}

</mosaic_0001>

<llo_original>
// kernel: tpu_custom_call.1
$region0: #{tpu_custom_call.1}
  #allocation0 [shape = 'u32[]', space=smem, size = 0x4, offset = 0x4, fixed_abs, tag = 'smem constant byte address 0x4 - core index']
  #allocation1 [shape = 'u32[144,128]{1,0:T(1,128)}', space=vmem, size = 0x12000, scoped, tag = 'internal scratch']
  %s0 = inlined_call_operand.hbm [shape: bf16[5,16,16], index: 0, kind: input, shape index: {}]
  %s1 = inlined_call_operand.hbm [shape: f32[16,32], index: 1, kind: input, shape index: {}]
  %s2 = inlined_call_operand.hbm [shape: f32[16,8,32], index: 2, kind: input, shape index: {}]
  %s3 = inlined_call_operand.hbm [shape: bf16[32,32], index: 3, kind: input, shape index: {}]
  %s4 = inlined_call_operand.hbm [shape: f32[32,32], index: 4, kind: input, shape index: {}]
  %s5 = inlined_call_operand.vmem [shape: f32[1,32], index: 5, kind: input, shape index: {}]
  %s6 = inlined_call_operand.hbm [shape: f32[1,32], index: 6, kind: input, shape index: {}]
  %s7 = inlined_call_operand.hbm [shape: bf16[16,96], index: 7, kind: input, shape index: {}]
  %s8 = inlined_call_operand.vmem [shape: bf16[32,96], index: 8, kind: input, shape index: {}]
  %s9 = inlined_call_operand.vmem [shape: bf16[32,96], index: 9, kind: input, shape index: {}]
  %s10 = inlined_call_operand.hbm [shape: f32[1,96], index: 10, kind: input, shape index: {}]
  %s11 = inlined_call_operand.hbm [shape: f32[1,96], index: 11, kind: input, shape index: {}]
  %s12 = inlined_call_operand.hbm [shape: bf16[32,128], index: 12, kind: input, shape index: {}]
  %s13 = inlined_call_operand.vmem [shape: bf16[32,128], index: 13, kind: input, shape index: {}]
  %s14 = inlined_call_operand.hbm [shape: bf16[16,128], index: 14, kind: input, shape index: {}]
  %s15 = inlined_call_operand.vmem [shape: f32[1,128], index: 15, kind: input, shape index: {}]
  %s16 = inlined_call_operand.hbm [shape: f32[5,16,128], index: 16, kind: output, shape index: {0}]
  %s17 = inlined_call_operand.hbm [shape: f32[16,32], index: 17, kind: output, shape index: {1}]
  %s18 = inlined_call_operand.vmem [shape: f32[5,16,8], index: 18, kind: output, shape index: {2}]
  %19 = xla_tuple %s16, %s17, %s18
  %s20 = sld [smem:[#allocation0]]
  $region191: #{tpu_custom_call.1} parent=0
    _
  %s22 = ssub.s32 1, %s20
  %s23 = scalar_select 0, %s22, %s20
  $region1: #{tpu_custom_call.1} parent=0
    #allocation2 [shape = 'u8[20480]{0}', space=vmem, size = 0x5000, scoped, tag = 'input window, operand 0']
    #allocation3 [shape = 's32[2]{0}', space=sflag, size = 0x8, scoped, tag = 'scoped memory for tpu_custom_call.1']
    #allocation4 [shape = 's32[2]{0}', space=sflag, size = 0x8, scoped, tag = 'scoped memory for tpu_custom_call.1']
    #allocation5 [shape = 'u8[8192]{0}', space=vmem, size = 0x2000, scoped, tag = 'input window, operand 1']
    #allocation6 [shape = 's32[2]{0}', space=sflag, size = 0x8, scoped, tag = 'scoped memory for tpu_custom_call.1']
    #allocation7 [shape = 'u8[65536]{0}', space=vmem, size = 0x10000, scoped, tag = 'input window, operand 2']
    #allocation8 [shape = 'u8[8192]{0}', space=vmem, size = 0x2000, scoped, tag = 'input window, operand 3, single buffered']
    #allocation9 [shape = 's32[1]{0}', space=sflag, size = 0x4, scoped, tag = 'scoped memory for tpu_custom_call.1']
    #allocation10 [shape = 'u8[16384]{0}', space=vmem, size = 0x4000, scoped, tag = 'input window, operand 4, single buffered']
    #allocation11 [shape = 'u8[512]{0}', space=vmem, size = 0x400, scoped, tag = 'input window, operand 6, single buffered']
    #allocation12 [shape = 's32[1]{0}', space=sflag, size = 0x4, scoped, tag = 'scoped memory for tpu_custom_call.1']
    #allocation13 [shape = 'u8[4096]{0}', space=vmem, size = 0x1000, scoped, tag = 'input window, operand 7, single buffered']
    #allocation14 [shape = 'u8[512]{0}', space=vmem, size = 0x400, scoped, tag = 'input window, operand 10, single buffered']
    #allocation15 [shape = 's32[1]{0}', space=sflag, size = 0x4, scoped, tag = 'scoped memory for tpu_custom_call.1']
    #allocation16 [shape = 'u8[512]{0}', space=vmem, size = 0x400, scoped, tag = 'input window, operand 11, single buffered']
    #allocation17 [shape = 'u8[8192]{0}', space=vmem, size = 0x2000, scoped, tag = 'input window, operand 12, single buffered']
    #allocation18 [shape = 's32[1]{0}', space=sflag, size = 0x4, scoped, tag = 'scoped memory for tpu_custom_call.1']
    #allocation19 [shape = 'u8[4096]{0}', space=vmem, size = 0x1000, scoped, tag = 'input window, operand 14, single buffered']
    #allocation20 [shape = 'u8[40960]{0}', space=vmem, size = 0xa000, scoped, tag = 'output window, operand 0']
    #allocation21 [shape = 'u8[8192]{0}', space=vmem, size = 0x2000, scoped, tag = 'output window, operand 1']
    #allocation22 [shape = 's32[2]{0}', space=sflag, size = 0x8, scoped, tag = 'scoped memory for tpu_custom_call.1']
    #allocation23 [shape = 'u8[40960]{0}', space=vmem, size = 0xa000, scoped, tag = 'output window, operand 2']
    %24 = vsyncpa [#allocation3], 0
    %s25 = scalar_lea.sflag [#allocation3], 1
    %26 = vsyncpa %s25, 0
    %27 = vsyncpa [#allocation6], 0
    %s28 = scalar_lea.sflag [#allocation6], 1
    %29 = vsyncpa %s28, 0
    %30 = vsyncpa [#allocation9], 0
    %31 = vsyncpa [#allocation12], 0
    %32 = vsyncpa [#allocation15], 0
    %33 = vsyncpa [#allocation18], 0
    %34 = vsyncpa [#allocation4], 0
    %s35 = scalar_lea.sflag [#allocation4], 1
    %36 = vsyncpa %s35, 0
    %37 = vsyncpa [#allocation22], 0
    %s38 = scalar_lea.sflag [#allocation22], 1
    %39 = vsyncpa %s38, 0
    loop: start=0, step=1, limit=4
    $region2: #{tpu_custom_call.1} parent=1 // loop_pre_header
      _
    $region3: #{tpu_custom_call.1} parent=1 // loop_header
      %s41 = sphi 0, %s45
      %p42 = scmp.ge.s32.totalorder %s41, 4
      %s51 = sphi 0, %s53
      %s54 = sphi 0, %s51
      %s55 = sphi 0, %s54
      %s71 = sphi 0, %s55
      %s77 = sphi 0, %s79
      %s80 = sphi 0, %s77
      %s81 = sphi 0, %s80
      %s97 = sphi 0, %s81
      %s103 = sphi 0, %s105
      %s106 = sphi 0, %s103
      %s107 = sphi 0, %s106
      %s123 = sphi 0, %s107
      %s127 = sphi 0, %s127
      %s129 = sphi 0, %s127
      %s130 = sphi 0, %s129
      %s144 = sphi 0, %s130
      %s148 = sphi 0, %s148
      %s150 = sphi 0, %s148
      %s151 = sphi 0, %s150
      %s165 = sphi 0, %s151
      %s169 = sphi 0, %s169
      %s171 = sphi 0, %s169
      %s172 = sphi 0, %s171
      %s186 = sphi 0, %s172
      %s190 = sphi 0, %s190
      %s192 = sphi 0, %s190
      %s193 = sphi 0, %s192
      %s207 = sphi 0, %s193
      %s211 = sphi 0, %s211
      %s213 = sphi 0, %s211
      %s214 = sphi 0, %s213
      %s228 = sphi 0, %s214
      %s232 = sphi 0, %s232
      %s234 = sphi 0, %s232
      %s235 = sphi 0, %s234
      %s249 = sphi 0, %s235
      %s253 = sphi 0, %s253
      %s255 = sphi 0, %s253
      %s256 = sphi 0, %s255
      %s270 = sphi 0, %s256
      %s274 = sphi 0, %s274
      %s276 = sphi 0, %s274
      %s277 = sphi 0, %s276
      %s291 = sphi 0, %s277
      %s295 = sphi 0, %s295
      %s297 = sphi 0, %s295
      %s298 = sphi 0, %s297
      %s312 = sphi 0, %s298
      %s316 = sphi 0, %s316
      %s318 = sphi 0, %s316
      %s319 = sphi 0, %s318
      %s333 = sphi 0, %s319
      %s337 = sphi 0, %s337
      %s339 = sphi 0, %s337
      %s340 = sphi 0, %s339
      %s354 = sphi 0, %s340
      %s358 = sphi 0, %s358
      %s360 = sphi 0, %s358
      %s361 = sphi 0, %s360
      %s375 = sphi 0, %s361
      %s379 = sphi 0, %s379
      %s381 = sphi 0, %s379
      %s382 = sphi 0, %s381
      %s396 = sphi 0, %s382
      %s402 = sphi 0, %s404
      %s405 = sphi 0, %s402
      %s406 = sphi 0, %s405
      %s422 = sphi 0, %s406
      %s428 = sphi 0, %s430
      %s431 = sphi 0, %s428
      %s432 = sphi 0, %s431
      %s448 = sphi 0, %s432
      %s454 = sphi 0, %s456
      %s457 = sphi 0, %s454
      %s458 = sphi 0, %s457
      %s474 = sphi 0, %s458
    $region4: #{tpu_custom_call.1} parent=1 // loop_header_branch
      %44 = sbr.rel (%p42) target = $region8
    $region5: #{tpu_custom_call.1} parent=1 // loop_body
      %s46 = ssub.s32 %s41, 1
      %s47 = ssub.s32 %s41, 2
      %s48 = sadd.s32 %s41, 1
      %s49 = ssub.s32 %s41, %s48
      %p50 = scmp.eq.s32.totalorder %s49, 0
      %s52 = sadd.s32 %s51, 1
      %s53 = scalar_select %p50, %s51, %s52
      %p56 = pneg %p50
      %p57 = scmp.eq.s32.totalorder %s41, 1
      %p58 = por %p56, %p57
      %p59 = scmp.ne.s32.totalorder %s51, %s54
      %p60 = scmp.eq.s32.totalorder %s41, 0
      %p61 = por %p59, %p60
      %p62 = scmp.ne.s32.totalorder %s51, %s54
      %p63 = scmp.eq.s32.totalorder %s46, 1
      %p64 = por %p62, %p63
      %p65 = scmp.ne.s32.totalorder %s54, %s55
      %p66 = scmp.eq.s32.totalorder %s46, 0
      %p67 = por %p65, %p66
      %p68 = scmp.ne.s32.totalorder %s54, %s55
      %p69 = scmp.eq.s32.totalorder %s47, 1
      %p70 = por %p68, %p69
      %p72 = scmp.ne.s32.totalorder %s55, %s71
      %p73 = scmp.eq.s32.totalorder %s47, 0
      %p74 = por %p72, %p73
      %s75 = ssub.s32 %s41, %s48
      %p76 = scmp.eq.s32.totalorder %s75, 0
      %s78 = sadd.s32 %s77, 1
      %s79 = scalar_select %p76, %s77, %s78
      %p82 = pneg %p76
      %p83 = scmp.eq.s32.totalorder %s41, 1
      %p84 = por %p82, %p83
      %p85 = scmp.ne.s32.totalorder %s77, %s80
      %p86 = scmp.eq.s32.totalorder %s41, 0
      %p87 = por %p85, %p86
      %p88 = scmp.ne.s32.totalorder %s77, %s80
      %p89 = scmp.eq.s32.totalorder %s46, 1
      %p90 = por %p88, %p89
      %p91 = scmp.ne.s32.totalorder %s80, %s81
      %p92 = scmp.eq.s32.totalorder %s46, 0
      %p93 = por %p91, %p92
      %p94 = scmp.ne.s32.totalorder %s80, %s81
      %p95 = scmp.eq.s32.totalorder %s47, 1
      %p96 = por %p94, %p95
      %p98 = scmp.ne.s32.totalorder %s81, %s97
      %p99 = scmp.eq.s32.totalorder %s47, 0
      %p100 = por %p98, %p99
      %s101 = ssub.s32 %s41, %s48
      %p102 = scmp.eq.s32.totalorder %s101, 0
      %s104 = sadd.s32 %s103, 1
      %s105 = scalar_select %p102, %s103, %s104
      %p108 = pneg %p102
      %p109 = scmp.eq.s32.totalorder %s41, 1
      %p110 = por %p108, %p109
      %p111 = scmp.ne.s32.totalorder %s103, %s106
      %p112 = scmp.eq.s32.totalorder %s41, 0
      %p113 = por %p111, %p112
      %p114 = scmp.ne.s32.totalorder %s103, %s106
      %p115 = scmp.eq.s32.totalorder %s46, 1
      %p116 = por %p114, %p115
      %p117 = scmp.ne.s32.totalorder %s106, %s107
      %p118 = scmp.eq.s32.totalorder %s46, 0
      %p119 = por %p117, %p118
      %p120 = scmp.ne.s32.totalorder %s106, %s107
      %p121 = scmp.eq.s32.totalorder %s47, 1
      %p122 = por %p120, %p121
      %p124 = scmp.ne.s32.totalorder %s107, %s123
      %p125 = scmp.eq.s32.totalorder %s47, 0
      %p126 = por %p124, %p125
      %s128 = sadd.s32 %s127, 1
      %p131 = scmp.eq.s32.totalorder %s41, 1
      %p132 = scmp.ne.s32.totalorder %s127, %s129
      %p133 = scmp.eq.s32.totalorder %s41, 0
      %p134 = por %p132, %p133
      %p135 = scmp.ne.s32.totalorder %s127, %s129
      %p136 = scmp.eq.s32.totalorder %s46, 1
      %p137 = por %p135, %p136
      %p138 = scmp.ne.s32.totalorder %s129, %s130
      %p139 = scmp.eq.s32.totalorder %s46, 0
      %p140 = por %p138, %p139
      %p141 = scmp.ne.s32.totalorder %s129, %s130
      %p142 = scmp.eq.s32.totalorder %s47, 1
      %p143 = por %p141, %p142
      %p145 = scmp.ne.s32.totalorder %s130, %s144
      %p146 = scmp.eq.s32.totalorder %s47, 0
      %p147 = por %p145, %p146
      %s149 = sadd.s32 %s148, 1
      %p152 = scmp.eq.s32.totalorder %s41, 1
      %p153 = scmp.ne.s32.totalorder %s148, %s150
      %p154 = scmp.eq.s32.totalorder %s41, 0
      %p155 = por %p153, %p154
      %p156 = scmp.ne.s32.totalorder %s148, %s150
      %p157 = scmp.eq.s32.totalorder %s46, 1
      %p158 = por %p156, %p157
      %p159 = scmp.ne.s32.totalorder %s150, %s151
      %p160 = scmp.eq.s32.totalorder %s46, 0
      %p161 = por %p159, %p160
      %p162 = scmp.ne.s32.totalorder %s150, %s151
      %p163 = scmp.eq.s32.totalorder %s47, 1
      %p164 = por %p162, %p163
      %p166 = scmp.ne.s32.totalorder %s151, %s165
      %p167 = scmp.eq.s32.totalorder %s47, 0
      %p168 = por %p166, %p167
      %s170 = sadd.s32 %s169, 1
      %p173 = scmp.eq.s32.totalorder %s41, 1
      %p174 = scmp.ne.s32.totalorder %s169, %s171
      %p175 = scmp.eq.s32.totalorder %s41, 0
      %p176 = por %p174, %p175
      %p177 = scmp.ne.s32.totalorder %s169, %s171
      %p178 = scmp.eq.s32.totalorder %s46, 1
      %p179 = por %p177, %p178
      %p180 = scmp.ne.s32.totalorder %s171, %s172
      %p181 = scmp.eq.s32.totalorder %s46, 0
      %p182 = por %p180, %p181
      %p183 = scmp.ne.s32.totalorder %s171, %s172
      %p184 = scmp.eq.s32.totalorder %s47, 1
      %p185 = por %p183, %p184
      %p187 = scmp.ne.s32.totalorder %s172, %s186
      %p188 = scmp.eq.s32.totalorder %s47, 0
      %p189 = por %p187, %p188
      %s191 = sadd.s32 %s190, 1
      %p194 = scmp.eq.s32.totalorder %s41, 1
      %p195 = scmp.ne.s32.totalorder %s190, %s192
      %p196 = scmp.eq.s32.totalorder %s41, 0
      %p197 = por %p195, %p196
      %p198 = scmp.ne.s32.totalorder %s190, %s192
      %p199 = scmp.eq.s32.totalorder %s46, 1
      %p200 = por %p198, %p199
      %p201 = scmp.ne.s32.totalorder %s192, %s193
      %p202 = scmp.eq.s32.totalorder %s46, 0
      %p203 = por %p201, %p202
      %p204 = scmp.ne.s32.totalorder %s192, %s193
      %p205 = scmp.eq.s32.totalorder %s47, 1
      %p206 = por %p204, %p205
      %p208 = scmp.ne.s32.totalorder %s193, %s207
      %p209 = scmp.eq.s32.totalorder %s47, 0
      %p210 = por %p208, %p209
      %s212 = sadd.s32 %s211, 1
      %p215 = scmp.eq.s32.totalorder %s41, 1
      %p216 = scmp.ne.s32.totalorder %s211, %s213
      %p217 = scmp.eq.s32.totalorder %s41, 0
      %p218 = por %p216, %p217
      %p219 = scmp.ne.s32.totalorder %s211, %s213
      %p220 = scmp.eq.s32.totalorder %s46, 1
      %p221 = por %p219, %p220
      %p222 = scmp.ne.s32.totalorder %s213, %s214
      %p223 = scmp.eq.s32.totalorder %s46, 0
      %p224 = por %p222, %p223
      %p225 = scmp.ne.s32.totalorder %s213, %s214
      %p226 = scmp.eq.s32.totalorder %s47, 1
      %p227 = por %p225, %p226
      %p229 = scmp.ne.s32.totalorder %s214, %s228
      %p230 = scmp.eq.s32.totalorder %s47, 0
      %p231 = por %p229, %p230
      %s233 = sadd.s32 %s232, 1
      %p236 = scmp.eq.s32.totalorder %s41, 1
      %p237 = scmp.ne.s32.totalorder %s232, %s234
      %p238 = scmp.eq.s32.totalorder %s41, 0
      %p239 = por %p237, %p238
      %p240 = scmp.ne.s32.totalorder %s232, %s234
      %p241 = scmp.eq.s32.totalorder %s46, 1
      %p242 = por %p240, %p241
      %p243 = scmp.ne.s32.totalorder %s234, %s235
      %p244 = scmp.eq.s32.totalorder %s46, 0
      %p245 = por %p243, %p244
      %p246 = scmp.ne.s32.totalorder %s234, %s235
      %p247 = scmp.eq.s32.totalorder %s47, 1
      %p248 = por %p246, %p247
      %p250 = scmp.ne.s32.totalorder %s235, %s249
      %p251 = scmp.eq.s32.totalorder %s47, 0
      %p252 = por %p250, %p251
      %s254 = sadd.s32 %s253, 1
      %p257 = scmp.eq.s32.totalorder %s41, 1
      %p258 = scmp.ne.s32.totalorder %s253, %s255
      %p259 = scmp.eq.s32.totalorder %s41, 0
      %p260 = por %p258, %p259
      %p261 = scmp.ne.s32.totalorder %s253, %s255
      %p262 = scmp.eq.s32.totalorder %s46, 1
      %p263 = por %p261, %p262
      %p264 = scmp.ne.s32.totalorder %s255, %s256
      %p265 = scmp.eq.s32.totalorder %s46, 0
      %p266 = por %p264, %p265
      %p267 = scmp.ne.s32.totalorder %s255, %s256
      %p268 = scmp.eq.s32.totalorder %s47, 1
      %p269 = por %p267, %p268
      %p271 = scmp.ne.s32.totalorder %s256, %s270
      %p272 = scmp.eq.s32.totalorder %s47, 0
      %p273 = por %p271, %p272
      %s275 = sadd.s32 %s274, 1
      %p278 = scmp.eq.s32.totalorder %s41, 1
      %p279 = scmp.ne.s32.totalorder %s274, %s276
      %p280 = scmp.eq.s32.totalorder %s41, 0
      %p281 = por %p279, %p280
      %p282 = scmp.ne.s32.totalorder %s274, %s276
      %p283 = scmp.eq.s32.totalorder %s46, 1
      %p284 = por %p282, %p283
      %p285 = scmp.ne.s32.totalorder %s276, %s277
      %p286 = scmp.eq.s32.totalorder %s46, 0
      %p287 = por %p285, %p286
      %p288 = scmp.ne.s32.totalorder %s276, %s277
      %p289 = scmp.eq.s32.totalorder %s47, 1
      %p290 = por %p288, %p289
      %p292 = scmp.ne.s32.totalorder %s277, %s291
      %p293 = scmp.eq.s32.totalorder %s47, 0
      %p294 = por %p292, %p293
      %s296 = sadd.s32 %s295, 1
      %p299 = scmp.eq.s32.totalorder %s41, 1
      %p300 = scmp.ne.s32.totalorder %s295, %s297
      %p301 = scmp.eq.s32.totalorder %s41, 0
      %p302 = por %p300, %p301
      %p303 = scmp.ne.s32.totalorder %s295, %s297
      %p304 = scmp.eq.s32.totalorder %s46, 1
      %p305 = por %p303, %p304
      %p306 = scmp.ne.s32.totalorder %s297, %s298
      %p307 = scmp.eq.s32.totalorder %s46, 0
      %p308 = por %p306, %p307
      %p309 = scmp.ne.s32.totalorder %s297, %s298
      %p310 = scmp.eq.s32.totalorder %s47, 1
      %p311 = por %p309, %p310
      %p313 = scmp.ne.s32.totalorder %s298, %s312
      %p314 = scmp.eq.s32.totalorder %s47, 0
      %p315 = por %p313, %p314
      %s317 = sadd.s32 %s316, 1
      %p320 = scmp.eq.s32.totalorder %s41, 1
      %p321 = scmp.ne.s32.totalorder %s316, %s318
      %p322 = scmp.eq.s32.totalorder %s41, 0
      %p323 = por %p321, %p322
      %p324 = scmp.ne.s32.totalorder %s316, %s318
      %p325 = scmp.eq.s32.totalorder %s46, 1
      %p326 = por %p324, %p325
      %p327 = scmp.ne.s32.totalorder %s318, %s319
      %p328 = scmp.eq.s32.totalorder %s46, 0
      %p329 = por %p327, %p328
      %p330 = scmp.ne.s32.totalorder %s318, %s319
      %p331 = scmp.eq.s32.totalorder %s47, 1
      %p332 = por %p330, %p331
      %p334 = scmp.ne.s32.totalorder %s319, %s333
      %p335 = scmp.eq.s32.totalorder %s47, 0
      %p336 = por %p334, %p335
      %s338 = sadd.s32 %s337, 1
      %p341 = scmp.eq.s32.totalorder %s41, 1
      %p342 = scmp.ne.s32.totalorder %s337, %s339
      %p343 = scmp.eq.s32.totalorder %s41, 0
      %p344 = por %p342, %p343
      %p345 = scmp.ne.s32.totalorder %s337, %s339
      %p346 = scmp.eq.s32.totalorder %s46, 1
      %p347 = por %p345, %p346
      %p348 = scmp.ne.s32.totalorder %s339, %s340
      %p349 = scmp.eq.s32.totalorder %s46, 0
      %p350 = por %p348, %p349
      %p351 = scmp.ne.s32.totalorder %s339, %s340
      %p352 = scmp.eq.s32.totalorder %s47, 1
      %p353 = por %p351, %p352
      %p355 = scmp.ne.s32.totalorder %s340, %s354
      %p356 = scmp.eq.s32.totalorder %s47, 0
      %p357 = por %p355, %p356
      %s359 = sadd.s32 %s358, 1
      %p362 = scmp.eq.s32.totalorder %s41, 1
      %p363 = scmp.ne.s32.totalorder %s358, %s360
      %p364 = scmp.eq.s32.totalorder %s41, 0
      %p365 = por %p363, %p364
      %p366 = scmp.ne.s32.totalorder %s358, %s360
      %p367 = scmp.eq.s32.totalorder %s46, 1
      %p368 = por %p366, %p367
      %p369 = scmp.ne.s32.totalorder %s360, %s361
      %p370 = scmp.eq.s32.totalorder %s46, 0
      %p371 = por %p369, %p370
      %p372 = scmp.ne.s32.totalorder %s360, %s361
      %p373 = scmp.eq.s32.totalorder %s47, 1
      %p374 = por %p372, %p373
      %p376 = scmp.ne.s32.totalorder %s361, %s375
      %p377 = scmp.eq.s32.totalorder %s47, 0
      %p378 = por %p376, %p377
      %s380 = sadd.s32 %s379, 1
      %p383 = scmp.eq.s32.totalorder %s41, 1
      %p384 = scmp.ne.s32.totalorder %s379, %s381
      %p385 = scmp.eq.s32.totalorder %s41, 0
      %p386 = por %p384, %p385
      %p387 = scmp.ne.s32.totalorder %s379, %s381
      %p388 = scmp.eq.s32.totalorder %s46, 1
      %p389 = por %p387, %p388
      %p390 = scmp.ne.s32.totalorder %s381, %s382
      %p391 = scmp.eq.s32.totalorder %s46, 0
      %p392 = por %p390, %p391
      %p393 = scmp.ne.s32.totalorder %s381, %s382
      %p394 = scmp.eq.s32.totalorder %s47, 1
      %p395 = por %p393, %p394
      %p397 = scmp.ne.s32.totalorder %s382, %s396
      %p398 = scmp.eq.s32.totalorder %s47, 0
      %p399 = por %p397, %p398
      %s400 = ssub.s32 %s41, %s48
      %p401 = scmp.eq.s32.totalorder %s400, 0
      %s403 = sadd.s32 %s402, 1
      %s404 = scalar_select %p401, %s402, %s403
      %p407 = pneg %p401
      %p408 = scmp.eq.s32.totalorder %s41, 1
      %p409 = por %p407, %p408
      %p410 = scmp.ne.s32.totalorder %s402, %s405
      %p411 = scmp.eq.s32.totalorder %s41, 0
      %p412 = por %p410, %p411
      %p413 = scmp.ne.s32.totalorder %s402, %s405
      %p414 = scmp.eq.s32.totalorder %s46, 1
      %p415 = por %p413, %p414
      %p416 = scmp.ne.s32.totalorder %s405, %s406
      %p417 = scmp.eq.s32.totalorder %s46, 0
      %p418 = por %p416, %p417
      %p419 = scmp.ne.s32.totalorder %s405, %s406
      %p420 = scmp.eq.s32.totalorder %s47, 1
      %p421 = por %p419, %p420
      %p423 = scmp.ne.s32.totalorder %s406, %s422
      %p424 = scmp.eq.s32.totalorder %s47, 0
      %p425 = por %p423, %p424
      %s426 = ssub.s32 %s41, %s48
      %p427 = scmp.eq.s32.totalorder %s426, 0
      %s429 = sadd.s32 %s428, 1
      %s430 = scalar_select %p427, %s428, %s429
      %p433 = pneg %p427
      %p434 = scmp.eq.s32.totalorder %s41, 1
      %p435 = por %p433, %p434
      %p436 = scmp.ne.s32.totalorder %s428, %s431
      %p437 = scmp.eq.s32.totalorder %s41, 0
      %p438 = por %p436, %p437
      %p439 = scmp.ne.s32.totalorder %s428, %s431
      %p440 = scmp.eq.s32.totalorder %s46, 1
      %p441 = por %p439, %p440
      %p442 = scmp.ne.s32.totalorder %s431, %s432
      %p443 = scmp.eq.s32.totalorder %s46, 0
      %p444 = por %p442, %p443
      %p445 = scmp.ne.s32.totalorder %s431, %s432
      %p446 = scmp.eq.s32.totalorder %s47, 1
      %p447 = por %p445, %p446
      %p449 = scmp.ne.s32.totalorder %s432, %s448
      %p450 = scmp.eq.s32.totalorder %s47, 0
      %p451 = por %p449, %p450
      %s452 = ssub.s32 %s41, %s48
      %p453 = scmp.eq.s32.totalorder %s452, 0
      %s455 = sadd.s32 %s454, 1
      %s456 = scalar_select %p453, %s454, %s455
      %p459 = pneg %p453
      %p460 = scmp.eq.s32.totalorder %s41, 1
      %p461 = por %p459, %p460
      %p462 = scmp.ne.s32.totalorder %s454, %s457
      %p463 = scmp.eq.s32.totalorder %s41, 0
      %p464 = por %p462, %p463
      %p465 = scmp.ne.s32.totalorder %s454, %s457
      %p466 = scmp.eq.s32.totalorder %s46, 1
      %p467 = por %p465, %p466
      %p468 = scmp.ne.s32.totalorder %s457, %s458
      %p469 = scmp.eq.s32.totalorder %s46, 0
      %p470 = por %p468, %p469
      %p471 = scmp.ne.s32.totalorder %s457, %s458
      %p472 = scmp.eq.s32.totalorder %s47, 1
      %p473 = por %p471, %p472
      %p475 = scmp.ne.s32.totalorder %s458, %s474
      %p476 = scmp.eq.s32.totalorder %s47, 0
      %p477 = por %p475, %p476
      %p478 = scmp.le.s32.totalorder 1, %s41
      %p479 = scmp.lt.s32.totalorder %s41, 3
      %p480 = pnand %p478, %p479
      %p481 = pneg %p480
      // Predicated region
      $region9: #{tpu_custom_call.1} parent=5 // pred_check
        _
      $region10: #{tpu_custom_call.1} parent=5 // pred_check_branch
        %483 = sbr.rel (%p480) target = $region12
      $region11: #{tpu_custom_call.1} parent=5 // pred_region
        %s484 = ssub.s32 %s41, 1
        // Predicated region
        $region13: #{tpu_custom_call.1} parent=11 // pred_check
          %p485 = pneg %p140
        $region14: #{tpu_custom_call.1} parent=11 // pred_check_branch
          %487 = sbr.rel (%p485) target = $region16
        $region15: #{tpu_custom_call.1} parent=11 // pred_region
          %s489 = ssub.s32 256, 256
          %490 = vsyncadd [#allocation9], %s489
          %s491 = sshll.u32 [#allocation8], 4
          %s492 = int_to_ptr.vmem [resolvable:$true] %s491
          %497 = dma.hbm_to_vmem [thread:$0]  %s3, 256, %s492, [#allocation9], 64, 64, 4
        $region16: #{tpu_custom_call.1} parent=11 // pred_fallthru
          _
        // Predicated region
        $region17: #{tpu_custom_call.1} parent=11 // pred_check
          %p498 = pneg %p161
        $region18: #{tpu_custom_call.1} parent=11 // pred_check_branch
          %500 = sbr.rel (%p498) target = $region20
        $region19: #{tpu_custom_call.1} parent=11 // pred_region
          %s502 = ssub.s32 512, 512
          %503 = vsyncadd [#allocation9], %s502
          %s504 = sshll.u32 [#allocation10], 4
          %s505 = int_to_ptr.vmem [resolvable:$true] %s504
          %510 = dma.hbm_to_vmem [thread:$0]  %s4, 512, %s505, [#allocation9], 128, 128, 8
        $region20: #{tpu_custom_call.1} parent=11 // pred_fallthru
          _
        // Predicated region
        $region21: #{tpu_custom_call.1} parent=11 // pred_check
          %p511 = pneg %p182
        $region22: #{tpu_custom_call.1} parent=11 // pred_check_branch
          %513 = sbr.rel (%p511) target = $region24
        $region23: #{tpu_custom_call.1} parent=11 // pred_region
          _
        $region24: #{tpu_custom_call.1} parent=11 // pred_fallthru
          _
        // Predicated region
        $region25: #{tpu_custom_call.1} parent=11 // pred_check
          %p514 = pneg %p203
        $region26: #{tpu_custom_call.1} parent=11 // pred_check_branch
          %516 = sbr.rel (%p514) target = $region28
        $region27: #{tpu_custom_call.1} parent=11 // pred_region
          %s518 = ssub.s32 16, 16
          %519 = vsyncadd [#allocation12], %s518
          %s521 = sshll.u32 [#allocation11], 4
          %s522 = int_to_ptr.vmem [resolvable:$true] %s521
          %524 = dma.hbm_to_vmem [thread:$0]  %s6, 16, %s522, [#allocation12]
        $region28: #{tpu_custom_call.1} parent=11 // pred_fallthru
          _
        // Predicated region
        $region29: #{tpu_custom_call.1} parent=11 // pred_check
          %p525 = pneg %p224
        $region30: #{tpu_custom_call.1} parent=11 // pred_check_branch
          %527 = sbr.rel (%p525) target = $region32
        $region31: #{tpu_custom_call.1} parent=11 // pred_region
          %s529 = ssub.s32 128, 128
          %530 = vsyncadd [#allocation12], %s529
          %s531 = sshll.u32 [#allocation13], 4
          %s532 = int_to_ptr.vmem [resolvable:$true] %s531
          %537 = dma.hbm_to_vmem [thread:$0]  %s7, 128, %s532, [#allocation12], 64, 64, 4
        $region32: #{tpu_custom_call.1} parent=11 // pred_fallthru
          _
        // Predicated region
        $region33: #{tpu_custom_call.1} parent=11 // pred_check
          %p538 = pneg %p245
        $region34: #{tpu_custom_call.1} parent=11 // pred_check_branch
          %540 = sbr.rel (%p538) target = $region36
        $region35: #{tpu_custom_call.1} parent=11 // pred_region
          _
        $region36: #{tpu_custom_call.1} parent=11 // pred_fallthru
          _
        // Predicated region
        $region37: #{tpu_custom_call.1} parent=11 // pred_check
          %p541 = pneg %p266
        $region38: #{tpu_custom_call.1} parent=11 // pred_check_branch
          %543 = sbr.rel (%p541) target = $region40
        $region39: #{tpu_custom_call.1} parent=11 // pred_region
          _
        $region40: #{tpu_custom_call.1} parent=11 // pred_fallthru
          _
        // Predicated region
        $region41: #{tpu_custom_call.1} parent=11 // pred_check
          %p544 = pneg %p287
        $region42: #{tpu_custom_call.1} parent=11 // pred_check_branch
          %546 = sbr.rel (%p544) target = $region44
        $region43: #{tpu_custom_call.1} parent=11 // pred_region
          %s548 = ssub.s32 16, 16
          %549 = vsyncadd [#allocation15], %s548
          %s551 = sshll.u32 [#allocation14], 4
          %s552 = int_to_ptr.vmem [resolvable:$true] %s551
          %554 = dma.hbm_to_vmem [thread:$0]  %s10, 16, %s552, [#allocation15]
        $region44: #{tpu_custom_call.1} parent=11 // pred_fallthru
          _
        // Predicated region
        $region45: #{tpu_custom_call.1} parent=11 // pred_check
          %p555 = pneg %p308
        $region46: #{tpu_custom_call.1} parent=11 // pred_check_branch
          %557 = sbr.rel (%p555) target = $region48
        $region47: #{tpu_custom_call.1} parent=11 // pred_region
          %s559 = ssub.s32 16, 16
          %560 = vsyncadd [#allocation15], %s559
          %s562 = sshll.u32 [#allocation16], 4
          %s563 = int_to_ptr.vmem [resolvable:$true] %s562
          %565 = dma.hbm_to_vmem [thread:$0]  %s11, 16, %s563, [#allocation15]
        $region48: #{tpu_custom_call.1} parent=11 // pred_fallthru
          _
        // Predicated region
        $region49: #{tpu_custom_call.1} parent=11 // pred_check
          %p566 = pneg %p329
        $region50: #{tpu_custom_call.1} parent=11 // pred_check_branch
          %568 = sbr.rel (%p566) target = $region52
        $region51: #{tpu_custom_call.1} parent=11 // pred_region
          %s570 = ssub.s32 256, 256
          %571 = vsyncadd [#allocation18], %s570
          %s572 = sshll.u32 [#allocation17], 4
          %s573 = int_to_ptr.vmem [resolvable:$true] %s572
          %578 = dma.hbm_to_vmem [thread:$0]  %s12, 256, %s573, [#allocation18], 64, 64, 4
        $region52: #{tpu_custom_call.1} parent=11 // pred_fallthru
          _
        // Predicated region
        $region53: #{tpu_custom_call.1} parent=11 // pred_check
          %p579 = pneg %p350
        $region54: #{tpu_custom_call.1} parent=11 // pred_check_branch
          %581 = sbr.rel (%p579) target = $region56
        $region55: #{tpu_custom_call.1} parent=11 // pred_region
          _
        $region56: #{tpu_custom_call.1} parent=11 // pred_fallthru
          _
        // Predicated region
        $region57: #{tpu_custom_call.1} parent=11 // pred_check
          %p582 = pneg %p371
        $region58: #{tpu_custom_call.1} parent=11 // pred_check_branch
          %584 = sbr.rel (%p582) target = $region60
        $region59: #{tpu_custom_call.1} parent=11 // pred_region
          %s586 = ssub.s32 128, 128
          %587 = vsyncadd [#allocation18], %s586
          %s588 = sshll.u32 [#allocation19], 4
          %s589 = int_to_ptr.vmem [resolvable:$true] %s588
          %594 = dma.hbm_to_vmem [thread:$0]  %s14, 128, %s589, [#allocation18], 64, 64, 4
        $region60: #{tpu_custom_call.1} parent=11 // pred_fallthru
          _
        // Predicated region
        $region61: #{tpu_custom_call.1} parent=11 // pred_check
          %p595 = pneg %p392
        $region62: #{tpu_custom_call.1} parent=11 // pred_check_branch
          %597 = sbr.rel (%p595) target = $region64
        $region63: #{tpu_custom_call.1} parent=11 // pred_region
          _
        $region64: #{tpu_custom_call.1} parent=11 // pred_fallthru
          _
      $region12: #{tpu_custom_call.1} parent=5 // pred_fallthru
        _
      %p598 = scmp.lt.s32.totalorder %s41, 2
      // Predicated region
      $region65: #{tpu_custom_call.1} parent=5 // pred_check
        %p599 = pneg %p598
      $region66: #{tpu_custom_call.1} parent=5 // pred_check_branch
        %601 = sbr.rel (%p599) target = $region68
      $region67: #{tpu_custom_call.1} parent=5 // pred_region
        // Predicated region
        $region69: #{tpu_custom_call.1} parent=67 // pred_check
          %p602 = pneg %p61
        $region70: #{tpu_custom_call.1} parent=67 // pred_check_branch
          %604 = sbr.rel (%p602) target = $region72
        $region71: #{tpu_custom_call.1} parent=67 // pred_region
          %s605 = sand.u32 %s51, 1
          %s606 = scalar_lea.sflag [#allocation3], %s605
          %s607 = sand.u32 %s51, 1
          %s608 = smul.addr %s607, 20
          %s609 = scalar_lea.vmem [#allocation2], %s608
          %s611 = ssub.s32 320, 320
          %612 = vsyncadd %s606, %s611
          %s613 = smul.addr %s41, 64
          %s614 = scalar_lea.hbm %s0, %s613
          %s615 = sshll.u32 %s609, 4
          %s616 = int_to_ptr.vmem [resolvable:$true] %s615
          %621 = dma.hbm_to_vmem [thread:$0]  %s614, 320, %s616, %s606, 128, 64, 4
        $region72: #{tpu_custom_call.1} parent=67 // pred_fallthru
          _
        // Predicated region
        $region73: #{tpu_custom_call.1} parent=67 // pred_check
          %p622 = pneg %p87
        $region74: #{tpu_custom_call.1} parent=67 // pred_check_branch
          %624 = sbr.rel (%p622) target = $region76
        $region75: #{tpu_custom_call.1} parent=67 // pred_region
          %s625 = sand.u32 %s41, 1
          %s626 = scalar_lea.sflag [#allocation6], %s625
          %s627 = sand.u32 %s77, 1
          %s628 = smul.addr %s627, 8
          %s629 = scalar_lea.vmem [#allocation5], %s628
          %s631 = ssub.s32 128, 128
          %632 = vsyncadd %s626, %s631
          %s633 = smul.addr %s41, 128
          %s634 = scalar_lea.hbm %s1, %s633
          %s636 = sshll.u32 %s629, 4
          %s637 = int_to_ptr.vmem [resolvable:$true] %s636
          %639 = dma.hbm_to_vmem [thread:$0]  %s634, 128, %s637, %s626
        $region76: #{tpu_custom_call.1} parent=67 // pred_fallthru
          _
        // Predicated region
        $region77: #{tpu_custom_call.1} parent=67 // pred_check
          %p640 = pneg %p113
        $region78: #{tpu_custom_call.1} parent=67 // pred_check_branch
          %642 = sbr.rel (%p640) target = $region80
        $region79: #{tpu_custom_call.1} parent=67 // pred_region
          %s643 = sand.u32 %s41, 1
          %s644 = scalar_lea.sflag [#allocation6], %s643
          %s645 = sand.u32 %s103, 1
          %s646 = smul.addr %s645, 64
          %s647 = scalar_lea.vmem [#allocation7], %s646
          %s648 = smul.u32 8, %s41
          %s650 = ssub.s32 1024, 1024
          %651 = vsyncadd %s644, %s650
          %s652 = smul.addr %s648, 128
          %s653 = scalar_lea.hbm %s2, %s652
          %s654 = sshll.u32 %s647, 4
          %s655 = int_to_ptr.vmem [resolvable:$true] %s654
          %660 = dma.hbm_to_vmem [thread:$0]  %s653, 1024, %s655, %s644, 128, 128, 8
        $region80: #{tpu_custom_call.1} parent=67 // pred_fallthru
          _
      $region68: #{tpu_custom_call.1} parent=5 // pred_fallthru
        _
      %p661 = scmp.le.s32.totalorder 1, %s41
      %p662 = scmp.lt.s32.totalorder %s41, 3
      %p663 = pnand %p661, %p662
      %p664 = pneg %p663
      // Predicated region
      $region81: #{tpu_custom_call.1} parent=5 // pred_check
        _
      $region82: #{tpu_custom_call.1} parent=5 // pred_check_branch
        %666 = sbr.rel (%p663) target = $region84
      $region83: #{tpu_custom_call.1} parent=5 // pred_region
        %s667 = ssub.s32 %s41, 1
        %s668 = sand.u32 %s54, 1
        %s669 = scalar_lea.sflag [#allocation3], %s668
        %s670 = sand.u32 %s54, 1
        %s671 = smul.addr %s670, 20
        %s672 = scalar_lea.vmem [#allocation2], %s671
        // Predicated region
        $region85: #{tpu_custom_call.1} parent=83 // pred_check
          %p673 = pneg %p67
        $region86: #{tpu_custom_call.1} parent=83 // pred_check_branch
          %675 = sbr.rel (%p673) target = $region88
        $region87: #{tpu_custom_call.1} parent=83 // pred_region
          %676 = dma.done %s669, 320
        $region88: #{tpu_custom_call.1} parent=83 // pred_fallthru
          _
        %s677 = sand.u32 %s46, 1
        %s678 = scalar_lea.sflag [#allocation6], %s677
        %s679 = sand.u32 %s80, 1
        %s680 = smul.addr %s679, 8
        %s681 = scalar_lea.vmem [#allocation5], %s680
        // Predicated region
        $region89: #{tpu_custom_call.1} parent=83 // pred_check
          %p682 = pneg %p93
        $region90: #{tpu_custom_call.1} parent=83 // pred_check_branch
          %684 = sbr.rel (%p682) target = $region92
        $region91: #{tpu_custom_call.1} parent=83 // pred_region
          %685 = dma.done %s678, 128
        $region92: #{tpu_custom_call.1} parent=83 // pred_fallthru
          _
        %s686 = sand.u32 %s46, 1
        %s687 = scalar_lea.sflag [#allocation6], %s686
        %s688 = sand.u32 %s106, 1
        %s689 = smul.addr %s688, 64
        %s690 = scalar_lea.vmem [#allocation7], %s689
        // Predicated region
        $region93: #{tpu_custom_call.1} parent=83 // pred_check
          %p691 = pneg %p119
        $region94: #{tpu_custom_call.1} parent=83 // pred_check_branch
          %693 = sbr.rel (%p691) target = $region96
        $region95: #{tpu_custom_call.1} parent=83 // pred_region
          %694 = dma.done %s687, 1024
        $region96: #{tpu_custom_call.1} parent=83 // pred_fallthru
          _
        // Predicated region
        $region97: #{tpu_custom_call.1} parent=83 // pred_check
          %p695 = pneg %p140
        $region98: #{tpu_custom_call.1} parent=83 // pred_check_branch
          %697 = sbr.rel (%p695) target = $region100
        $region99: #{tpu_custom_call.1} parent=83 // pred_region
          %698 = dma.done [#allocation9], 256
        $region100: #{tpu_custom_call.1} parent=83 // pred_fallthru
          _
        // Predicated region
        $region101: #{tpu_custom_call.1} parent=83 // pred_check
          %p699 = pneg %p161
        $region102: #{tpu_custom_call.1} parent=83 // pred_check_branch
          %701 = sbr.rel (%p699) target = $region104
        $region103: #{tpu_custom_call.1} parent=83 // pred_region
          %702 = dma.done [#allocation9], 512
        $region104: #{tpu_custom_call.1} parent=83 // pred_fallthru
          _
        // Predicated region
        $region105: #{tpu_custom_call.1} parent=83 // pred_check
          %p703 = pneg %p203
        $region106: #{tpu_custom_call.1} parent=83 // pred_check_branch
          %705 = sbr.rel (%p703) target = $region108
        $region107: #{tpu_custom_call.1} parent=83 // pred_region
          %706 = dma.done [#allocation12], 16
        $region108: #{tpu_custom_call.1} parent=83 // pred_fallthru
          _
        // Predicated region
        $region109: #{tpu_custom_call.1} parent=83 // pred_check
          %p707 = pneg %p224
        $region110: #{tpu_custom_call.1} parent=83 // pred_check_branch
          %709 = sbr.rel (%p707) target = $region112
        $region111: #{tpu_custom_call.1} parent=83 // pred_region
          %710 = dma.done [#allocation12], 128
        $region112: #{tpu_custom_call.1} parent=83 // pred_fallthru
          _
        // Predicated region
        $region113: #{tpu_custom_call.1} parent=83 // pred_check
          %p711 = pneg %p287
        $region114: #{tpu_custom_call.1} parent=83 // pred_check_branch
          %713 = sbr.rel (%p711) target = $region116
        $region115: #{tpu_custom_call.1} parent=83 // pred_region
          %714 = dma.done [#allocation15], 16
        $region116: #{tpu_custom_call.1} parent=83 // pred_fallthru
          _
        // Predicated region
        $region117: #{tpu_custom_call.1} parent=83 // pred_check
          %p715 = pneg %p308
        $region118: #{tpu_custom_call.1} parent=83 // pred_check_branch
          %717 = sbr.rel (%p715) target = $region120
        $region119: #{tpu_custom_call.1} parent=83 // pred_region
          %718 = dma.done [#allocation15], 16
        $region120: #{tpu_custom_call.1} parent=83 // pred_fallthru
          _
        // Predicated region
        $region121: #{tpu_custom_call.1} parent=83 // pred_check
          %p719 = pneg %p329
        $region122: #{tpu_custom_call.1} parent=83 // pred_check_branch
          %721 = sbr.rel (%p719) target = $region124
        $region123: #{tpu_custom_call.1} parent=83 // pred_region
          %722 = dma.done [#allocation18], 256
        $region124: #{tpu_custom_call.1} parent=83 // pred_fallthru
          _
        // Predicated region
        $region125: #{tpu_custom_call.1} parent=83 // pred_check
          %p723 = pneg %p371
        $region126: #{tpu_custom_call.1} parent=83 // pred_check_branch
          %725 = sbr.rel (%p723) target = $region128
        $region127: #{tpu_custom_call.1} parent=83 // pred_region
          %726 = dma.done [#allocation18], 128
        $region128: #{tpu_custom_call.1} parent=83 // pred_fallthru
          _
        %s727 = sand.u32 %s54, 1
        %s728 = scalar_lea.sflag [#allocation3], %s727
        %s729 = sand.u32 %s54, 1
        %s730 = smul.addr %s729, 20
        %s731 = scalar_lea.vmem [#allocation2], %s730
        %p732 = pneg %p67
        %p733 = pneg %p64
        %s734 = sand.u32 %s46, 1
        %s735 = scalar_lea.sflag [#allocation6], %s734
        %s736 = sand.u32 %s80, 1
        %s737 = smul.addr %s736, 8
        %s738 = scalar_lea.vmem [#allocation5], %s737
        %p739 = pneg %p93
        %p740 = pneg %p90
        %s741 = sand.u32 %s46, 1
        %s742 = scalar_lea.sflag [#allocation6], %s741
        %s743 = sand.u32 %s106, 1
        %s744 = smul.addr %s743, 64
        %s745 = scalar_lea.vmem [#allocation7], %s744
        %p746 = pneg %p119
        %p747 = pneg %p116
        %p748 = pneg %p140
        %p749 = pneg %p137
        %p750 = pneg %p161
        %p751 = pneg %p158
        %p752 = pneg %p182
        %p753 = pneg %p179
        %p754 = pneg %p203
        %p755 = pneg %p200
        %p756 = pneg %p224
        %p757 = pneg %p221
        %p758 = pneg %p245
        %p759 = pneg %p242
        %p760 = pneg %p266
        %p761 = pneg %p263
        %p762 = pneg %p287
        %p763 = pneg %p284
        %p764 = pneg %p308
        %p765 = pneg %p305
        %p766 = pneg %p329
        %p767 = pneg %p326
        %p768 = pneg %p350
        %p769 = pneg %p347
        %p770 = pneg %p371
        %p771 = pneg %p368
        %p772 = pneg %p392
        %p773 = pneg %p389
        %p774 = pneg %p418
        %p775 = pneg %p415
        %s776 = sand.u32 %s405, 1
        %s777 = scalar_lea.sflag [#allocation4], %s776
        %s778 = sand.u32 %s405, 1
        %s779 = smul.addr %s778, 40
        %s780 = scalar_lea.vmem [#allocation20], %s779
        %p781 = pneg %p444
        %p782 = pneg %p441
        %s783 = sand.u32 %s431, 1
        %s784 = scalar_lea.sflag [#allocation22], %s783
        %s785 = sand.u32 %s431, 1
        %s786 = smul.addr %s785, 8
        %s787 = scalar_lea.vmem [#allocation21], %s786
        %p788 = pneg %p470
        %p789 = pneg %p467
        %s790 = sand.u32 %s457, 1
        %s791 = sand.u32 %s457, 1
        %s792 = smul.addr %s791, 40
        %s793 = scalar_lea.vmem [#allocation23], %s792
        %s794 = smul.u32 8, %s46
        %v796 = vld [vmem:[%s690] sm:$0xff]
        %v797 = vld [vmem:[%s690 + $0x8] sm:$0xff]
        %v798 = vld [vmem:[%s690 + $0x10] sm:$0xff]
        %v799 = vld [vmem:[%s690 + $0x18] sm:$0xff]
        %v800 = vld [vmem:[%s690 + $0x20] sm:$0xff]
        %v801 = vld [vmem:[%s690 + $0x28] sm:$0xff]
        %v802 = vld [vmem:[%s690 + $0x30] sm:$0xff]
        %v803 = vld [vmem:[%s690 + $0x38] sm:$0xff]
        %v804 = vld [vmem:[#allocation10] sm:$0xff]
        %v805 = vld [vmem:[#allocation10 + $0x8] sm:$0xff]
        %v806 = vld [vmem:[#allocation10 + $0x10] sm:$0xff]
        %v807 = vld [vmem:[#allocation10 + $0x18] sm:$0xff]
        %v808 = vld [vmem:[%s5] sm:$0x1]
        %v810 = vlaneseq
        %v811 = vshrl.u32 %v810, 7
        %v812 = vsub.s32 0, %v811
        %v813 = vrot.slane %v808, %v812
        %vm815 = vcmask 261120
        %v817 = vsel %vm815, %v796, 0
        %v820 = vsel %vm815, %v797, 0
        %v823 = vsel %vm815, %v798, 0
        %v826 = vsel %vm815, %v799, 0
        %v829 = vsel %vm815, %v800, 0
        %v832 = vsel %vm815, %v801, 0
        %v835 = vsel %vm815, %v802, 0
        %v838 = vsel %vm815, %v803, 0
        %840 = vmatprep.subr.mxu0 0.0
        %841 = vmatpush1.msra.mxu0 %v804
        %842 = vmatprep.subr.mxu0 0.0
        %843 = vmatpush1.msra.mxu0 %v805
        %844 = vmatprep.subr.mxu0 0.0
        %845 = vmatpush1.msra.mxu0 %v806
        %846 = vmatprep.subr.mxu0 0.0
        %847 = vmatpush1.msra.mxu0 %v807
        %848 = vmatprep.subr.mxu0 0.0
        %849 = vmatpush1.msra.mxu0 0.0
        %850 = vmatprep.subr.mxu0 0.0
        %851 = vmatpush1.msra.mxu0 0.0
        %852 = vmatprep.subr.mxu0 0.0
        %853 = vmatpush1.msra.mxu0 0.0
        %854 = vmatprep.subr.mxu0 0.0
        %855 = vmatpush1.msra.mxu0 0.0
        %856 = vmatprep.subr.mxu0 0.0
        %857 = vmatpush1.msra.mxu0 0.0
        %858 = vmatprep.subr.mxu0 0.0
        %859 = vmatpush1.msra.mxu0 0.0
        %860 = vmatprep.subr.mxu0 0.0
        %861 = vmatpush1.msra.mxu0 0.0
        %862 = vmatprep.subr.mxu0 0.0
        %863 = vmatpush1.msra.mxu0 0.0
        %864 = vmatprep.subr.mxu0 0.0
        %865 = vmatpush1.msra.mxu0 0.0
        %866 = vmatprep.subr.mxu0 0.0
        %867 = vmatpush1.msra.mxu0 0.0
        %868 = vmatprep.subr.mxu0 0.0
        %869 = vmatpush1.msra.mxu0 0.0
        %870 = vmatprep.subr.mxu0 0.0
        %871 = vmatpush1.msra.mxu0 0.0
        %872 = vmatprep.subr.mxu0 0.0
        %873 = vmatpush1.msra.mxu0 0.0
        %874 = vmatprep.subr.mxu0 0.0
        %875 = vmatpush1.msra.mxu0 0.0
        %876 = vmatprep.subr.mxu0 0.0
        %877 = vmatpush1.msra.mxu0 0.0
        %878 = vmatprep.subr.mxu0 0.0
        %879 = vmatpush1.msra.mxu0 0.0
        %880 = vmatprep.subr.mxu0 0.0
        %881 = vmatpush1.msra.mxu0 0.0
        %882 = vmatprep.subr.mxu0 0.0
        %883 = vmatpush1.msra.mxu0 0.0
        %884 = vmatprep.subr.mxu0 0.0
        %885 = vmatpush1.msra.mxu0 0.0
        %886 = vmatprep.subr.mxu0 0.0
        %887 = vmatpush1.msra.mxu0 0.0
        %888 = vmatprep.subr.mxu0 0.0
        %889 = vmatpush1.msra.mxu0 0.0
        %890 = vmatprep.subr.mxu0 0.0
        %891 = vmatpush1.msra.mxu0 0.0
        %892 = vmatprep.subr.mxu0 0.0
        %893 = vmatpush1.msra.mxu0 0.0
        %894 = vmatprep.subr.mxu0 0.0
        %895 = vmatpush1.msra.mxu0 0.0
        %896 = vmatprep.subr.mxu0 0.0
        %897 = vmatpush1.msra.mxu0 0.0
        %898 = vmatprep.subr.mxu0 0.0
        %899 = vmatpush1.msra.mxu0 0.0
        %900 = vmatprep.subr.mxu0 0.0
        %901 = vmatpush1.msra.mxu0 0.0
        %902 = vmatprep.subr.mxu0 0.0
        %903 = vmatpush1.msra.mxu0 0.0
        %904 = vmatprep.mubr.f32.mxu0 0.0
        %905 = vmatmul.mubr.f32.gmra.mrb[0].mxu0 %v817
        %v906 = vpop.f32.mrb[0].mxu0
        %v907 = vadd.f32 %v813, %v906
        %v908 = vpop.f32.mrb[0].mxu0
        %909 = vmatprep.mubr.f32.mxu0 0.0
        %910 = vmatmul.mubr.f32.gmra.mrb[0].mxu0 %v820
        %v911 = vpop.f32.mrb[0].mxu0
        %v912 = vadd.f32 %v813, %v911
        %v913 = vpop.f32.mrb[0].mxu0
        %914 = vmatprep.mubr.f32.mxu0 0.0
        %915 = vmatmul.mubr.f32.gmra.mrb[0].mxu0 %v823
        %v916 = vpop.f32.mrb[0].mxu0
        %v917 = vadd.f32 %v813, %v916
        %v918 = vpop.f32.mrb[0].mxu0
        %919 = vmatprep.mubr.f32.mxu0 0.0
        %920 = vmatmul.mubr.f32.gmra.mrb[0].mxu0 %v826
        %v921 = vpop.f32.mrb[0].mxu0
        %v922 = vadd.f32 %v813, %v921
        %v923 = vpop.f32.mrb[0].mxu0
        %924 = vmatprep.mubr.f32.mxu0 0.0
        %925 = vmatmul.mubr.f32.gmra.mrb[0].mxu0 %v829
        %v926 = vpop.f32.mrb[0].mxu0
        %v927 = vadd.f32 %v813, %v926
        %v928 = vpop.f32.mrb[0].mxu0
        %929 = vmatprep.mubr.f32.mxu0 0.0
        %930 = vmatmul.mubr.f32.gmra.mrb[0].mxu0 %v832
        %v931 = vpop.f32.mrb[0].mxu0
        %v932 = vadd.f32 %v813, %v931
        %v933 = vpop.f32.mrb[0].mxu0
        %934 = vmatprep.mubr.f32.mxu0 0.0
        %935 = vmatmul.mubr.f32.gmra.mrb[0].mxu0 %v835
        %v936 = vpop.f32.mrb[0].mxu0
        %v937 = vadd.f32 %v813, %v936
        %v938 = vpop.f32.mrb[0].mxu0
        %939 = vmatprep.mubr.f32.mxu0 0.0
        %940 = vmatmul.mubr.f32.gmra.mrb[0].mxu0 %v838
        %v941 = vpop.f32.mrb[0].mxu0
        %v942 = vadd.f32 %v813, %v941
        %v943 = vpop.f32.mrb[0].mxu0
        %944 = vdwg.mxu0
        %v945 = vld [vmem:[#allocation11] sm:$0x1]
        %v947 = vlaneseq
        %v948 = vshrl.u32 %v947, 7
        %v949 = vsub.s32 0, %v948
        %v950 = vrot.slane %v945, %v949
        %v952 = vld [vmem:[#allocation14] sm:$0x1]
        %v954 = vlaneseq
        %v955 = vshrl.u32 %v954, 7
        %v956 = vsub.s32 0, %v955
        %v957 = vrot.slane %v952, %v956
        %v959 = vld [vmem:[#allocation16] sm:$0x1]
        %v961 = vlaneseq
        %v962 = vshrl.u32 %v961, 7
        %v963 = vsub.s32 0, %v962
        %v964 = vrot.slane %v959, %v963
        %v966 = vld [vmem:[%s15] sm:$0x1]
        %v968 = vlaneseq
        %v969 = vshrl.u32 %v968, 7
        %v970 = vsub.s32 0, %v969
        %v971 = vrot.slane %v966, %v970
        %v973 = vld [vmem:[#allocation8] sm:$0xf]
        %v974 = vld [vmem:[#allocation8 + $0x4] sm:$0xf]
        %v975 = vld [vmem:[#allocation8 + $0x8] sm:$0xf]
        %v976 = vld [vmem:[#allocation8 + $0xc] sm:$0xf]
        %v977 = vld [vmem:[#allocation13] sm:$0xf]
        %v978 = vld [vmem:[#allocation13 + $0x4] sm:$0xf]
        %v979 = vld [vmem:[%s8] sm:$0xf]
        %v980 = vld [vmem:[%s8 + $0x4] sm:$0xf]
        %v981 = vld [vmem:[%s8 + $0x8] sm:$0xf]
        %v982 = vld [vmem:[%s8 + $0xc] sm:$0xf]
        %v983 = vld [vmem:[%s9] sm:$0xf]
        %v984 = vld [vmem:[%s9 + $0x4] sm:$0xf]
        %v985 = vld [vmem:[%s9 + $0x8] sm:$0xf]
        %v986 = vld [vmem:[%s9 + $0xc] sm:$0xf]
        %v987 = vld [vmem:[#allocation17] sm:$0xf]
        %v988 = vld [vmem:[#allocation17 + $0x4] sm:$0xf]
        %v989 = vld [vmem:[#allocation17 + $0x8] sm:$0xf]
        %v990 = vld [vmem:[#allocation17 + $0xc] sm:$0xf]
        %v991 = vld [vmem:[%s13] sm:$0xf]
        %v992 = vld [vmem:[%s13 + $0x4] sm:$0xf]
        %v993 = vld [vmem:[%s13 + $0x8] sm:$0xf]
        %v994 = vld [vmem:[%s13 + $0xc] sm:$0xf]
        %v995 = vld [vmem:[#allocation19] sm:$0xf]
        %v996 = vld [vmem:[#allocation19 + $0x4] sm:$0xf]
        %v997 = vld [vmem:[%s681] sm:$0xff]
        %v998 = vpack.c.bf16 %v997, %v997
        %v999 = vld [vmem:[%s672] sm:$0xf]
        %v1004 = vunpack.c.l.b16 %v973
        %v1005 = vunpack.c.l.b16 %v974
        %v1006 = vunpack.c.l.b16 %v975
        %v1007 = vunpack.c.l.b16 %v976
        %v1008 = vpack.c.b16 %v1005, %v1004
        %v1009 = vpack.c.b16 %v1007, %v1006
        %v1013 = vsel %vm815, %v998, 0
        %1015 = vmatprep.subr.bf16.mxu0 0
        %1016 = vmatpush1.bf16.msra.mxu0 %v1008
        %1017 = vmatprep.subr.bf16.mxu0 0
        %1018 = vmatpush1.bf16.msra.mxu0 %v1009
        %1019 = vmatprep.subr.bf16.mxu0 0
        %1020 = vmatpush1.bf16.msra.mxu0 0
        %1021 = vmatprep.subr.bf16.mxu0 0
        %1022 = vmatpush1.bf16.msra.mxu0 0
        %1023 = vmatprep.subr.bf16.mxu0 0
        %1024 = vmatpush1.bf16.msra.mxu0 0
        %1025 = vmatprep.subr.bf16.mxu0 0
        %1026 = vmatpush1.bf16.msra.mxu0 0
        %1027 = vmatprep.subr.bf16.mxu0 0
        %1028 = vmatpush1.bf16.msra.mxu0 0
        %1029 = vmatprep.subr.bf16.mxu0 0
        %1030 = vmatpush1.bf16.msra.mxu0 0
        %1031 = vmatprep.subr.bf16.mxu0 0
        %1032 = vmatpush1.bf16.msra.mxu0 0
        %1033 = vmatprep.subr.bf16.mxu0 0
        %1034 = vmatpush1.bf16.msra.mxu0 0
        %1035 = vmatprep.subr.bf16.mxu0 0
        %1036 = vmatpush1.bf16.msra.mxu0 0
        %1037 = vmatprep.subr.bf16.mxu0 0
        %1038 = vmatpush1.bf16.msra.mxu0 0
        %1039 = vmatprep.subr.bf16.mxu0 0
        %1040 = vmatpush1.bf16.msra.mxu0 0
        %1041 = vmatprep.subr.bf16.mxu0 0
        %1042 = vmatpush1.bf16.msra.mxu0 0
        %1043 = vmatprep.subr.bf16.mxu0 0
        %1044 = vmatpush1.bf16.msra.mxu0 0
        %1045 = vmatprep.subr.bf16.mxu0 0
        %1046 = vmatpush1.bf16.msra.mxu0 0
        %1047 = vmatprep.mubr.bf16.mxu0 0
        %1048 = vmatmul.mubr.bf16.gmra.mrb[0].mxu0 %v1013
        %v1049 = vpop.f32.mrb[0].mxu0
        %v1050 = vadd.f32 0.0, %v1049
        %v1051 = vpop.f32.mrb[0].mxu0
        %v1052 = vpop.f32.mrb[0].mxu0
        %v1053 = vpop.f32.mrb[0].mxu0
        %1054 = vdwg.mxu0
        %v1056 = vcombine.high %v1050, %v1050
        %v1058 = vunpack.c.l.s4 1966171168
        %v1059 = vunpack.c.0.s8 %v1058
        %v1060 = vlaneseq
        %v1061 = vshrl.u32 %v1060, 7
        %v1062 = vsub.s32 %v1059, %v1061
        %v1063 = vrot.slane %v1050, %v1062
        %v1065 = vunpack.c.l.s4 1966171168
        %v1066 = vunpack.c.0.s8 %v1065
        %v1067 = vlaneseq
        %v1068 = vshrl.u32 %v1067, 7
        %v1069 = vsub.s32 %v1066, %v1068
        %v1070 = vrot.slane %v1056, %v1069
        %v1071 = vcombine.high %v1063, %v1063
        %v1072 = vcombine.high %v1070, %v1070
        %v1074 = vunpack.c.l.s4 1966171168
        %v1075 = vunpack.c.0.s8 %v1074
        %v1076 = vlaneseq
        %v1077 = vshrl.u32 %v1076, 7
        %v1078 = vsub.s32 %v1075, %v1077
        %v1079 = vrot.slane %v1063, %v1078
        %v1081 = vunpack.c.l.s4 1966171168
        %v1082 = vunpack.c.0.s8 %v1081
        %v1083 = vlaneseq
        %v1084 = vshrl.u32 %v1083, 7
        %v1085 = vsub.s32 %v1082, %v1084
        %v1086 = vrot.slane %v1070, %v1085
        %v1088 = vunpack.c.l.s4 1966171168
        %v1089 = vunpack.c.0.s8 %v1088
        %v1090 = vlaneseq
        %v1091 = vshrl.u32 %v1090, 7
        %v1092 = vsub.s32 %v1089, %v1091
        %v1093 = vrot.slane %v1071, %v1092
        %v1095 = vunpack.c.l.s4 1966171168
        %v1096 = vunpack.c.0.s8 %v1095
        %v1097 = vlaneseq
        %v1098 = vshrl.u32 %v1097, 7
        %v1099 = vsub.s32 %v1096, %v1098
        %v1100 = vrot.slane %v1072, %v1099
        %v1101 = vcombine.high %v1079, %v1079
        %v1102 = vcombine.high %v1086, %v1086
        %v1103 = vcombine.high %v1093, %v1093
        %v1104 = vcombine.high %v1100, %v1100
        %v1105 = vlaneseq
        %v1106 = vshrl.u32 %v1105, 7
        %v1107 = vsub.s32 0, %v1106
        %v1108 = vrot.slane %v1079, %v1107
        %v1109 = vlaneseq
        %v1110 = vshrl.u32 %v1109, 7
        %v1111 = vsub.s32 0, %v1110
        %v1112 = vrot.slane %v1093, %v1111
        %v1113 = vlaneseq
        %v1114 = vshrl.u32 %v1113, 7
        %v1115 = vsub.s32 0, %v1114
        %v1116 = vrot.slane %v1101, %v1115
        %v1117 = vlaneseq
        %v1118 = vshrl.u32 %v1117, 7
        %v1119 = vsub.s32 0, %v1118
        %v1120 = vrot.slane %v1103, %v1119
        %v1121 = vlaneseq
        %v1122 = vshrl.u32 %v1121, 7
        %v1123 = vsub.s32 0, %v1122
        %v1124 = vrot.slane %v1086, %v1123
        %v1125 = vlaneseq
        %v1126 = vshrl.u32 %v1125, 7
        %v1127 = vsub.s32 0, %v1126
        %v1128 = vrot.slane %v1100, %v1127
        %v1129 = vlaneseq
        %v1130 = vshrl.u32 %v1129, 7
        %v1131 = vsub.s32 0, %v1130
        %v1132 = vrot.slane %v1102, %v1131
        %v1133 = vlaneseq
        %v1134 = vshrl.u32 %v1133, 7
        %v1135 = vsub.s32 0, %v1134
        %v1136 = vrot.slane %v1104, %v1135
        %v1145 = vadd.f32 %v907, %v1108
        %v1146 = vadd.f32 %v912, %v1112
        %v1147 = vadd.f32 %v917, %v1116
        %v1148 = vadd.f32 %v922, %v1120
        %v1149 = vadd.f32 %v927, %v1124
        %v1150 = vadd.f32 %v932, %v1128
        %v1151 = vadd.f32 %v937, %v1132
        %v1152 = vadd.f32 %v942, %v1136
        %v1153 = vtanh.pop %v1145
        %v1154 = vtanh.pop %v1146
        %v1155 = vtanh.pop %v1147
        %v1156 = vtanh.pop %v1148
        %v1157 = vtanh.pop %v1149
        %v1158 = vtanh.pop %v1150
        %v1159 = vtanh.pop %v1151
        %v1160 = vtanh.pop %v1152
        %v1161 = vmul.f32 %v1153, %v950
        %v1162 = vmul.f32 %v1154, %v950
        %v1163 = vmul.f32 %v1155, %v950
        %v1164 = vmul.f32 %v1156, %v950
        %v1165 = vmul.f32 %v1157, %v950
        %v1166 = vmul.f32 %v1158, %v950
        %v1167 = vmul.f32 %v1159, %v950
        %v1168 = vmul.f32 %v1160, %v950
        %v1169 = vsel %vm815, %v1161, 0.0
        %1170 = vadd.xlane.f32.xlu0 %v1169
        %v1171 = vpop.xlane.xlu0 %1170
        %v1172 = vsel %vm815, %v1162, 0.0
        %1173 = vadd.xlane.f32.xlu0 %v1172
        %v1174 = vpop.xlane.xlu0 %1173
        %v1175 = vsel %vm815, %v1163, 0.0
        %1176 = vadd.xlane.f32.xlu0 %v1175
        %v1177 = vpop.xlane.xlu0 %1176
        %v1178 = vsel %vm815, %v1164, 0.0
        %1179 = vadd.xlane.f32.xlu0 %v1178
        %v1180 = vpop.xlane.xlu0 %1179
        %v1181 = vsel %vm815, %v1165, 0.0
        %1182 = vadd.xlane.f32.xlu0 %v1181
        %v1183 = vpop.xlane.xlu0 %1182
        %v1184 = vsel %vm815, %v1166, 0.0
        %1185 = vadd.xlane.f32.xlu0 %v1184
        %v1186 = vpop.xlane.xlu0 %1185
        %v1187 = vsel %vm815, %v1167, 0.0
        %1188 = vadd.xlane.f32.xlu0 %v1187
        %v1189 = vpop.xlane.xlu0 %1188
        %v1190 = vsel %vm815, %v1168, 0.0
        %1191 = vadd.xlane.f32.xlu0 %v1190
        %v1192 = vpop.xlane.xlu0 %1191
        %v1201 = vlaneseq
        %v1202 = vand.u32 %v1201, 127
        %v1203 = vlaneseq
        %v1204 = vshrl.u32 %v1203, 7
        %v1205 = vsub.s32 %v1202, %v1204
        %v1206 = vrot.slane %v1171, %v1205
        %v1207 = vlaneseq
        %v1208 = vshrl.u32 %v1207, 7
        %v1209 = vsub.s32 %v1202, %v1208
        %v1210 = vrot.slane %v1174, %v1209
        %v1211 = vlaneseq
        %v1212 = vshrl.u32 %v1211, 7
        %v1213 = vsub.s32 %v1202, %v1212
        %v1214 = vrot.slane %v1177, %v1213
        %v1215 = vlaneseq
        %v1216 = vshrl.u32 %v1215, 7
        %v1217 = vsub.s32 %v1202, %v1216
        %v1218 = vrot.slane %v1180, %v1217
        %v1219 = vlaneseq
        %v1220 = vshrl.u32 %v1219, 7
        %v1221 = vsub.s32 %v1202, %v1220
        %v1222 = vrot.slane %v1183, %v1221
        %v1223 = vlaneseq
        %v1224 = vshrl.u32 %v1223, 7
        %v1225 = vsub.s32 %v1202, %v1224
        %v1226 = vrot.slane %v1186, %v1225
        %v1227 = vlaneseq
        %v1228 = vshrl.u32 %v1227, 7
        %v1229 = vsub.s32 %v1202, %v1228
        %v1230 = vrot.slane %v1189, %v1229
        %v1231 = vlaneseq
        %v1232 = vshrl.u32 %v1231, 7
        %v1233 = vsub.s32 %v1202, %v1232
        %v1234 = vrot.slane %v1192, %v1233
        %vm1235 = vcmask 1041409
        %v1236 = vsel %vm1235, %v1210, %v1206
        %vm1237 = vcmask 1042434
        %v1238 = vsel %vm1237, %v1214, %v1236
        %vm1239 = vcmask 1043459
        %v1240 = vsel %vm1239, %v1218, %v1238
        %vm1241 = vcmask 1044484
        %v1242 = vsel %vm1241, %v1222, %v1240
        %vm1243 = vcmask 1045509
        %v1244 = vsel %vm1243, %v1226, %v1242
        %vm1245 = vcmask 1046534
        %v1246 = vsel %vm1245, %v1230, %v1244
        %vm1247 = vcmask 1047559
        %v1248 = vsel %vm1247, %v1234, %v1246
        %vm1250 = vcmask 64512
        %v1251 = vsel %vm1250, %v1248, -inf
        %1252 = vmax.xlane.f32.xlu0 %v1251
        %v1253 = vpop.xlane.xlu0 %1252
        %v1255 = vlaneseq
        %v1256 = vshrl.u32 %v1255, 7
        %v1257 = vsub.s32 0, %v1256
        %v1258 = vrot.slane %v1253, %v1257
        %v1259 = vlaneseq
        %v1260 = vshrl.u32 %v1259, 7
        %v1261 = vsub.s32 1, %v1260
        %v1262 = vrot.slane %v1253, %v1261
        %v1263 = vlaneseq
        %v1264 = vshrl.u32 %v1263, 7
        %v1265 = vsub.s32 2, %v1264
        %v1266 = vrot.slane %v1253, %v1265
        %v1267 = vlaneseq
        %v1268 = vshrl.u32 %v1267, 7
        %v1269 = vsub.s32 3, %v1268
        %v1270 = vrot.slane %v1253, %v1269
        %v1271 = vlaneseq
        %v1272 = vshrl.u32 %v1271, 7
        %v1273 = vsub.s32 4, %v1272
        %v1274 = vrot.slane %v1253, %v1273
        %v1275 = vlaneseq
        %v1276 = vshrl.u32 %v1275, 7
        %v1277 = vsub.s32 5, %v1276
        %v1278 = vrot.slane %v1253, %v1277
        %v1279 = vlaneseq
        %v1280 = vshrl.u32 %v1279, 7
        %v1281 = vsub.s32 6, %v1280
        %v1282 = vrot.slane %v1253, %v1281
        %v1283 = vlaneseq
        %v1284 = vshrl.u32 %v1283, 7
        %v1285 = vsub.s32 7, %v1284
        %v1286 = vrot.slane %v1253, %v1285
        %v1295 = vsub.f32 %v1171, %v1258
        %v1296 = vsub.f32 %v1174, %v1262
        %v1297 = vsub.f32 %v1177, %v1266
        %v1298 = vsub.f32 %v1180, %v1270
        %v1299 = vsub.f32 %v1183, %v1274
        %v1300 = vsub.f32 %v1186, %v1278
        %v1301 = vsub.f32 %v1189, %v1282
        %v1302 = vsub.f32 %v1192, %v1286
        %v1303 = vmul.f32 %v1295, 1.442695
        %v1304 = vpow.pop %v1303
        %v1305 = vmul.f32 %v1296, 1.442695
        %v1306 = vpow.pop %v1305
        %v1307 = vmul.f32 %v1297, 1.442695
        %v1308 = vpow.pop %v1307
        %v1309 = vmul.f32 %v1298, 1.442695
        %v1310 = vpow.pop %v1309
        %v1311 = vmul.f32 %v1299, 1.442695
        %v1312 = vpow.pop %v1311
        %v1313 = vmul.f32 %v1300, 1.442695
        %v1314 = vpow.pop %v1313
        %v1315 = vmul.f32 %v1301, 1.442695
        %v1316 = vpow.pop %v1315
        %v1317 = vmul.f32 %v1302, 1.442695
        %v1318 = vpow.pop %v1317
        %1327 = vset.pattern.permute.xlu0 0
        %1328 = vperm.xlu0 %1327, %v1304
        %v1329 = vpop.permute.xlu0 %1328
        %1330 = vset.pattern.permute.xlu0 0
        %1331 = vperm.xlu0 %1330, %v1306
        %v1332 = vpop.permute.xlu0 %1331
        %1333 = vset.pattern.permute.xlu0 0
        %1334 = vperm.xlu0 %1333, %v1308
        %v1335 = vpop.permute.xlu0 %1334
        %1336 = vset.pattern.permute.xlu0 0
        %1337 = vperm.xlu0 %1336, %v1310
        %v1338 = vpop.permute.xlu0 %1337
        %1339 = vset.pattern.permute.xlu0 0
        %1340 = vperm.xlu0 %1339, %v1312
        %v1341 = vpop.permute.xlu0 %1340
        %1342 = vset.pattern.permute.xlu0 0
        %1343 = vperm.xlu0 %1342, %v1314
        %v1344 = vpop.permute.xlu0 %1343
        %1345 = vset.pattern.permute.xlu0 0
        %1346 = vperm.xlu0 %1345, %v1316
        %v1347 = vpop.permute.xlu0 %1346
        %1348 = vset.pattern.permute.xlu0 0
        %1349 = vperm.xlu0 %1348, %v1318
        %v1350 = vpop.permute.xlu0 %1349
        %v1351 = vlaneseq
        %v1352 = vshrl.u32 %v1351, 7
        %v1353 = vsub.s32 %v1202, %v1352
        %v1354 = vrot.slane %v1329, %v1353
        %v1355 = vlaneseq
        %v1356 = vshrl.u32 %v1355, 7
        %v1357 = vsub.s32 %v1202, %v1356
        %v1358 = vrot.slane %v1332, %v1357
        %v1359 = vlaneseq
        %v1360 = vshrl.u32 %v1359, 7
        %v1361 = vsub.s32 %v1202, %v1360
        %v1362 = vrot.slane %v1335, %v1361
        %v1363 = vlaneseq
        %v1364 = vshrl.u32 %v1363, 7
        %v1365 = vsub.s32 %v1202, %v1364
        %v1366 = vrot.slane %v1338, %v1365
        %v1367 = vlaneseq
        %v1368 = vshrl.u32 %v1367, 7
        %v1369 = vsub.s32 %v1202, %v1368
        %v1370 = vrot.slane %v1341, %v1369
        %v1371 = vlaneseq
        %v1372 = vshrl.u32 %v1371, 7
        %v1373 = vsub.s32 %v1202, %v1372
        %v1374 = vrot.slane %v1344, %v1373
        %v1375 = vlaneseq
        %v1376 = vshrl.u32 %v1375, 7
        %v1377 = vsub.s32 %v1202, %v1376
        %v1378 = vrot.slane %v1347, %v1377
        %v1379 = vlaneseq
        %v1380 = vshrl.u32 %v1379, 7
        %v1381 = vsub.s32 %v1202, %v1380
        %v1382 = vrot.slane %v1350, %v1381
        %v1383 = vsel %vm1235, %v1358, %v1354
        %v1384 = vsel %vm1237, %v1362, %v1383
        %v1385 = vsel %vm1239, %v1366, %v1384
        %v1386 = vsel %vm1241, %v1370, %v1385
        %v1387 = vsel %vm1243, %v1374, %v1386
        %v1388 = vsel %vm1245, %v1378, %v1387
        %v1389 = vsel %vm1247, %v1382, %v1388
        %v1391 = vsel %vm1250, %v1389, 0.0
        %1392 = vadd.xlane.f32.xlu0 %v1391
        %v1393 = vpop.xlane.xlu0 %1392
        %v1394 = vrcp.pop %v1393
        %v1396 = vlaneseq
        %v1397 = vshrl.u32 %v1396, 7
        %v1398 = vsub.s32 0, %v1397
        %v1399 = vrot.slane %v1394, %v1398
        %v1400 = vlaneseq
        %v1401 = vshrl.u32 %v1400, 7
        %v1402 = vsub.s32 1, %v1401
        %v1403 = vrot.slane %v1394, %v1402
        %v1404 = vlaneseq
        %v1405 = vshrl.u32 %v1404, 7
        %v1406 = vsub.s32 2, %v1405
        %v1407 = vrot.slane %v1394, %v1406
        %v1408 = vlaneseq
        %v1409 = vshrl.u32 %v1408, 7
        %v1410 = vsub.s32 3, %v1409
        %v1411 = vrot.slane %v1394, %v1410
        %v1412 = vlaneseq
        %v1413 = vshrl.u32 %v1412, 7
        %v1414 = vsub.s32 4, %v1413
        %v1415 = vrot.slane %v1394, %v1414
        %v1416 = vlaneseq
        %v1417 = vshrl.u32 %v1416, 7
        %v1418 = vsub.s32 5, %v1417
        %v1419 = vrot.slane %v1394, %v1418
        %v1420 = vlaneseq
        %v1421 = vshrl.u32 %v1420, 7
        %v1422 = vsub.s32 6, %v1421
        %v1423 = vrot.slane %v1394, %v1422
        %v1424 = vlaneseq
        %v1425 = vshrl.u32 %v1424, 7
        %v1426 = vsub.s32 7, %v1425
        %v1427 = vrot.slane %v1394, %v1426
        %v1436 = vmul.f32 %v1304, %v1399
        %v1437 = vmul.f32 %v1306, %v1403
        %v1438 = vmul.f32 %v1308, %v1407
        %v1439 = vmul.f32 %v1310, %v1411
        %v1440 = vmul.f32 %v1312, %v1415
        %v1441 = vmul.f32 %v1314, %v1419
        %v1442 = vmul.f32 %v1316, %v1423
        %v1443 = vmul.f32 %v1318, %v1427
        %1452 = vset.pattern.permute.xlu0 0
        %1453 = vperm.xlu0 %1452, %v1436
        %v1454 = vpop.permute.xlu0 %1453
        %1455 = vset.pattern.permute.xlu0 0
        %1456 = vperm.xlu0 %1455, %v1437
        %v1457 = vpop.permute.xlu0 %1456
        %1458 = vset.pattern.permute.xlu0 0
        %1459 = vperm.xlu0 %1458, %v1438
        %v1460 = vpop.permute.xlu0 %1459
        %1461 = vset.pattern.permute.xlu0 0
        %1462 = vperm.xlu0 %1461, %v1439
        %v1463 = vpop.permute.xlu0 %1462
        %1464 = vset.pattern.permute.xlu0 0
        %1465 = vperm.xlu0 %1464, %v1440
        %v1466 = vpop.permute.xlu0 %1465
        %1467 = vset.pattern.permute.xlu0 0
        %1468 = vperm.xlu0 %1467, %v1441
        %v1469 = vpop.permute.xlu0 %1468
        %1470 = vset.pattern.permute.xlu0 0
        %1471 = vperm.xlu0 %1470, %v1442
        %v1472 = vpop.permute.xlu0 %1471
        %1473 = vset.pattern.permute.xlu0 0
        %1474 = vperm.xlu0 %1473, %v1443
        %v1475 = vpop.permute.xlu0 %1474
        %v1476 = vlaneseq
        %v1477 = vshrl.u32 %v1476, 7
        %v1478 = vsub.s32 %v1202, %v1477
        %v1479 = vrot.slane %v1454, %v1478
        %v1480 = vlaneseq
        %v1481 = vshrl.u32 %v1480, 7
        %v1482 = vsub.s32 %v1202, %v1481
        %v1483 = vrot.slane %v1457, %v1482
        %v1484 = vlaneseq
        %v1485 = vshrl.u32 %v1484, 7
        %v1486 = vsub.s32 %v1202, %v1485
        %v1487 = vrot.slane %v1460, %v1486
        %v1488 = vlaneseq
        %v1489 = vshrl.u32 %v1488, 7
        %v1490 = vsub.s32 %v1202, %v1489
        %v1491 = vrot.slane %v1463, %v1490
        %v1492 = vlaneseq
        %v1493 = vshrl.u32 %v1492, 7
        %v1494 = vsub.s32 %v1202, %v1493
        %v1495 = vrot.slane %v1466, %v1494
        %v1496 = vlaneseq
        %v1497 = vshrl.u32 %v1496, 7
        %v1498 = vsub.s32 %v1202, %v1497
        %v1499 = vrot.slane %v1469, %v1498
        %v1500 = vlaneseq
        %v1501 = vshrl.u32 %v1500, 7
        %v1502 = vsub.s32 %v1202, %v1501
        %v1503 = vrot.slane %v1472, %v1502
        %v1504 = vlaneseq
        %v1505 = vshrl.u32 %v1504, 7
        %v1506 = vsub.s32 %v1202, %v1505
        %v1507 = vrot.slane %v1475, %v1506
        %v1508 = vsel %vm1235, %v1483, %v1479
        %v1509 = vsel %vm1237, %v1487, %v1508
        %v1510 = vsel %vm1239, %v1491, %v1509
        %v1511 = vsel %vm1241, %v1495, %v1510
        %v1512 = vsel %vm1243, %v1499, %v1511
        %v1513 = vsel %vm1245, %v1503, %v1512
        %v1514 = vsel %vm1247, %v1507, %v1513
        %1516 = vst.msk [vmem:[%s793] sm:$0xff] %vm1250, %v1514
        %v1525 = vmul.f32 %v1454, %v796
        %v1526 = vmul.f32 %v1457, %v797
        %v1527 = vmul.f32 %v1460, %v798
        %v1528 = vmul.f32 %v1463, %v799
        %v1529 = vmul.f32 %v1466, %v800
        %v1530 = vmul.f32 %v1469, %v801
        %v1531 = vmul.f32 %v1472, %v802
        %v1532 = vmul.f32 %v1475, %v803
        %v1533 = vsel %vm815, %v1525, 0.0
        %v1534 = vrot.slane %v1533, 4
        %v1535 = vadd.f32 %v1533, %v1534
        %v1536 = vrot.slane %v1535, 2
        %v1537 = vadd.f32 %v1535, %v1536
        %v1538 = vrot.slane %v1537, 1
        %v1539 = vadd.f32 %v1537, %v1538
        %v1540 = vsel %vm815, %v1526, 0.0
        %v1541 = vrot.slane %v1540, 4
        %v1542 = vadd.f32 %v1540, %v1541
        %v1543 = vrot.slane %v1542, 2
        %v1544 = vadd.f32 %v1542, %v1543
        %v1545 = vrot.slane %v1544, 1
        %v1546 = vadd.f32 %v1544, %v1545
        %v1547 = vsel %vm815, %v1527, 0.0
        %v1548 = vrot.slane %v1547, 4
        %v1549 = vadd.f32 %v1547, %v1548
        %v1550 = vrot.slane %v1549, 2
        %v1551 = vadd.f32 %v1549, %v1550
        %v1552 = vrot.slane %v1551, 1
        %v1553 = vadd.f32 %v1551, %v1552
        %v1554 = vsel %vm815, %v1528, 0.0
        %v1555 = vrot.slane %v1554, 4
        %v1556 = vadd.f32 %v1554, %v1555
        %v1557 = vrot.slane %v1556, 2
        %v1558 = vadd.f32 %v1556, %v1557
        %v1559 = vrot.slane %v1558, 1
        %v1560 = vadd.f32 %v1558, %v1559
        %v1561 = vsel %vm815, %v1529, 0.0
        %v1562 = vrot.slane %v1561, 4
        %v1563 = vadd.f32 %v1561, %v1562
        %v1564 = vrot.slane %v1563, 2
        %v1565 = vadd.f32 %v1563, %v1564
        %v1566 = vrot.slane %v1565, 1
        %v1567 = vadd.f32 %v1565, %v1566
        %v1568 = vsel %vm815, %v1530, 0.0
        %v1569 = vrot.slane %v1568, 4
        %v1570 = vadd.f32 %v1568, %v1569
        %v1571 = vrot.slane %v1570, 2
        %v1572 = vadd.f32 %v1570, %v1571
        %v1573 = vrot.slane %v1572, 1
        %v1574 = vadd.f32 %v1572, %v1573
        %v1575 = vsel %vm815, %v1531, 0.0
        %v1576 = vrot.slane %v1575, 4
        %v1577 = vadd.f32 %v1575, %v1576
        %v1578 = vrot.slane %v1577, 2
        %v1579 = vadd.f32 %v1577, %v1578
        %v1580 = vrot.slane %v1579, 1
        %v1581 = vadd.f32 %v1579, %v1580
        %v1582 = vsel %vm815, %v1532, 0.0
        %v1583 = vrot.slane %v1582, 4
        %v1584 = vadd.f32 %v1582, %v1583
        %v1585 = vrot.slane %v1584, 2
        %v1586 = vadd.f32 %v1584, %v1585
        %v1587 = vrot.slane %v1586, 1
        %v1588 = vadd.f32 %v1586, %v1587
        %v1589 = vpack.c.bf16 %v1539, %v1539
        %v1590 = vpack.c.bf16 %v1546, %v1546
        %v1591 = vpack.c.bf16 %v1553, %v1553
        %v1592 = vpack.c.bf16 %v1560, %v1560
        %v1593 = vpack.c.bf16 %v1567, %v1567
        %v1594 = vpack.c.bf16 %v1574, %v1574
        %v1595 = vpack.c.bf16 %v1581, %v1581
        %v1596 = vpack.c.bf16 %v1588, %v1588
        %v1605 = vunpack.c.l.b16 %v1589
        %v1606 = vunpack.c.l.b16 %v1590
        %v1607 = vunpack.c.l.b16 %v1591
        %v1608 = vunpack.c.l.b16 %v1592
        %v1609 = vunpack.c.l.b16 %v1593
        %v1610 = vunpack.c.l.b16 %v1594
        %v1611 = vunpack.c.l.b16 %v1595
        %v1612 = vunpack.c.l.b16 %v1596
        %v1613 = vsel %vm1235, %v1606, %v1605
        %v1614 = vsel %vm1237, %v1607, %v1613
        %v1615 = vsel %vm1239, %v1608, %v1614
        %v1616 = vsel %vm1241, %v1609, %v1615
        %v1617 = vsel %vm1243, %v1610, %v1616
        %v1618 = vsel %vm1245, %v1611, %v1617
        %v1619 = vsel %vm1247, %v1612, %v1618
        %v1620 = vpack.c.b16 %v1619, %v1619
        %v1625 = vunpack.c.l.b16 %v979
        %v1626 = vunpack.c.l.b16 %v980
        %v1627 = vunpack.c.l.b16 %v981
        %v1628 = vunpack.c.l.b16 %v982
        %v1629 = vpack.c.b16 %v1626, %v1625
        %v1630 = vpack.c.b16 %v1628, %v1627
        %v1634 = vsel %vm815, %v1620, 0
        %1636 = vmatprep.subr.bf16.mxu0 0
        %1637 = vmatpush1.bf16.msra.mxu0 %v1629
        %1638 = vmatprep.subr.bf16.mxu0 0
        %1639 = vmatpush1.bf16.msra.mxu0 %v1630
        %1640 = vmatprep.subr.bf16.mxu0 0
        %1641 = vmatpush1.bf16.msra.mxu0 0
        %1642 = vmatprep.subr.bf16.mxu0 0
        %1643 = vmatpush1.bf16.msra.mxu0 0
        %1644 = vmatprep.subr.bf16.mxu0 0
        %1645 = vmatpush1.bf16.msra.mxu0 0
        %1646 = vmatprep.subr.bf16.mxu0 0
        %1647 = vmatpush1.bf16.msra.mxu0 0
        %1648 = vmatprep.subr.bf16.mxu0 0
        %1649 = vmatpush1.bf16.msra.mxu0 0
        %1650 = vmatprep.subr.bf16.mxu0 0
        %1651 = vmatpush1.bf16.msra.mxu0 0
        %1652 = vmatprep.subr.bf16.mxu0 0
        %1653 = vmatpush1.bf16.msra.mxu0 0
        %1654 = vmatprep.subr.bf16.mxu0 0
        %1655 = vmatpush1.bf16.msra.mxu0 0
        %1656 = vmatprep.subr.bf16.mxu0 0
        %1657 = vmatpush1.bf16.msra.mxu0 0
        %1658 = vmatprep.subr.bf16.mxu0 0
        %1659 = vmatpush1.bf16.msra.mxu0 0
        %1660 = vmatprep.subr.bf16.mxu0 0
        %1661 = vmatpush1.bf16.msra.mxu0 0
        %1662 = vmatprep.subr.bf16.mxu0 0
        %1663 = vmatpush1.bf16.msra.mxu0 0
        %1664 = vmatprep.subr.bf16.mxu0 0
        %1665 = vmatpush1.bf16.msra.mxu0 0
        %1666 = vmatprep.subr.bf16.mxu0 0
        %1667 = vmatpush1.bf16.msra.mxu0 0
        %1668 = vmatprep.mubr.bf16.mxu0 0
        %1669 = vmatmul.mubr.bf16.gmra.mrb[0].mxu0 %v1634
        %v1670 = vpop.f32.mrb[0].mxu0
        %v1671 = vadd.f32 0.0, %v1670
        %v1672 = vpop.f32.mrb[0].mxu0
        %v1673 = vpop.f32.mrb[0].mxu0
        %v1674 = vpop.f32.mrb[0].mxu0
        %1675 = vdwg.mxu0
        %v1678 = vunpack.c.l.b16 %v977
        %v1679 = vunpack.c.l.b16 %v978
        %v1680 = vpack.c.b16 %v1679, %v1678
        %vm1682 = vcmask 130048
        %v1684 = vsel %vm1682, %v999, 0
        %1686 = vmatprep.subr.bf16.mxu0 0
        %1687 = vmatpush1.bf16.msra.mxu0 %v1680
        %1688 = vmatprep.subr.bf16.mxu0 0
        %1689 = vmatpush1.bf16.msra.mxu0 0
        %1690 = vmatprep.subr.bf16.mxu0 0
        %1691 = vmatpush1.bf16.msra.mxu0 0
        %1692 = vmatprep.subr.bf16.mxu0 0
        %1693 = vmatpush1.bf16.msra.mxu0 0
        %1694 = vmatprep.subr.bf16.mxu0 0
        %1695 = vmatpush1.bf16.msra.mxu0 0
        %1696 = vmatprep.subr.bf16.mxu0 0
        %1697 = vmatpush1.bf16.msra.mxu0 0
        %1698 = vmatprep.subr.bf16.mxu0 0
        %1699 = vmatpush1.bf16.msra.mxu0 0
        %1700 = vmatprep.subr.bf16.mxu0 0
        %1701 = vmatpush1.bf16.msra.mxu0 0
        %1702 = vmatprep.subr.bf16.mxu0 0
        %1703 = vmatpush1.bf16.msra.mxu0 0
        %1704 = vmatprep.subr.bf16.mxu0 0
        %1705 = vmatpush1.bf16.msra.mxu0 0
        %1706 = vmatprep.subr.bf16.mxu0 0
        %1707 = vmatpush1.bf16.msra.mxu0 0
        %1708 = vmatprep.subr.bf16.mxu0 0
        %1709 = vmatpush1.bf16.msra.mxu0 0
        %1710 = vmatprep.subr.bf16.mxu0 0
        %1711 = vmatpush1.bf16.msra.mxu0 0
        %1712 = vmatprep.subr.bf16.mxu0 0
        %1713 = vmatpush1.bf16.msra.mxu0 0
        %1714 = vmatprep.subr.bf16.mxu0 0
        %1715 = vmatpush1.bf16.msra.mxu0 0
        %1716 = vmatprep.subr.bf16.mxu0 0
        %1717 = vmatpush1.bf16.msra.mxu0 0
        %1718 = vmatprep.mubr.bf16.mxu0 0
        %1719 = vmatmul.mubr.bf16.gmra.mrb[0].mxu0 %v1684
        %v1720 = vpop.f32.mrb[0].mxu0
        %v1721 = vadd.f32 %v1671, %v1720
        %v1722 = vpop.f32.mrb[0].mxu0
        %v1723 = vpop.f32.mrb[0].mxu0
        %v1724 = vpop.f32.mrb[0].mxu0
        %1725 = vdwg.mxu0
        %v1726 = vadd.f32 %v1721, %v957
        %v1731 = vunpack.c.l.b16 %v983
        %v1732 = vunpack.c.l.b16 %v984
        %v1733 = vunpack.c.l.b16 %v985
        %v1734 = vunpack.c.l.b16 %v986
        %v1735 = vpack.c.b16 %v1732, %v1731
        %v1736 = vpack.c.b16 %v1734, %v1733
        %1739 = vmatprep.subr.bf16.mxu0 0
        %1740 = vmatpush1.bf16.msra.mxu0 %v1735
        %1741 = vmatprep.subr.bf16.mxu0 0
        %1742 = vmatpush1.bf16.msra.mxu0 %v1736
        %1743 = vmatprep.subr.bf16.mxu0 0
        %1744 = vmatpush1.bf16.msra.mxu0 0
        %1745 = vmatprep.subr.bf16.mxu0 0
        %1746 = vmatpush1.bf16.msra.mxu0 0
        %1747 = vmatprep.subr.bf16.mxu0 0
        %1748 = vmatpush1.bf16.msra.mxu0 0
        %1749 = vmatprep.subr.bf16.mxu0 0
        %1750 = vmatpush1.bf16.msra.mxu0 0
        %1751 = vmatprep.subr.bf16.mxu0 0
        %1752 = vmatpush1.bf16.msra.mxu0 0
        %1753 = vmatprep.subr.bf16.mxu0 0
        %1754 = vmatpush1.bf16.msra.mxu0 0
        %1755 = vmatprep.subr.bf16.mxu0 0
        %1756 = vmatpush1.bf16.msra.mxu0 0
        %1757 = vmatprep.subr.bf16.mxu0 0
        %1758 = vmatpush1.bf16.msra.mxu0 0
        %1759 = vmatprep.subr.bf16.mxu0 0
        %1760 = vmatpush1.bf16.msra.mxu0 0
        %1761 = vmatprep.subr.bf16.mxu0 0
        %1762 = vmatpush1.bf16.msra.mxu0 0
        %1763 = vmatprep.subr.bf16.mxu0 0
        %1764 = vmatpush1.bf16.msra.mxu0 0
        %1765 = vmatprep.subr.bf16.mxu0 0
        %1766 = vmatpush1.bf16.msra.mxu0 0
        %1767 = vmatprep.subr.bf16.mxu0 0
        %1768 = vmatpush1.bf16.msra.mxu0 0
        %1769 = vmatprep.subr.bf16.mxu0 0
        %1770 = vmatpush1.bf16.msra.mxu0 0
        %1771 = vmatprep.mubr.bf16.mxu0 0
        %1772 = vmatmul.mubr.bf16.gmra.mrb[0].mxu0 %v1013
        %v1773 = vpop.f32.mrb[0].mxu0
        %v1774 = vadd.f32 %v964, %v1773
        %v1775 = vpop.f32.mrb[0].mxu0
        %v1776 = vpop.f32.mrb[0].mxu0
        %v1777 = vpop.f32.mrb[0].mxu0
        %1778 = vdwg.mxu0
        %v1779 = vadd.f32 %v1726, %v1774
        %v1780 = vxor.u32 %v1779, 2147483648
        %v1781 = vmul.f32 %v1780, 1.442695
        %v1782 = vpow.pop %v1781
        %v1783 = vadd.f32 %v1782, 1.0
        %v1784 = vrcp.pop %v1783
        %v1785 = vmul.f32 1.0, %v1784
        %1787 = vrot.lane.b32.xlu0 %v1774, 64
        %v1788 = vpop.permute.xlu0 %1787
        %v1790 = vmul.f32 %v1785, %v1788
        %1792 = vrot.lane.b32.xlu0 %v1790, 64
        %v1793 = vpop.permute.xlu0 %1792
        %v1795 = vadd.f32 %v1726, %v1793
        %v1796 = vtanh.pop %v1795
        %v1797 = vsub.f32 1.0, %v1785
        %1799 = vrot.lane.b32.xlu0 %v1796, 96
        %v1800 = vpop.permute.xlu0 %1799
        %v1802 = vmul.f32 %v1797, %v1800
        %1804 = vrot.lane.b32.xlu0 %v997, 32
        %v1805 = vpop.permute.xlu0 %1804
        %v1807 = vmul.f32 %v1785, %v1805
        %v1808 = vadd.f32 %v1802, %v1807
        %v1809 = vpack.c.bf16 %v1808, %v1808
        %v1814 = vunpack.c.l.b16 %v991
        %v1815 = vunpack.c.l.b16 %v992
        %v1816 = vunpack.c.l.b16 %v993
        %v1817 = vunpack.c.l.b16 %v994
        %v1818 = vpack.c.b16 %v1815, %v1814
        %v1819 = vpack.c.b16 %v1817, %v1816
        %1822 = vmatprep.subr.bf16.mxu0 0
        %1823 = vmatpush1.bf16.msra.mxu0 %v1818
        %1824 = vmatprep.subr.bf16.mxu0 0
        %1825 = vmatpush1.bf16.msra.mxu0 %v1819
        %1826 = vmatprep.subr.bf16.mxu0 0
        %1827 = vmatpush1.bf16.msra.mxu0 0
        %1828 = vmatprep.subr.bf16.mxu0 0
        %1829 = vmatpush1.bf16.msra.mxu0 0
        %1830 = vmatprep.subr.bf16.mxu0 0
        %1831 = vmatpush1.bf16.msra.mxu0 0
        %1832 = vmatprep.subr.bf16.mxu0 0
        %1833 = vmatpush1.bf16.msra.mxu0 0
        %1834 = vmatprep.subr.bf16.mxu0 0
        %1835 = vmatpush1.bf16.msra.mxu0 0
        %1836 = vmatprep.subr.bf16.mxu0 0
        %1837 = vmatpush1.bf16.msra.mxu0 0
        %1838 = vmatprep.subr.bf16.mxu0 0
        %1839 = vmatpush1.bf16.msra.mxu0 0
        %1840 = vmatprep.subr.bf16.mxu0 0
        %1841 = vmatpush1.bf16.msra.mxu0 0
        %1842 = vmatprep.subr.bf16.mxu0 0
        %1843 = vmatpush1.bf16.msra.mxu0 0
        %1844 = vmatprep.subr.bf16.mxu0 0
        %1845 = vmatpush1.bf16.msra.mxu0 0
        %1846 = vmatprep.subr.bf16.mxu0 0
        %1847 = vmatpush1.bf16.msra.mxu0 0
        %1848 = vmatprep.subr.bf16.mxu0 0
        %1849 = vmatpush1.bf16.msra.mxu0 0
        %1850 = vmatprep.subr.bf16.mxu0 0
        %1851 = vmatpush1.bf16.msra.mxu0 0
        %1852 = vmatprep.subr.bf16.mxu0 0
        %1853 = vmatpush1.bf16.msra.mxu0 0
        %1854 = vmatprep.mubr.bf16.mxu0 0
        %1855 = vmatmul.mubr.bf16.gmra.mrb[0].mxu0 %v1634
        %v1856 = vpop.f32.mrb[0].mxu0
        %v1857 = vadd.f32 0.0, %v1856
        %v1858 = vpop.f32.mrb[0].mxu0
        %v1859 = vpop.f32.mrb[0].mxu0
        %v1860 = vpop.f32.mrb[0].mxu0
        %1861 = vdwg.mxu0
        %1863 = vrot.lane.b32.xlu0 %v1809, 96
        %v1864 = vpop.permute.xlu0 %1863
        %v1869 = vunpack.c.l.b16 %v987
        %v1870 = vunpack.c.l.b16 %v988
        %v1871 = vunpack.c.l.b16 %v989
        %v1872 = vunpack.c.l.b16 %v990
        %v1873 = vpack.c.b16 %v1870, %v1869
        %v1874 = vpack.c.b16 %v1872, %v1871
        %v1878 = vsel %vm815, %v1864, 0
        %1880 = vmatprep.subr.bf16.mxu0 0
        %1881 = vmatpush1.bf16.msra.mxu0 %v1873
        %1882 = vmatprep.subr.bf16.mxu0 0
        %1883 = vmatpush1.bf16.msra.mxu0 %v1874
        %1884 = vmatprep.subr.bf16.mxu0 0
        %1885 = vmatpush1.bf16.msra.mxu0 0
        %1886 = vmatprep.subr.bf16.mxu0 0
        %1887 = vmatpush1.bf16.msra.mxu0 0
        %1888 = vmatprep.subr.bf16.mxu0 0
        %1889 = vmatpush1.bf16.msra.mxu0 0
        %1890 = vmatprep.subr.bf16.mxu0 0
        %1891 = vmatpush1.bf16.msra.mxu0 0
        %1892 = vmatprep.subr.bf16.mxu0 0
        %1893 = vmatpush1.bf16.msra.mxu0 0
        %1894 = vmatprep.subr.bf16.mxu0 0
        %1895 = vmatpush1.bf16.msra.mxu0 0
        %1896 = vmatprep.subr.bf16.mxu0 0
        %1897 = vmatpush1.bf16.msra.mxu0 0
        %1898 = vmatprep.subr.bf16.mxu0 0
        %1899 = vmatpush1.bf16.msra.mxu0 0
        %1900 = vmatprep.subr.bf16.mxu0 0
        %1901 = vmatpush1.bf16.msra.mxu0 0
        %1902 = vmatprep.subr.bf16.mxu0 0
        %1903 = vmatpush1.bf16.msra.mxu0 0
        %1904 = vmatprep.subr.bf16.mxu0 0
        %1905 = vmatpush1.bf16.msra.mxu0 0
        %1906 = vmatprep.subr.bf16.mxu0 0
        %1907 = vmatpush1.bf16.msra.mxu0 0
        %1908 = vmatprep.subr.bf16.mxu0 0
        %1909 = vmatpush1.bf16.msra.mxu0 0
        %1910 = vmatprep.subr.bf16.mxu0 0
        %1911 = vmatpush1.bf16.msra.mxu0 0
        %1912 = vmatprep.mubr.bf16.mxu0 0
        %1913 = vmatmul.mubr.bf16.gmra.mrb[0].mxu0 %v1878
        %v1914 = vpop.f32.mrb[0].mxu0
        %v1915 = vadd.f32 %v1857, %v1914
        %v1916 = vpop.f32.mrb[0].mxu0
        %v1917 = vpop.f32.mrb[0].mxu0
        %v1918 = vpop.f32.mrb[0].mxu0
        %1919 = vdwg.mxu0
        %v1922 = vunpack.c.l.b16 %v995
        %v1923 = vunpack.c.l.b16 %v996
        %v1924 = vpack.c.b16 %v1923, %v1922
        %1926 = vmatprep.subr.bf16.mxu0 0
        %1927 = vmatpush1.bf16.msra.mxu0 %v1924
        %1928 = vmatprep.subr.bf16.mxu0 0
        %1929 = vmatpush1.bf16.msra.mxu0 0
        %1930 = vmatprep.subr.bf16.mxu0 0
        %1931 = vmatpush1.bf16.msra.mxu0 0
        %1932 = vmatprep.subr.bf16.mxu0 0
        %1933 = vmatpush1.bf16.msra.mxu0 0
        %1934 = vmatprep.subr.bf16.mxu0 0
        %1935 = vmatpush1.bf16.msra.mxu0 0
        %1936 = vmatprep.subr.bf16.mxu0 0
        %1937 = vmatpush1.bf16.msra.mxu0 0
        %1938 = vmatprep.subr.bf16.mxu0 0
        %1939 = vmatpush1.bf16.msra.mxu0 0
        %1940 = vmatprep.subr.bf16.mxu0 0
        %1941 = vmatpush1.bf16.msra.mxu0 0
        %1942 = vmatprep.subr.bf16.mxu0 0
        %1943 = vmatpush1.bf16.msra.mxu0 0
        %1944 = vmatprep.subr.bf16.mxu0 0
        %1945 = vmatpush1.bf16.msra.mxu0 0
        %1946 = vmatprep.subr.bf16.mxu0 0
        %1947 = vmatpush1.bf16.msra.mxu0 0
        %1948 = vmatprep.subr.bf16.mxu0 0
        %1949 = vmatpush1.bf16.msra.mxu0 0
        %1950 = vmatprep.subr.bf16.mxu0 0
        %1951 = vmatpush1.bf16.msra.mxu0 0
        %1952 = vmatprep.subr.bf16.mxu0 0
        %1953 = vmatpush1.bf16.msra.mxu0 0
        %1954 = vmatprep.subr.bf16.mxu0 0
        %1955 = vmatpush1.bf16.msra.mxu0 0
        %1956 = vmatprep.subr.bf16.mxu0 0
        %1957 = vmatpush1.bf16.msra.mxu0 0
        %1958 = vmatprep.mubr.bf16.mxu0 0
        %1959 = vmatmul.mubr.bf16.gmra.mrb[0].mxu0 %v1684
        %v1960 = vpop.f32.mrb[0].mxu0
        %v1961 = vadd.f32 0.0, %v1960
        %v1962 = vpop.f32.mrb[0].mxu0
        %v1963 = vpop.f32.mrb[0].mxu0
        %v1964 = vpop.f32.mrb[0].mxu0
        %1965 = vdwg.mxu0
        %v1966 = vadd.f32 %v1915, %v1961
        %v1967 = vadd.f32 %v1966, %v971
        %1968 = vst [vmem:[%s780] sm:$0xff] %v1967
        %s1969 = scalar_lea.vmem %s672, 4 [#allocation2]
        %v1970 = vld [vmem:[%s1969] sm:$0xf]
        %1971 = vmatprep.subr.bf16.mxu0 0
        %1972 = vmatpush1.bf16.msra.mxu0 %v1008
        %1973 = vmatprep.subr.bf16.mxu0 0
        %1974 = vmatpush1.bf16.msra.mxu0 %v1009
        %1975 = vmatprep.subr.bf16.mxu0 0
        %1976 = vmatpush1.bf16.msra.mxu0 0
        %1977 = vmatprep.subr.bf16.mxu0 0
        %1978 = vmatpush1.bf16.msra.mxu0 0
        %1979 = vmatprep.subr.bf16.mxu0 0
        %1980 = vmatpush1.bf16.msra.mxu0 0
        %1981 = vmatprep.subr.bf16.mxu0 0
        %1982 = vmatpush1.bf16.msra.mxu0 0
        %1983 = vmatprep.subr.bf16.mxu0 0
        %1984 = vmatpush1.bf16.msra.mxu0 0
        %1985 = vmatprep.subr.bf16.mxu0 0
        %1986 = vmatpush1.bf16.msra.mxu0 0
        %1987 = vmatprep.subr.bf16.mxu0 0
        %1988 = vmatpush1.bf16.msra.mxu0 0
        %1989 = vmatprep.subr.bf16.mxu0 0
        %1990 = vmatpush1.bf16.msra.mxu0 0
        %1991 = vmatprep.subr.bf16.mxu0 0
        %1992 = vmatpush1.bf16.msra.mxu0 0
        %1993 = vmatprep.subr.bf16.mxu0 0
        %1994 = vmatpush1.bf16.msra.mxu0 0
        %1995 = vmatprep.subr.bf16.mxu0 0
        %1996 = vmatpush1.bf16.msra.mxu0 0
        %1997 = vmatprep.subr.bf16.mxu0 0
        %1998 = vmatpush1.bf16.msra.mxu0 0
        %1999 = vmatprep.subr.bf16.mxu0 0
        %2000 = vmatpush1.bf16.msra.mxu0 0
        %2001 = vmatprep.subr.bf16.mxu0 0
        %2002 = vmatpush1.bf16.msra.mxu0 0
        %2003 = vmatprep.mubr.bf16.mxu0 0
        %2004 = vmatmul.mubr.bf16.gmra.mrb[0].mxu0 %v1878
        %v2005 = vpop.f32.mrb[0].mxu0
        %v2006 = vadd.f32 0.0, %v2005
        %v2007 = vpop.f32.mrb[0].mxu0
        %v2008 = vpop.f32.mrb[0].mxu0
        %v2009 = vpop.f32.mrb[0].mxu0
        %2010 = vdwg.mxu0
        %v2012 = vcombine.high %v2006, %v2006
        %v2014 = vunpack.c.l.s4 1966171168
        %v2015 = vunpack.c.0.s8 %v2014
        %v2016 = vlaneseq
        %v2017 = vshrl.u32 %v2016, 7
        %v2018 = vsub.s32 %v2015, %v2017
        %v2019 = vrot.slane %v2006, %v2018
        %v2021 = vunpack.c.l.s4 1966171168
        %v2022 = vunpack.c.0.s8 %v2021
        %v2023 = vlaneseq
        %v2024 = vshrl.u32 %v2023, 7
        %v2025 = vsub.s32 %v2022, %v2024
        %v2026 = vrot.slane %v2012, %v2025
        %v2027 = vcombine.high %v2019, %v2019
        %v2028 = vcombine.high %v2026, %v2026
        %v2030 = vunpack.c.l.s4 1966171168
        %v2031 = vunpack.c.0.s8 %v2030
        %v2032 = vlaneseq
        %v2033 = vshrl.u32 %v2032, 7
        %v2034 = vsub.s32 %v2031, %v2033
        %v2035 = vrot.slane %v2019, %v2034
        %v2037 = vunpack.c.l.s4 1966171168
        %v2038 = vunpack.c.0.s8 %v2037
        %v2039 = vlaneseq
        %v2040 = vshrl.u32 %v2039, 7
        %v2041 = vsub.s32 %v2038, %v2040
        %v2042 = vrot.slane %v2026, %v2041
        %v2044 = vunpack.c.l.s4 1966171168
        %v2045 = vunpack.c.0.s8 %v2044
        %v2046 = vlaneseq
        %v2047 = vshrl.u32 %v2046, 7
        %v2048 = vsub.s32 %v2045, %v2047
        %v2049 = vrot.slane %v2027, %v2048
        %v2051 = vunpack.c.l.s4 1966171168
        %v2052 = vunpack.c.0.s8 %v2051
        %v2053 = vlaneseq
        %v2054 = vshrl.u32 %v2053, 7
        %v2055 = vsub.s32 %v2052, %v2054
        %v2056 = vrot.slane %v2028, %v2055
        %v2057 = vcombine.high %v2035, %v2035
        %v2058 = vcombine.high %v2042, %v2042
        %v2059 = vcombine.high %v2049, %v2049
        %v2060 = vcombine.high %v2056, %v2056
        %v2061 = vlaneseq
        %v2062 = vshrl.u32 %v2061, 7
        %v2063 = vsub.s32 0, %v2062
        %v2064 = vrot.slane %v2035, %v2063
        %v2065 = vlaneseq
        %v2066 = vshrl.u32 %v2065, 7
        %v2067 = vsub.s32 0, %v2066
        %v2068 = vrot.slane %v2049, %v2067
        %v2069 = vlaneseq
        %v2070 = vshrl.u32 %v2069, 7
        %v2071 = vsub.s32 0, %v2070
        %v2072 = vrot.slane %v2057, %v2071
        %v2073 = vlaneseq
        %v2074 = vshrl.u32 %v2073, 7
        %v2075 = vsub.s32 0, %v2074
        %v2076 = vrot.slane %v2059, %v2075
        %v2077 = vlaneseq
        %v2078 = vshrl.u32 %v2077, 7
        %v2079 = vsub.s32 0, %v2078
        %v2080 = vrot.slane %v2042, %v2079
        %v2081 = vlaneseq
        %v2082 = vshrl.u32 %v2081, 7
        %v2083 = vsub.s32 0, %v2082
        %v2084 = vrot.slane %v2056, %v2083
        %v2085 = vlaneseq
        %v2086 = vshrl.u32 %v2085, 7
        %v2087 = vsub.s32 0, %v2086
        %v2088 = vrot.slane %v2058, %v2087
        %v2089 = vlaneseq
        %v2090 = vshrl.u32 %v2089, 7
        %v2091 = vsub.s32 0, %v2090
        %v2092 = vrot.slane %v2060, %v2091
        %v2101 = vadd.f32 %v907, %v2064
        %v2102 = vadd.f32 %v912, %v2068
        %v2103 = vadd.f32 %v917, %v2072
        %v2104 = vadd.f32 %v922, %v2076
        %v2105 = vadd.f32 %v927, %v2080
        %v2106 = vadd.f32 %v932, %v2084
        %v2107 = vadd.f32 %v937, %v2088
        %v2108 = vadd.f32 %v942, %v2092
        %v2109 = vtanh.pop %v2101
        %v2110 = vtanh.pop %v2102
        %v2111 = vtanh.pop %v2103
        %v2112 = vtanh.pop %v2104
        %v2113 = vtanh.pop %v2105
        %v2114 = vtanh.pop %v2106
        %v2115 = vtanh.pop %v2107
        %v2116 = vtanh.pop %v2108
        %v2117 = vmul.f32 %v2109, %v950
        %v2118 = vmul.f32 %v2110, %v950
        %v2119 = vmul.f32 %v2111, %v950
        %v2120 = vmul.f32 %v2112, %v950
        %v2121 = vmul.f32 %v2113, %v950
        %v2122 = vmul.f32 %v2114, %v950
        %v2123 = vmul.f32 %v2115, %v950
        %v2124 = vmul.f32 %v2116, %v950
        %v2125 = vsel %vm815, %v2117, 0.0
        %2126 = vadd.xlane.f32.xlu0 %v2125
        %v2127 = vpop.xlane.xlu0 %2126
        %v2128 = vsel %vm815, %v2118, 0.0
        %2129 = vadd.xlane.f32.xlu0 %v2128
        %v2130 = vpop.xlane.xlu0 %2129
        %v2131 = vsel %vm815, %v2119, 0.0
        %2132 = vadd.xlane.f32.xlu0 %v2131
        %v2133 = vpop.xlane.xlu0 %2132
        %v2134 = vsel %vm815, %v2120, 0.0
        %2135 = vadd.xlane.f32.xlu0 %v2134
        %v2136 = vpop.xlane.xlu0 %2135
        %v2137 = vsel %vm815, %v2121, 0.0
        %2138 = vadd.xlane.f32.xlu0 %v2137
        %v2139 = vpop.xlane.xlu0 %2138
        %v2140 = vsel %vm815, %v2122, 0.0
        %2141 = vadd.xlane.f32.xlu0 %v2140
        %v2142 = vpop.xlane.xlu0 %2141
        %v2143 = vsel %vm815, %v2123, 0.0
        %2144 = vadd.xlane.f32.xlu0 %v2143
        %v2145 = vpop.xlane.xlu0 %2144
        %v2146 = vsel %vm815, %v2124, 0.0
        %2147 = vadd.xlane.f32.xlu0 %v2146
        %v2148 = vpop.xlane.xlu0 %2147
        %v2157 = vlaneseq
        %v2158 = vshrl.u32 %v2157, 7
        %v2159 = vsub.s32 %v1202, %v2158
        %v2160 = vrot.slane %v2127, %v2159
        %v2161 = vlaneseq
        %v2162 = vshrl.u32 %v2161, 7
        %v2163 = vsub.s32 %v1202, %v2162
        %v2164 = vrot.slane %v2130, %v2163
        %v2165 = vlaneseq
        %v2166 = vshrl.u32 %v2165, 7
        %v2167 = vsub.s32 %v1202, %v2166
        %v2168 = vrot.slane %v2133, %v2167
        %v2169 = vlaneseq
        %v2170 = vshrl.u32 %v2169, 7
        %v2171 = vsub.s32 %v1202, %v2170
        %v2172 = vrot.slane %v2136, %v2171
        %v2173 = vlaneseq
        %v2174 = vshrl.u32 %v2173, 7
        %v2175 = vsub.s32 %v1202, %v2174
        %v2176 = vrot.slane %v2139, %v2175
        %v2177 = vlaneseq
        %v2178 = vshrl.u32 %v2177, 7
        %v2179 = vsub.s32 %v1202, %v2178
        %v2180 = vrot.slane %v2142, %v2179
        %v2181 = vlaneseq
        %v2182 = vshrl.u32 %v2181, 7
        %v2183 = vsub.s32 %v1202, %v2182
        %v2184 = vrot.slane %v2145, %v2183
        %v2185 = vlaneseq
        %v2186 = vshrl.u32 %v2185, 7
        %v2187 = vsub.s32 %v1202, %v2186
        %v2188 = vrot.slane %v2148, %v2187
        %v2189 = vsel %vm1235, %v2164, %v2160
        %v2190 = vsel %vm1237, %v2168, %v2189
        %v2191 = vsel %vm1239, %v2172, %v2190
        %v2192 = vsel %vm1241, %v2176, %v2191
        %v2193 = vsel %vm1243, %v2180, %v2192
        %v2194 = vsel %vm1245, %v2184, %v2193
        %v2195 = vsel %vm1247, %v2188, %v2194
        %v2197 = vsel %vm1250, %v2195, -inf
        %2198 = vmax.xlane.f32.xlu0 %v2197
        %v2199 = vpop.xlane.xlu0 %2198
        %v2201 = vlaneseq
        %v2202 = vshrl.u32 %v2201, 7
        %v2203 = vsub.s32 0, %v2202
        %v2204 = vrot.slane %v2199, %v2203
        %v2205 = vlaneseq
        %v2206 = vshrl.u32 %v2205, 7
        %v2207 = vsub.s32 1, %v2206
        %v2208 = vrot.slane %v2199, %v2207
        %v2209 = vlaneseq
        %v2210 = vshrl.u32 %v2209, 7
        %v2211 = vsub.s32 2, %v2210
        %v2212 = vrot.slane %v2199, %v2211
        %v2213 = vlaneseq
        %v2214 = vshrl.u32 %v2213, 7
        %v2215 = vsub.s32 3, %v2214
        %v2216 = vrot.slane %v2199, %v2215
        %v2217 = vlaneseq
        %v2218 = vshrl.u32 %v2217, 7
        %v2219 = vsub.s32 4, %v2218
        %v2220 = vrot.slane %v2199, %v2219
        %v2221 = vlaneseq
        %v2222 = vshrl.u32 %v2221, 7
        %v2223 = vsub.s32 5, %v2222
        %v2224 = vrot.slane %v2199, %v2223
        %v2225 = vlaneseq
        %v2226 = vshrl.u32 %v2225, 7
        %v2227 = vsub.s32 6, %v2226
        %v2228 = vrot.slane %v2199, %v2227
        %v2229 = vlaneseq
        %v2230 = vshrl.u32 %v2229, 7
        %v2231 = vsub.s32 7, %v2230
        %v2232 = vrot.slane %v2199, %v2231
        %v2241 = vsub.f32 %v2127, %v2204
        %v2242 = vsub.f32 %v2130, %v2208
        %v2243 = vsub.f32 %v2133, %v2212
        %v2244 = vsub.f32 %v2136, %v2216
        %v2245 = vsub.f32 %v2139, %v2220
        %v2246 = vsub.f32 %v2142, %v2224
        %v2247 = vsub.f32 %v2145, %v2228
        %v2248 = vsub.f32 %v2148, %v2232
        %v2249 = vmul.f32 %v2241, 1.442695
        %v2250 = vpow.pop %v2249
        %v2251 = vmul.f32 %v2242, 1.442695
        %v2252 = vpow.pop %v2251
        %v2253 = vmul.f32 %v2243, 1.442695
        %v2254 = vpow.pop %v2253
        %v2255 = vmul.f32 %v2244, 1.442695
        %v2256 = vpow.pop %v2255
        %v2257 = vmul.f32 %v2245, 1.442695
        %v2258 = vpow.pop %v2257
        %v2259 = vmul.f32 %v2246, 1.442695
        %v2260 = vpow.pop %v2259
        %v2261 = vmul.f32 %v2247, 1.442695
        %v2262 = vpow.pop %v2261
        %v2263 = vmul.f32 %v2248, 1.442695
        %v2264 = vpow.pop %v2263
        %2273 = vset.pattern.permute.xlu0 0
        %2274 = vperm.xlu0 %2273, %v2250
        %v2275 = vpop.permute.xlu0 %2274
        %2276 = vset.pattern.permute.xlu0 0
        %2277 = vperm.xlu0 %2276, %v2252
        %v2278 = vpop.permute.xlu0 %2277
        %2279 = vset.pattern.permute.xlu0 0
        %2280 = vperm.xlu0 %2279, %v2254
        %v2281 = vpop.permute.xlu0 %2280
        %2282 = vset.pattern.permute.xlu0 0
        %2283 = vperm.xlu0 %2282, %v2256
        %v2284 = vpop.permute.xlu0 %2283
        %2285 = vset.pattern.permute.xlu0 0
        %2286 = vperm.xlu0 %2285, %v2258
        %v2287 = vpop.permute.xlu0 %2286
        %2288 = vset.pattern.permute.xlu0 0
        %2289 = vperm.xlu0 %2288, %v2260
        %v2290 = vpop.permute.xlu0 %2289
        %2291 = vset.pattern.permute.xlu0 0
        %2292 = vperm.xlu0 %2291, %v2262
        %v2293 = vpop.permute.xlu0 %2292
        %2294 = vset.pattern.permute.xlu0 0
        %2295 = vperm.xlu0 %2294, %v2264
        %v2296 = vpop.permute.xlu0 %2295
        %v2297 = vlaneseq
        %v2298 = vshrl.u32 %v2297, 7
        %v2299 = vsub.s32 %v1202, %v2298
        %v2300 = vrot.slane %v2275, %v2299
        %v2301 = vlaneseq
        %v2302 = vshrl.u32 %v2301, 7
        %v2303 = vsub.s32 %v1202, %v2302
        %v2304 = vrot.slane %v2278, %v2303
        %v2305 = vlaneseq
        %v2306 = vshrl.u32 %v2305, 7
        %v2307 = vsub.s32 %v1202, %v2306
        %v2308 = vrot.slane %v2281, %v2307
        %v2309 = vlaneseq
        %v2310 = vshrl.u32 %v2309, 7
        %v2311 = vsub.s32 %v1202, %v2310
        %v2312 = vrot.slane %v2284, %v2311
        %v2313 = vlaneseq
        %v2314 = vshrl.u32 %v2313, 7
        %v2315 = vsub.s32 %v1202, %v2314
        %v2316 = vrot.slane %v2287, %v2315
        %v2317 = vlaneseq
        %v2318 = vshrl.u32 %v2317, 7
        %v2319 = vsub.s32 %v1202, %v2318
        %v2320 = vrot.slane %v2290, %v2319
        %v2321 = vlaneseq
        %v2322 = vshrl.u32 %v2321, 7
        %v2323 = vsub.s32 %v1202, %v2322
        %v2324 = vrot.slane %v2293, %v2323
        %v2325 = vlaneseq
        %v2326 = vshrl.u32 %v2325, 7
        %v2327 = vsub.s32 %v1202, %v2326
        %v2328 = vrot.slane %v2296, %v2327
        %v2329 = vsel %vm1235, %v2304, %v2300
        %v2330 = vsel %vm1237, %v2308, %v2329
        %v2331 = vsel %vm1239, %v2312, %v2330
        %v2332 = vsel %vm1241, %v2316, %v2331
        %v2333 = vsel %vm1243, %v2320, %v2332
        %v2334 = vsel %vm1245, %v2324, %v2333
        %v2335 = vsel %vm1247, %v2328, %v2334
        %v2337 = vsel %vm1250, %v2335, 0.0
        %2338 = vadd.xlane.f32.xlu0 %v2337
        %v2339 = vpop.xlane.xlu0 %2338
        %v2340 = vrcp.pop %v2339
        %v2342 = vlaneseq
        %v2343 = vshrl.u32 %v2342, 7
        %v2344 = vsub.s32 0, %v2343
        %v2345 = vrot.slane %v2340, %v2344
        %v2346 = vlaneseq
        %v2347 = vshrl.u32 %v2346, 7
        %v2348 = vsub.s32 1, %v2347
        %v2349 = vrot.slane %v2340, %v2348
        %v2350 = vlaneseq
        %v2351 = vshrl.u32 %v2350, 7
        %v2352 = vsub.s32 2, %v2351
        %v2353 = vrot.slane %v2340, %v2352
        %v2354 = vlaneseq
        %v2355 = vshrl.u32 %v2354, 7
        %v2356 = vsub.s32 3, %v2355
        %v2357 = vrot.slane %v2340, %v2356
        %v2358 = vlaneseq
        %v2359 = vshrl.u32 %v2358, 7
        %v2360 = vsub.s32 4, %v2359
        %v2361 = vrot.slane %v2340, %v2360
        %v2362 = vlaneseq
        %v2363 = vshrl.u32 %v2362, 7
        %v2364 = vsub.s32 5, %v2363
        %v2365 = vrot.slane %v2340, %v2364
        %v2366 = vlaneseq
        %v2367 = vshrl.u32 %v2366, 7
        %v2368 = vsub.s32 6, %v2367
        %v2369 = vrot.slane %v2340, %v2368
        %v2370 = vlaneseq
        %v2371 = vshrl.u32 %v2370, 7
        %v2372 = vsub.s32 7, %v2371
        %v2373 = vrot.slane %v2340, %v2372
        %v2382 = vmul.f32 %v2250, %v2345
        %v2383 = vmul.f32 %v2252, %v2349
        %v2384 = vmul.f32 %v2254, %v2353
        %v2385 = vmul.f32 %v2256, %v2357
        %v2386 = vmul.f32 %v2258, %v2361
        %v2387 = vmul.f32 %v2260, %v2365
        %v2388 = vmul.f32 %v2262, %v2369
        %v2389 = vmul.f32 %v2264, %v2373
        %2398 = vset.pattern.permute.xlu0 0
        %2399 = vperm.xlu0 %2398, %v2382
        %v2400 = vpop.permute.xlu0 %2399
        %2401 = vset.pattern.permute.xlu0 0
        %2402 = vperm.xlu0 %2401, %v2383
        %v2403 = vpop.permute.xlu0 %2402
        %2404 = vset.pattern.permute.xlu0 0
        %2405 = vperm.xlu0 %2404, %v2384
        %v2406 = vpop.permute.xlu0 %2405
        %2407 = vset.pattern.permute.xlu0 0
        %2408 = vperm.xlu0 %2407, %v2385
        %v2409 = vpop.permute.xlu0 %2408
        %2410 = vset.pattern.permute.xlu0 0
        %2411 = vperm.xlu0 %2410, %v2386
        %v2412 = vpop.permute.xlu0 %2411
        %2413 = vset.pattern.permute.xlu0 0
        %2414 = vperm.xlu0 %2413, %v2387
        %v2415 = vpop.permute.xlu0 %2414
        %2416 = vset.pattern.permute.xlu0 0
        %2417 = vperm.xlu0 %2416, %v2388
        %v2418 = vpop.permute.xlu0 %2417
        %2419 = vset.pattern.permute.xlu0 0
        %2420 = vperm.xlu0 %2419, %v2389
        %v2421 = vpop.permute.xlu0 %2420
        %v2422 = vlaneseq
        %v2423 = vshrl.u32 %v2422, 7
        %v2424 = vsub.s32 %v1202, %v2423
        %v2425 = vrot.slane %v2400, %v2424
        %v2426 = vlaneseq
        %v2427 = vshrl.u32 %v2426, 7
        %v2428 = vsub.s32 %v1202, %v2427
        %v2429 = vrot.slane %v2403, %v2428
        %v2430 = vlaneseq
        %v2431 = vshrl.u32 %v2430, 7
        %v2432 = vsub.s32 %v1202, %v2431
        %v2433 = vrot.slane %v2406, %v2432
        %v2434 = vlaneseq
        %v2435 = vshrl.u32 %v2434, 7
        %v2436 = vsub.s32 %v1202, %v2435
        %v2437 = vrot.slane %v2409, %v2436
        %v2438 = vlaneseq
        %v2439 = vshrl.u32 %v2438, 7
        %v2440 = vsub.s32 %v1202, %v2439
        %v2441 = vrot.slane %v2412, %v2440
        %v2442 = vlaneseq
        %v2443 = vshrl.u32 %v2442, 7
        %v2444 = vsub.s32 %v1202, %v2443
        %v2445 = vrot.slane %v2415, %v2444
        %v2446 = vlaneseq
        %v2447 = vshrl.u32 %v2446, 7
        %v2448 = vsub.s32 %v1202, %v2447
        %v2449 = vrot.slane %v2418, %v2448
        %v2450 = vlaneseq
        %v2451 = vshrl.u32 %v2450, 7
        %v2452 = vsub.s32 %v1202, %v2451
        %v2453 = vrot.slane %v2421, %v2452
        %v2454 = vsel %vm1235, %v2429, %v2425
        %v2455 = vsel %vm1237, %v2433, %v2454
        %v2456 = vsel %vm1239, %v2437, %v2455
        %v2457 = vsel %vm1241, %v2441, %v2456
        %v2458 = vsel %vm1243, %v2445, %v2457
        %v2459 = vsel %vm1245, %v2449, %v2458
        %v2460 = vsel %vm1247, %v2453, %v2459
        %s2462 = scalar_lea.vmem %s793, 8 [#allocation23]
        %2463 = vst.msk [vmem:[%s2462] sm:$0xff] %vm1250, %v2460
        %v2472 = vmul.f32 %v2400, %v796
        %v2473 = vmul.f32 %v2403, %v797
        %v2474 = vmul.f32 %v2406, %v798
        %v2475 = vmul.f32 %v2409, %v799
        %v2476 = vmul.f32 %v2412, %v800
        %v2477 = vmul.f32 %v2415, %v801
        %v2478 = vmul.f32 %v2418, %v802
        %v2479 = vmul.f32 %v2421, %v803
        %v2480 = vsel %vm815, %v2472, 0.0
        %v2481 = vrot.slane %v2480, 4
        %v2482 = vadd.f32 %v2480, %v2481
        %v2483 = vrot.slane %v2482, 2
        %v2484 = vadd.f32 %v2482, %v2483
        %v2485 = vrot.slane %v2484, 1
        %v2486 = vadd.f32 %v2484, %v2485
        %v2487 = vsel %vm815, %v2473, 0.0
        %v2488 = vrot.slane %v2487, 4
        %v2489 = vadd.f32 %v2487, %v2488
        %v2490 = vrot.slane %v2489, 2
        %v2491 = vadd.f32 %v2489, %v2490
        %v2492 = vrot.slane %v2491, 1
        %v2493 = vadd.f32 %v2491, %v2492
        %v2494 = vsel %vm815, %v2474, 0.0
        %v2495 = vrot.slane %v2494, 4
        %v2496 = vadd.f32 %v2494, %v2495
        %v2497 = vrot.slane %v2496, 2
        %v2498 = vadd.f32 %v2496, %v2497
        %v2499 = vrot.slane %v2498, 1
        %v2500 = vadd.f32 %v2498, %v2499
        %v2501 = vsel %vm815, %v2475, 0.0
        %v2502 = vrot.slane %v2501, 4
        %v2503 = vadd.f32 %v2501, %v2502
        %v2504 = vrot.slane %v2503, 2
        %v2505 = vadd.f32 %v2503, %v2504
        %v2506 = vrot.slane %v2505, 1
        %v2507 = vadd.f32 %v2505, %v2506
        %v2508 = vsel %vm815, %v2476, 0.0
        %v2509 = vrot.slane %v2508, 4
        %v2510 = vadd.f32 %v2508, %v2509
        %v2511 = vrot.slane %v2510, 2
        %v2512 = vadd.f32 %v2510, %v2511
        %v2513 = vrot.slane %v2512, 1
        %v2514 = vadd.f32 %v2512, %v2513
        %v2515 = vsel %vm815, %v2477, 0.0
        %v2516 = vrot.slane %v2515, 4
        %v2517 = vadd.f32 %v2515, %v2516
        %v2518 = vrot.slane %v2517, 2
        %v2519 = vadd.f32 %v2517, %v2518
        %v2520 = vrot.slane %v2519, 1
        %v2521 = vadd.f32 %v2519, %v2520
        %v2522 = vsel %vm815, %v2478, 0.0
        %v2523 = vrot.slane %v2522, 4
        %v2524 = vadd.f32 %v2522, %v2523
        %v2525 = vrot.slane %v2524, 2
        %v2526 = vadd.f32 %v2524, %v2525
        %v2527 = vrot.slane %v2526, 1
        %v2528 = vadd.f32 %v2526, %v2527
        %v2529 = vsel %vm815, %v2479, 0.0
        %v2530 = vrot.slane %v2529, 4
        %v2531 = vadd.f32 %v2529, %v2530
        %v2532 = vrot.slane %v2531, 2
        %v2533 = vadd.f32 %v2531, %v2532
        %v2534 = vrot.slane %v2533, 1
        %v2535 = vadd.f32 %v2533, %v2534
        %v2536 = vpack.c.bf16 %v2486, %v2486
        %v2537 = vpack.c.bf16 %v2493, %v2493
        %v2538 = vpack.c.bf16 %v2500, %v2500
        %v2539 = vpack.c.bf16 %v2507, %v2507
        %v2540 = vpack.c.bf16 %v2514, %v2514
        %v2541 = vpack.c.bf16 %v2521, %v2521
        %v2542 = vpack.c.bf16 %v2528, %v2528
        %v2543 = vpack.c.bf16 %v2535, %v2535
        %v2552 = vunpack.c.l.b16 %v2536
        %v2553 = vunpack.c.l.b16 %v2537
        %v2554 = vunpack.c.l.b16 %v2538
        %v2555 = vunpack.c.l.b16 %v2539
        %v2556 = vunpack.c.l.b16 %v2540
        %v2557 = vunpack.c.l.b16 %v2541
        %v2558 = vunpack.c.l.b16 %v2542
        %v2559 = vunpack.c.l.b16 %v2543
        %v2560 = vsel %vm1235, %v2553, %v2552
        %v2561 = vsel %vm1237, %v2554, %v2560
        %v2562 = vsel %vm1239, %v2555, %v2561
        %v2563 = vsel %vm1241, %v2556, %v2562
        %v2564 = vsel %vm1243, %v2557, %v2563
        %v2565 = vsel %vm1245, %v2558, %v2564
        %v2566 = vsel %vm1247, %v2559, %v2565
        %v2567 = vpack.c.b16 %v2566, %v2566
        %v2569 = vsel %vm815, %v2567, 0
        %2571 = vmatprep.subr.bf16.mxu0 0
        %2572 = vmatpush1.bf16.msra.mxu0 %v1629
        %2573 = vmatprep.subr.bf16.mxu0 0
        %2574 = vmatpush1.bf16.msra.mxu0 %v1630
        %2575 = vmatprep.subr.bf16.mxu0 0
        %2576 = vmatpush1.bf16.msra.mxu0 0
        %2577 = vmatprep.subr.bf16.mxu0 0
        %2578 = vmatpush1.bf16.msra.mxu0 0
        %2579 = vmatprep.subr.bf16.mxu0 0
        %2580 = vmatpush1.bf16.msra.mxu0 0
        %2581 = vmatprep.subr.bf16.mxu0 0
        %2582 = vmatpush1.bf16.msra.mxu0 0
        %2583 = vmatprep.subr.bf16.mxu0 0
        %2584 = vmatpush1.bf16.msra.mxu0 0
        %2585 = vmatprep.subr.bf16.mxu0 0
        %2586 = vmatpush1.bf16.msra.mxu0 0
        %2587 = vmatprep.subr.bf16.mxu0 0
        %2588 = vmatpush1.bf16.msra.mxu0 0
        %2589 = vmatprep.subr.bf16.mxu0 0
        %2590 = vmatpush1.bf16.msra.mxu0 0
        %2591 = vmatprep.subr.bf16.mxu0 0
        %2592 = vmatpush1.bf16.msra.mxu0 0
        %2593 = vmatprep.subr.bf16.mxu0 0
        %2594 = vmatpush1.bf16.msra.mxu0 0
        %2595 = vmatprep.subr.bf16.mxu0 0
        %2596 = vmatpush1.bf16.msra.mxu0 0
        %2597 = vmatprep.subr.bf16.mxu0 0
        %2598 = vmatpush1.bf16.msra.mxu0 0
        %2599 = vmatprep.subr.bf16.mxu0 0
        %2600 = vmatpush1.bf16.msra.mxu0 0
        %2601 = vmatprep.subr.bf16.mxu0 0
        %2602 = vmatpush1.bf16.msra.mxu0 0
        %2603 = vmatprep.mubr.bf16.mxu0 0
        %2604 = vmatmul.mubr.bf16.gmra.mrb[0].mxu0 %v2569
        %v2605 = vpop.f32.mrb[0].mxu0
        %v2606 = vadd.f32 0.0, %v2605
        %v2607 = vpop.f32.mrb[0].mxu0
        %v2608 = vpop.f32.mrb[0].mxu0
        %v2609 = vpop.f32.mrb[0].mxu0
        %2610 = vdwg.mxu0
        %v2612 = vsel %vm1682, %v1970, 0
        %2614 = vmatprep.subr.bf16.mxu0 0
        %2615 = vmatpush1.bf16.msra.mxu0 %v1680
        %2616 = vmatprep.subr.bf16.mxu0 0
        %2617 = vmatpush1.bf16.msra.mxu0 0
        %2618 = vmatprep.subr.bf16.mxu0 0
        %2619 = vmatpush1.bf16.msra.mxu0 0
        %2620 = vmatprep.subr.bf16.mxu0 0
        %2621 = vmatpush1.bf16.msra.mxu0 0
        %2622 = vmatprep.subr.bf16.mxu0 0
        %2623 = vmatpush1.bf16.msra.mxu0 0
        %2624 = vmatprep.subr.bf16.mxu0 0
        %2625 = vmatpush1.bf16.msra.mxu0 0
        %2626 = vmatprep.subr.bf16.mxu0 0
        %2627 = vmatpush1.bf16.msra.mxu0 0
        %2628 = vmatprep.subr.bf16.mxu0 0
        %2629 = vmatpush1.bf16.msra.mxu0 0
        %2630 = vmatprep.subr.bf16.mxu0 0
        %2631 = vmatpush1.bf16.msra.mxu0 0
        %2632 = vmatprep.subr.bf16.mxu0 0
        %2633 = vmatpush1.bf16.msra.mxu0 0
        %2634 = vmatprep.subr.bf16.mxu0 0
        %2635 = vmatpush1.bf16.msra.mxu0 0
        %2636 = vmatprep.subr.bf16.mxu0 0
        %2637 = vmatpush1.bf16.msra.mxu0 0
        %2638 = vmatprep.subr.bf16.mxu0 0
        %2639 = vmatpush1.bf16.msra.mxu0 0
        %2640 = vmatprep.subr.bf16.mxu0 0
        %2641 = vmatpush1.bf16.msra.mxu0 0
        %2642 = vmatprep.subr.bf16.mxu0 0
        %2643 = vmatpush1.bf16.msra.mxu0 0
        %2644 = vmatprep.subr.bf16.mxu0 0
        %2645 = vmatpush1.bf16.msra.mxu0 0
        %2646 = vmatprep.mubr.bf16.mxu0 0
        %2647 = vmatmul.mubr.bf16.gmra.mrb[0].mxu0 %v2612
        %v2648 = vpop.f32.mrb[0].mxu0
        %v2649 = vadd.f32 %v2606, %v2648
        %v2650 = vpop.f32.mrb[0].mxu0
        %v2651 = vpop.f32.mrb[0].mxu0
        %v2652 = vpop.f32.mrb[0].mxu0
        %2653 = vdwg.mxu0
        %v2654 = vadd.f32 %v2649, %v957
        %2655 = vmatprep.subr.bf16.mxu0 0
        %2656 = vmatpush1.bf16.msra.mxu0 %v1735
        %2657 = vmatprep.subr.bf16.mxu0 0
        %2658 = vmatpush1.bf16.msra.mxu0 %v1736
        %2659 = vmatprep.subr.bf16.mxu0 0
        %2660 = vmatpush1.bf16.msra.mxu0 0
        %2661 = vmatprep.subr.bf16.mxu0 0
        %2662 = vmatpush1.bf16.msra.mxu0 0
        %2663 = vmatprep.subr.bf16.mxu0 0
        %2664 = vmatpush1.bf16.msra.mxu0 0
        %2665 = vmatprep.subr.bf16.mxu0 0
        %2666 = vmatpush1.bf16.msra.mxu0 0
        %2667 = vmatprep.subr.bf16.mxu0 0
        %2668 = vmatpush1.bf16.msra.mxu0 0
        %2669 = vmatprep.subr.bf16.mxu0 0
        %2670 = vmatpush1.bf16.msra.mxu0 0
        %2671 = vmatprep.subr.bf16.mxu0 0
        %2672 = vmatpush1.bf16.msra.mxu0 0
        %2673 = vmatprep.subr.bf16.mxu0 0
        %2674 = vmatpush1.bf16.msra.mxu0 0
        %2675 = vmatprep.subr.bf16.mxu0 0
        %2676 = vmatpush1.bf16.msra.mxu0 0
        %2677 = vmatprep.subr.bf16.mxu0 0
        %2678 = vmatpush1.bf16.msra.mxu0 0
        %2679 = vmatprep.subr.bf16.mxu0 0
        %2680 = vmatpush1.bf16.msra.mxu0 0
        %2681 = vmatprep.subr.bf16.mxu0 0
        %2682 = vmatpush1.bf16.msra.mxu0 0
        %2683 = vmatprep.subr.bf16.mxu0 0
        %2684 = vmatpush1.bf16.msra.mxu0 0
        %2685 = vmatprep.subr.bf16.mxu0 0
        %2686 = vmatpush1.bf16.msra.mxu0 0
        %2687 = vmatprep.mubr.bf16.mxu0 0
        %2688 = vmatmul.mubr.bf16.gmra.mrb[0].mxu0 %v1878
        %v2689 = vpop.f32.mrb[0].mxu0
        %v2690 = vadd.f32 %v964, %v2689
        %v2691 = vpop.f32.mrb[0].mxu0
        %v2692 = vpop.f32.mrb[0].mxu0
        %v2693 = vpop.f32.mrb[0].mxu0
        %2694 = vdwg.mxu0
        %v2695 = vadd.f32 %v2654, %v2690
        %v2696 = vxor.u32 %v2695, 2147483648
        %v2697 = vmul.f32 %v2696, 1.442695
        %v2698 = vpow.pop %v2697
        %v2699 = vadd.f32 %v2698, 1.0
        %v2700 = vrcp.pop %v2699
        %v2701 = vmul.f32 1.0, %v2700
        %2703 = vrot.lane.b32.xlu0 %v2690, 64
        %v2704 = vpop.permute.xlu0 %2703
        %v2706 = vmul.f32 %v2701, %v2704
        %2708 = vrot.lane.b32.xlu0 %v2706, 64
        %v2709 = vpop.permute.xlu0 %2708
        %v2711 = vadd.f32 %v2654, %v2709
        %v2712 = vtanh.pop %v2711
        %v2713 = vsub.f32 1.0, %v2701
        %2715 = vrot.lane.b32.xlu0 %v2712, 96
        %v2716 = vpop.permute.xlu0 %2715
        %v2718 = vmul.f32 %v2713, %v2716
        %v2719 = vmul.f32 %v2701, %v1808
        %v2720 = vadd.f32 %v2718, %v2719
        %v2721 = vpack.c.bf16 %v2720, %v2720
        %2722 = vmatprep.subr.bf16.mxu0 0
        %2723 = vmatpush1.bf16.msra.mxu0 %v1818
        %2724 = vmatprep.subr.bf16.mxu0 0
        %2725 = vmatpush1.bf16.msra.mxu0 %v1819
        %2726 = vmatprep.subr.bf16.mxu0 0
        %2727 = vmatpush1.bf16.msra.mxu0 0
        %2728 = vmatprep.subr.bf16.mxu0 0
        %2729 = vmatpush1.bf16.msra.mxu0 0
        %2730 = vmatprep.subr.bf16.mxu0 0
        %2731 = vmatpush1.bf16.msra.mxu0 0
        %2732 = vmatprep.subr.bf16.mxu0 0
        %2733 = vmatpush1.bf16.msra.mxu0 0
        %2734 = vmatprep.subr.bf16.mxu0 0
        %2735 = vmatpush1.bf16.msra.mxu0 0
        %2736 = vmatprep.subr.bf16.mxu0 0
        %2737 = vmatpush1.bf16.msra.mxu0 0
        %2738 = vmatprep.subr.bf16.mxu0 0
        %2739 = vmatpush1.bf16.msra.mxu0 0
        %2740 = vmatprep.subr.bf16.mxu0 0
        %2741 = vmatpush1.bf16.msra.mxu0 0
        %2742 = vmatprep.subr.bf16.mxu0 0
        %2743 = vmatpush1.bf16.msra.mxu0 0
        %2744 = vmatprep.subr.bf16.mxu0 0
        %2745 = vmatpush1.bf16.msra.mxu0 0
        %2746 = vmatprep.subr.bf16.mxu0 0
        %2747 = vmatpush1.bf16.msra.mxu0 0
        %2748 = vmatprep.subr.bf16.mxu0 0
        %2749 = vmatpush1.bf16.msra.mxu0 0
        %2750 = vmatprep.subr.bf16.mxu0 0
        %2751 = vmatpush1.bf16.msra.mxu0 0
        %2752 = vmatprep.subr.bf16.mxu0 0
        %2753 = vmatpush1.bf16.msra.mxu0 0
        %2754 = vmatprep.mubr.bf16.mxu0 0
        %2755 = vmatmul.mubr.bf16.gmra.mrb[0].mxu0 %v2569
        %v2756 = vpop.f32.mrb[0].mxu0
        %v2757 = vadd.f32 0.0, %v2756
        %v2758 = vpop.f32.mrb[0].mxu0
        %v2759 = vpop.f32.mrb[0].mxu0
        %v2760 = vpop.f32.mrb[0].mxu0
        %2761 = vdwg.mxu0
        %2763 = vrot.lane.b32.xlu0 %v2721, 96
        %v2764 = vpop.permute.xlu0 %2763
        %v2766 = vsel %vm815, %v2764, 0
        %2768 = vmatprep.subr.bf16.mxu0 0
        %2769 = vmatpush1.bf16.msra.mxu0 %v1873
        %2770 = vmatprep.subr.bf16.mxu0 0
        %2771 = vmatpush1.bf16.msra.mxu0 %v1874
        %2772 = vmatprep.subr.bf16.mxu0 0
        %2773 = vmatpush1.bf16.msra.mxu0 0
        %2774 = vmatprep.subr.bf16.mxu0 0
        %2775 = vmatpush1.bf16.msra.mxu0 0
        %2776 = vmatprep.subr.bf16.mxu0 0
        %2777 = vmatpush1.bf16.msra.mxu0 0
        %2778 = vmatprep.subr.bf16.mxu0 0
        %2779 = vmatpush1.bf16.msra.mxu0 0
        %2780 = vmatprep.subr.bf16.mxu0 0
        %2781 = vmatpush1.bf16.msra.mxu0 0
        %2782 = vmatprep.subr.bf16.mxu0 0
        %2783 = vmatpush1.bf16.msra.mxu0 0
        %2784 = vmatprep.subr.bf16.mxu0 0
        %2785 = vmatpush1.bf16.msra.mxu0 0
        %2786 = vmatprep.subr.bf16.mxu0 0
        %2787 = vmatpush1.bf16.msra.mxu0 0
        %2788 = vmatprep.subr.bf16.mxu0 0
        %2789 = vmatpush1.bf16.msra.mxu0 0
        %2790 = vmatprep.subr.bf16.mxu0 0
        %2791 = vmatpush1.bf16.msra.mxu0 0
        %2792 = vmatprep.subr.bf16.mxu0 0
        %2793 = vmatpush1.bf16.msra.mxu0 0
        %2794 = vmatprep.subr.bf16.mxu0 0
        %2795 = vmatpush1.bf16.msra.mxu0 0
        %2796 = vmatprep.subr.bf16.mxu0 0
        %2797 = vmatpush1.bf16.msra.mxu0 0
        %2798 = vmatprep.subr.bf16.mxu0 0
        %2799 = vmatpush1.bf16.msra.mxu0 0
        %2800 = vmatprep.mubr.bf16.mxu0 0
        %2801 = vmatmul.mubr.bf16.gmra.mrb[0].mxu0 %v2766
        %v2802 = vpop.f32.mrb[0].mxu0
        %v2803 = vadd.f32 %v2757, %v2802
        %v2804 = vpop.f32.mrb[0].mxu0
        %v2805 = vpop.f32.mrb[0].mxu0
        %v2806 = vpop.f32.mrb[0].mxu0
        %2807 = vdwg.mxu0
        %2808 = vmatprep.subr.bf16.mxu0 0
        %2809 = vmatpush1.bf16.msra.mxu0 %v1924
        %2810 = vmatprep.subr.bf16.mxu0 0
        %2811 = vmatpush1.bf16.msra.mxu0 0
        %2812 = vmatprep.subr.bf16.mxu0 0
        %2813 = vmatpush1.bf16.msra.mxu0 0
        %2814 = vmatprep.subr.bf16.mxu0 0
        %2815 = vmatpush1.bf16.msra.mxu0 0
        %2816 = vmatprep.subr.bf16.mxu0 0
        %2817 = vmatpush1.bf16.msra.mxu0 0
        %2818 = vmatprep.subr.bf16.mxu0 0
        %2819 = vmatpush1.bf16.msra.mxu0 0
        %2820 = vmatprep.subr.bf16.mxu0 0
        %2821 = vmatpush1.bf16.msra.mxu0 0
        %2822 = vmatprep.subr.bf16.mxu0 0
        %2823 = vmatpush1.bf16.msra.mxu0 0
        %2824 = vmatprep.subr.bf16.mxu0 0
        %2825 = vmatpush1.bf16.msra.mxu0 0
        %2826 = vmatprep.subr.bf16.mxu0 0
        %2827 = vmatpush1.bf16.msra.mxu0 0
        %2828 = vmatprep.subr.bf16.mxu0 0
        %2829 = vmatpush1.bf16.msra.mxu0 0
        %2830 = vmatprep.subr.bf16.mxu0 0
        %2831 = vmatpush1.bf16.msra.mxu0 0
        %2832 = vmatprep.subr.bf16.mxu0 0
        %2833 = vmatpush1.bf16.msra.mxu0 0
        %2834 = vmatprep.subr.bf16.mxu0 0
        %2835 = vmatpush1.bf16.msra.mxu0 0
        %2836 = vmatprep.subr.bf16.mxu0 0
        %2837 = vmatpush1.bf16.msra.mxu0 0
        %2838 = vmatprep.subr.bf16.mxu0 0
        %2839 = vmatpush1.bf16.msra.mxu0 0
        %2840 = vmatprep.mubr.bf16.mxu0 0
        %2841 = vmatmul.mubr.bf16.gmra.mrb[0].mxu0 %v2612
        %v2842 = vpop.f32.mrb[0].mxu0
        %v2843 = vadd.f32 0.0, %v2842
        %v2844 = vpop.f32.mrb[0].mxu0
        %v2845 = vpop.f32.mrb[0].mxu0
        %v2846 = vpop.f32.mrb[0].mxu0
        %2847 = vdwg.mxu0
        %v2848 = vadd.f32 %v2803, %v2843
        %v2849 = vadd.f32 %v2848, %v971
        %s2850 = scalar_lea.vmem %s780, 8 [#allocation20]
        %2851 = vst [vmem:[%s2850] sm:$0xff] %v2849
        %s2852 = scalar_lea.vmem %s672, 8 [#allocation2]
        %v2853 = vld [vmem:[%s2852] sm:$0xf]
        %2854 = vmatprep.subr.bf16.mxu0 0
        %2855 = vmatpush1.bf16.msra.mxu0 %v1008
        %2856 = vmatprep.subr.bf16.mxu0 0
        %2857 = vmatpush1.bf16.msra.mxu0 %v1009
        %2858 = vmatprep.subr.bf16.mxu0 0
        %2859 = vmatpush1.bf16.msra.mxu0 0
        %2860 = vmatprep.subr.bf16.mxu0 0
        %2861 = vmatpush1.bf16.msra.mxu0 0
        %2862 = vmatprep.subr.bf16.mxu0 0
        %2863 = vmatpush1.bf16.msra.mxu0 0
        %2864 = vmatprep.subr.bf16.mxu0 0
        %2865 = vmatpush1.bf16.msra.mxu0 0
        %2866 = vmatprep.subr.bf16.mxu0 0
        %2867 = vmatpush1.bf16.msra.mxu0 0
        %2868 = vmatprep.subr.bf16.mxu0 0
        %2869 = vmatpush1.bf16.msra.mxu0 0
        %2870 = vmatprep.subr.bf16.mxu0 0
        %2871 = vmatpush1.bf16.msra.mxu0 0
        %2872 = vmatprep.subr.bf16.mxu0 0
        %2873 = vmatpush1.bf16.msra.mxu0 0
        %2874 = vmatprep.subr.bf16.mxu0 0
        %2875 = vmatpush1.bf16.msra.mxu0 0
        %2876 = vmatprep.subr.bf16.mxu0 0
        %2877 = vmatpush1.bf16.msra.mxu0 0
        %2878 = vmatprep.subr.bf16.mxu0 0
        %2879 = vmatpush1.bf16.msra.mxu0 0
        %2880 = vmatprep.subr.bf16.mxu0 0
        %2881 = vmatpush1.bf16.msra.mxu0 0
        %2882 = vmatprep.subr.bf16.mxu0 0
        %2883 = vmatpush1.bf16.msra.mxu0 0
        %2884 = vmatprep.subr.bf16.mxu0 0
        %2885 = vmatpush1.bf16.msra.mxu0 0
        %2886 = vmatprep.mubr.bf16.mxu0 0
        %2887 = vmatmul.mubr.bf16.gmra.mrb[0].mxu0 %v2766
        %v2888 = vpop.f32.mrb[0].mxu0
        %v2889 = vadd.f32 0.0, %v2888
        %v2890 = vpop.f32.mrb[0].mxu0
        %v2891 = vpop.f32.mrb[0].mxu0
        %v2892 = vpop.f32.mrb[0].mxu0
        %2893 = vdwg.mxu0
        %v2895 = vcombine.high %v2889, %v2889
        %v2897 = vunpack.c.l.s4 1966171168
        %v2898 = vunpack.c.0.s8 %v2897
        %v2899 = vlaneseq
        %v2900 = vshrl.u32 %v2899, 7
        %v2901 = vsub.s32 %v2898, %v2900
        %v2902 = vrot.slane %v2889, %v2901
        %v2904 = vunpack.c.l.s4 1966171168
        %v2905 = vunpack.c.0.s8 %v2904
        %v2906 = vlaneseq
        %v2907 = vshrl.u32 %v2906, 7
        %v2908 = vsub.s32 %v2905, %v2907
        %v2909 = vrot.slane %v2895, %v2908
        %v2910 = vcombine.high %v2902, %v2902
        %v2911 = vcombine.high %v2909, %v2909
        %v2913 = vunpack.c.l.s4 1966171168
        %v2914 = vunpack.c.0.s8 %v2913
        %v2915 = vlaneseq
        %v2916 = vshrl.u32 %v2915, 7
        %v2917 = vsub.s32 %v2914, %v2916
        %v2918 = vrot.slane %v2902, %v2917
        %v2920 = vunpack.c.l.s4 1966171168
        %v2921 = vunpack.c.0.s8 %v2920
        %v2922 = vlaneseq
        %v2923 = vshrl.u32 %v2922, 7
        %v2924 = vsub.s32 %v2921, %v2923
        %v2925 = vrot.slane %v2909, %v2924
        %v2927 = vunpack.c.l.s4 1966171168
        %v2928 = vunpack.c.0.s8 %v2927
        %v2929 = vlaneseq
        %v2930 = vshrl.u32 %v2929, 7
        %v2931 = vsub.s32 %v2928, %v2930
        %v2932 = vrot.slane %v2910, %v2931
        %v2934 = vunpack.c.l.s4 1966171168
        %v2935 = vunpack.c.0.s8 %v2934
        %v2936 = vlaneseq
        %v2937 = vshrl.u32 %v2936, 7
        %v2938 = vsub.s32 %v2935, %v2937
        %v2939 = vrot.slane %v2911, %v2938
        %v2940 = vcombine.high %v2918, %v2918
        %v2941 = vcombine.high %v2925, %v2925
        %v2942 = vcombine.high %v2932, %v2932
        %v2943 = vcombine.high %v2939, %v2939
        %v2944 = vlaneseq
        %v2945 = vshrl.u32 %v2944, 7
        %v2946 = vsub.s32 0, %v2945
        %v2947 = vrot.slane %v2918, %v2946
        %v2948 = vlaneseq
        %v2949 = vshrl.u32 %v2948, 7
        %v2950 = vsub.s32 0, %v2949
        %v2951 = vrot.slane %v2932, %v2950
        %v2952 = vlaneseq
        %v2953 = vshrl.u32 %v2952, 7
        %v2954 = vsub.s32 0, %v2953
        %v2955 = vrot.slane %v2940, %v2954
        %v2956 = vlaneseq
        %v2957 = vshrl.u32 %v2956, 7
        %v2958 = vsub.s32 0, %v2957
        %v2959 = vrot.slane %v2942, %v2958
        %v2960 = vlaneseq
        %v2961 = vshrl.u32 %v2960, 7
        %v2962 = vsub.s32 0, %v2961
        %v2963 = vrot.slane %v2925, %v2962
        %v2964 = vlaneseq
        %v2965 = vshrl.u32 %v2964, 7
        %v2966 = vsub.s32 0, %v2965
        %v2967 = vrot.slane %v2939, %v2966
        %v2968 = vlaneseq
        %v2969 = vshrl.u32 %v2968, 7
        %v2970 = vsub.s32 0, %v2969
        %v2971 = vrot.slane %v2941, %v2970
        %v2972 = vlaneseq
        %v2973 = vshrl.u32 %v2972, 7
        %v2974 = vsub.s32 0, %v2973
        %v2975 = vrot.slane %v2943, %v2974
        %v2984 = vadd.f32 %v907, %v2947
        %v2985 = vadd.f32 %v912, %v2951
        %v2986 = vadd.f32 %v917, %v2955
        %v2987 = vadd.f32 %v922, %v2959
        %v2988 = vadd.f32 %v927, %v2963
        %v2989 = vadd.f32 %v932, %v2967
        %v2990 = vadd.f32 %v937, %v2971
        %v2991 = vadd.f32 %v942, %v2975
        %v2992 = vtanh.pop %v2984
        %v2993 = vtanh.pop %v2985
        %v2994 = vtanh.pop %v2986
        %v2995 = vtanh.pop %v2987
        %v2996 = vtanh.pop %v2988
        %v2997 = vtanh.pop %v2989
        %v2998 = vtanh.pop %v2990
        %v2999 = vtanh.pop %v2991
        %v3000 = vmul.f32 %v2992, %v950
        %v3001 = vmul.f32 %v2993, %v950
        %v3002 = vmul.f32 %v2994, %v950
        %v3003 = vmul.f32 %v2995, %v950
        %v3004 = vmul.f32 %v2996, %v950
        %v3005 = vmul.f32 %v2997, %v950
        %v3006 = vmul.f32 %v2998, %v950
        %v3007 = vmul.f32 %v2999, %v950
        %v3008 = vsel %vm815, %v3000, 0.0
        %3009 = vadd.xlane.f32.xlu0 %v3008
        %v3010 = vpop.xlane.xlu0 %3009
        %v3011 = vsel %vm815, %v3001, 0.0
        %3012 = vadd.xlane.f32.xlu0 %v3011
        %v3013 = vpop.xlane.xlu0 %3012
        %v3014 = vsel %vm815, %v3002, 0.0
        %3015 = vadd.xlane.f32.xlu0 %v3014
        %v3016 = vpop.xlane.xlu0 %3015
        %v3017 = vsel %vm815, %v3003, 0.0
        %3018 = vadd.xlane.f32.xlu0 %v3017
        %v3019 = vpop.xlane.xlu0 %3018
        %v3020 = vsel %vm815, %v3004, 0.0
        %3021 = vadd.xlane.f32.xlu0 %v3020
        %v3022 = vpop.xlane.xlu0 %3021
        %v3023 = vsel %vm815, %v3005, 0.0
        %3024 = vadd.xlane.f32.xlu0 %v3023
        %v3025 = vpop.xlane.xlu0 %3024
        %v3026 = vsel %vm815, %v3006, 0.0
        %3027 = vadd.xlane.f32.xlu0 %v3026
        %v3028 = vpop.xlane.xlu0 %3027
        %v3029 = vsel %vm815, %v3007, 0.0
        %3030 = vadd.xlane.f32.xlu0 %v3029
        %v3031 = vpop.xlane.xlu0 %3030
        %v3040 = vlaneseq
        %v3041 = vshrl.u32 %v3040, 7
        %v3042 = vsub.s32 %v1202, %v3041
        %v3043 = vrot.slane %v3010, %v3042
        %v3044 = vlaneseq
        %v3045 = vshrl.u32 %v3044, 7
        %v3046 = vsub.s32 %v1202, %v3045
        %v3047 = vrot.slane %v3013, %v3046
        %v3048 = vlaneseq
        %v3049 = vshrl.u32 %v3048, 7
        %v3050 = vsub.s32 %v1202, %v3049
        %v3051 = vrot.slane %v3016, %v3050
        %v3052 = vlaneseq
        %v3053 = vshrl.u32 %v3052, 7
        %v3054 = vsub.s32 %v1202, %v3053
        %v3055 = vrot.slane %v3019, %v3054
        %v3056 = vlaneseq
        %v3057 = vshrl.u32 %v3056, 7
        %v3058 = vsub.s32 %v1202, %v3057
        %v3059 = vrot.slane %v3022, %v3058
        %v3060 = vlaneseq
        %v3061 = vshrl.u32 %v3060, 7
        %v3062 = vsub.s32 %v1202, %v3061
        %v3063 = vrot.slane %v3025, %v3062
        %v3064 = vlaneseq
        %v3065 = vshrl.u32 %v3064, 7
        %v3066 = vsub.s32 %v1202, %v3065
        %v3067 = vrot.slane %v3028, %v3066
        %v3068 = vlaneseq
        %v3069 = vshrl.u32 %v3068, 7
        %v3070 = vsub.s32 %v1202, %v3069
        %v3071 = vrot.slane %v3031, %v3070
        %v3072 = vsel %vm1235, %v3047, %v3043
        %v3073 = vsel %vm1237, %v3051, %v3072
        %v3074 = vsel %vm1239, %v3055, %v3073
        %v3075 = vsel %vm1241, %v3059, %v3074
        %v3076 = vsel %vm1243, %v3063, %v3075
        %v3077 = vsel %vm1245, %v3067, %v3076
        %v3078 = vsel %vm1247, %v3071, %v3077
        %v3080 = vsel %vm1250, %v3078, -inf
        %3081 = vmax.xlane.f32.xlu0 %v3080
        %v3082 = vpop.xlane.xlu0 %3081
        %v3084 = vlaneseq
        %v3085 = vshrl.u32 %v3084, 7
        %v3086 = vsub.s32 0, %v3085
        %v3087 = vrot.slane %v3082, %v3086
        %v3088 = vlaneseq
        %v3089 = vshrl.u32 %v3088, 7
        %v3090 = vsub.s32 1, %v3089
        %v3091 = vrot.slane %v3082, %v3090
        %v3092 = vlaneseq
        %v3093 = vshrl.u32 %v3092, 7
        %v3094 = vsub.s32 2, %v3093
        %v3095 = vrot.slane %v3082, %v3094
        %v3096 = vlaneseq
        %v3097 = vshrl.u32 %v3096, 7
        %v3098 = vsub.s32 3, %v3097
        %v3099 = vrot.slane %v3082, %v3098
        %v3100 = vlaneseq
        %v3101 = vshrl.u32 %v3100, 7
        %v3102 = vsub.s32 4, %v3101
        %v3103 = vrot.slane %v3082, %v3102
        %v3104 = vlaneseq
        %v3105 = vshrl.u32 %v3104, 7
        %v3106 = vsub.s32 5, %v3105
        %v3107 = vrot.slane %v3082, %v3106
        %v3108 = vlaneseq
        %v3109 = vshrl.u32 %v3108, 7
        %v3110 = vsub.s32 6, %v3109
        %v3111 = vrot.slane %v3082, %v3110
        %v3112 = vlaneseq
        %v3113 = vshrl.u32 %v3112, 7
        %v3114 = vsub.s32 7, %v3113
        %v3115 = vrot.slane %v3082, %v3114
        %v3124 = vsub.f32 %v3010, %v3087
        %v3125 = vsub.f32 %v3013, %v3091
        %v3126 = vsub.f32 %v3016, %v3095
        %v3127 = vsub.f32 %v3019, %v3099
        %v3128 = vsub.f32 %v3022, %v3103
        %v3129 = vsub.f32 %v3025, %v3107
        %v3130 = vsub.f32 %v3028, %v3111
        %v3131 = vsub.f32 %v3031, %v3115
        %v3132 = vmul.f32 %v3124, 1.442695
        %v3133 = vpow.pop %v3132
        %v3134 = vmul.f32 %v3125, 1.442695
        %v3135 = vpow.pop %v3134
        %v3136 = vmul.f32 %v3126, 1.442695
        %v3137 = vpow.pop %v3136
        %v3138 = vmul.f32 %v3127, 1.442695
        %v3139 = vpow.pop %v3138
        %v3140 = vmul.f32 %v3128, 1.442695
        %v3141 = vpow.pop %v3140
        %v3142 = vmul.f32 %v3129, 1.442695
        %v3143 = vpow.pop %v3142
        %v3144 = vmul.f32 %v3130, 1.442695
        %v3145 = vpow.pop %v3144
        %v3146 = vmul.f32 %v3131, 1.442695
        %v3147 = vpow.pop %v3146
        %3156 = vset.pattern.permute.xlu0 0
        %3157 = vperm.xlu0 %3156, %v3133
        %v3158 = vpop.permute.xlu0 %3157
        %3159 = vset.pattern.permute.xlu0 0
        %3160 = vperm.xlu0 %3159, %v3135
        %v3161 = vpop.permute.xlu0 %3160
        %3162 = vset.pattern.permute.xlu0 0
        %3163 = vperm.xlu0 %3162, %v3137
        %v3164 = vpop.permute.xlu0 %3163
        %3165 = vset.pattern.permute.xlu0 0
        %3166 = vperm.xlu0 %3165, %v3139
        %v3167 = vpop.permute.xlu0 %3166
        %3168 = vset.pattern.permute.xlu0 0
        %3169 = vperm.xlu0 %3168, %v3141
        %v3170 = vpop.permute.xlu0 %3169
        %3171 = vset.pattern.permute.xlu0 0
        %3172 = vperm.xlu0 %3171, %v3143
        %v3173 = vpop.permute.xlu0 %3172
        %3174 = vset.pattern.permute.xlu0 0
        %3175 = vperm.xlu0 %3174, %v3145
        %v3176 = vpop.permute.xlu0 %3175
        %3177 = vset.pattern.permute.xlu0 0
        %3178 = vperm.xlu0 %3177, %v3147
        %v3179 = vpop.permute.xlu0 %3178
        %v3180 = vlaneseq
        %v3181 = vshrl.u32 %v3180, 7
        %v3182 = vsub.s32 %v1202, %v3181
        %v3183 = vrot.slane %v3158, %v3182
        %v3184 = vlaneseq
        %v3185 = vshrl.u32 %v3184, 7
        %v3186 = vsub.s32 %v1202, %v3185
        %v3187 = vrot.slane %v3161, %v3186
        %v3188 = vlaneseq
        %v3189 = vshrl.u32 %v3188, 7
        %v3190 = vsub.s32 %v1202, %v3189
        %v3191 = vrot.slane %v3164, %v3190
        %v3192 = vlaneseq
        %v3193 = vshrl.u32 %v3192, 7
        %v3194 = vsub.s32 %v1202, %v3193
        %v3195 = vrot.slane %v3167, %v3194
        %v3196 = vlaneseq
        %v3197 = vshrl.u32 %v3196, 7
        %v3198 = vsub.s32 %v1202, %v3197
        %v3199 = vrot.slane %v3170, %v3198
        %v3200 = vlaneseq
        %v3201 = vshrl.u32 %v3200, 7
        %v3202 = vsub.s32 %v1202, %v3201
        %v3203 = vrot.slane %v3173, %v3202
        %v3204 = vlaneseq
        %v3205 = vshrl.u32 %v3204, 7
        %v3206 = vsub.s32 %v1202, %v3205
        %v3207 = vrot.slane %v3176, %v3206
        %v3208 = vlaneseq
        %v3209 = vshrl.u32 %v3208, 7
        %v3210 = vsub.s32 %v1202, %v3209
        %v3211 = vrot.slane %v3179, %v3210
        %v3212 = vsel %vm1235, %v3187, %v3183
        %v3213 = vsel %vm1237, %v3191, %v3212
        %v3214 = vsel %vm1239, %v3195, %v3213
        %v3215 = vsel %vm1241, %v3199, %v3214
        %v3216 = vsel %vm1243, %v3203, %v3215
        %v3217 = vsel %vm1245, %v3207, %v3216
        %v3218 = vsel %vm1247, %v3211, %v3217
        %v3220 = vsel %vm1250, %v3218, 0.0
        %3221 = vadd.xlane.f32.xlu0 %v3220
        %v3222 = vpop.xlane.xlu0 %3221
        %v3223 = vrcp.pop %v3222
        %v3225 = vlaneseq
        %v3226 = vshrl.u32 %v3225, 7
        %v3227 = vsub.s32 0, %v3226
        %v3228 = vrot.slane %v3223, %v3227
        %v3229 = vlaneseq
        %v3230 = vshrl.u32 %v3229, 7
        %v3231 = vsub.s32 1, %v3230
        %v3232 = vrot.slane %v3223, %v3231
        %v3233 = vlaneseq
        %v3234 = vshrl.u32 %v3233, 7
        %v3235 = vsub.s32 2, %v3234
        %v3236 = vrot.slane %v3223, %v3235
        %v3237 = vlaneseq
        %v3238 = vshrl.u32 %v3237, 7
        %v3239 = vsub.s32 3, %v3238
        %v3240 = vrot.slane %v3223, %v3239
        %v3241 = vlaneseq
        %v3242 = vshrl.u32 %v3241, 7
        %v3243 = vsub.s32 4, %v3242
        %v3244 = vrot.slane %v3223, %v3243
        %v3245 = vlaneseq
        %v3246 = vshrl.u32 %v3245, 7
        %v3247 = vsub.s32 5, %v3246
        %v3248 = vrot.slane %v3223, %v3247
        %v3249 = vlaneseq
        %v3250 = vshrl.u32 %v3249, 7
        %v3251 = vsub.s32 6, %v3250
        %v3252 = vrot.slane %v3223, %v3251
        %v3253 = vlaneseq
        %v3254 = vshrl.u32 %v3253, 7
        %v3255 = vsub.s32 7, %v3254
        %v3256 = vrot.slane %v3223, %v3255
        %v3265 = vmul.f32 %v3133, %v3228
        %v3266 = vmul.f32 %v3135, %v3232
        %v3267 = vmul.f32 %v3137, %v3236
        %v3268 = vmul.f32 %v3139, %v3240
        %v3269 = vmul.f32 %v3141, %v3244
        %v3270 = vmul.f32 %v3143, %v3248
        %v3271 = vmul.f32 %v3145, %v3252
        %v3272 = vmul.f32 %v3147, %v3256
        %3281 = vset.pattern.permute.xlu0 0
        %3282 = vperm.xlu0 %3281, %v3265
        %v3283 = vpop.permute.xlu0 %3282
        %3284 = vset.pattern.permute.xlu0 0
        %3285 = vperm.xlu0 %3284, %v3266
        %v3286 = vpop.permute.xlu0 %3285
        %3287 = vset.pattern.permute.xlu0 0
        %3288 = vperm.xlu0 %3287, %v3267
        %v3289 = vpop.permute.xlu0 %3288
        %3290 = vset.pattern.permute.xlu0 0
        %3291 = vperm.xlu0 %3290, %v3268
        %v3292 = vpop.permute.xlu0 %3291
        %3293 = vset.pattern.permute.xlu0 0
        %3294 = vperm.xlu0 %3293, %v3269
        %v3295 = vpop.permute.xlu0 %3294
        %3296 = vset.pattern.permute.xlu0 0
        %3297 = vperm.xlu0 %3296, %v3270
        %v3298 = vpop.permute.xlu0 %3297
        %3299 = vset.pattern.permute.xlu0 0
        %3300 = vperm.xlu0 %3299, %v3271
        %v3301 = vpop.permute.xlu0 %3300
        %3302 = vset.pattern.permute.xlu0 0
        %3303 = vperm.xlu0 %3302, %v3272
        %v3304 = vpop.permute.xlu0 %3303
        %v3305 = vlaneseq
        %v3306 = vshrl.u32 %v3305, 7
        %v3307 = vsub.s32 %v1202, %v3306
        %v3308 = vrot.slane %v3283, %v3307
        %v3309 = vlaneseq
        %v3310 = vshrl.u32 %v3309, 7
        %v3311 = vsub.s32 %v1202, %v3310
        %v3312 = vrot.slane %v3286, %v3311
        %v3313 = vlaneseq
        %v3314 = vshrl.u32 %v3313, 7
        %v3315 = vsub.s32 %v1202, %v3314
        %v3316 = vrot.slane %v3289, %v3315
        %v3317 = vlaneseq
        %v3318 = vshrl.u32 %v3317, 7
        %v3319 = vsub.s32 %v1202, %v3318
        %v3320 = vrot.slane %v3292, %v3319
        %v3321 = vlaneseq
        %v3322 = vshrl.u32 %v3321, 7
        %v3323 = vsub.s32 %v1202, %v3322
        %v3324 = vrot.slane %v3295, %v3323
        %v3325 = vlaneseq
        %v3326 = vshrl.u32 %v3325, 7
        %v3327 = vsub.s32 %v1202, %v3326
        %v3328 = vrot.slane %v3298, %v3327
        %v3329 = vlaneseq
        %v3330 = vshrl.u32 %v3329, 7
        %v3331 = vsub.s32 %v1202, %v3330
        %v3332 = vrot.slane %v3301, %v3331
        %v3333 = vlaneseq
        %v3334 = vshrl.u32 %v3333, 7
        %v3335 = vsub.s32 %v1202, %v3334
        %v3336 = vrot.slane %v3304, %v3335
        %v3337 = vsel %vm1235, %v3312, %v3308
        %v3338 = vsel %vm1237, %v3316, %v3337
        %v3339 = vsel %vm1239, %v3320, %v3338
        %v3340 = vsel %vm1241, %v3324, %v3339
        %v3341 = vsel %vm1243, %v3328, %v3340
        %v3342 = vsel %vm1245, %v3332, %v3341
        %v3343 = vsel %vm1247, %v3336, %v3342
        %s3345 = scalar_lea.vmem %s793, 16 [#allocation23]
        %3346 = vst.msk [vmem:[%s3345] sm:$0xff] %vm1250, %v3343
        %v3355 = vmul.f32 %v3283, %v796
        %v3356 = vmul.f32 %v3286, %v797
        %v3357 = vmul.f32 %v3289, %v798
        %v3358 = vmul.f32 %v3292, %v799
        %v3359 = vmul.f32 %v3295, %v800
        %v3360 = vmul.f32 %v3298, %v801
        %v3361 = vmul.f32 %v3301, %v802
        %v3362 = vmul.f32 %v3304, %v803
        %v3363 = vsel %vm815, %v3355, 0.0
        %v3364 = vrot.slane %v3363, 4
        %v3365 = vadd.f32 %v3363, %v3364
        %v3366 = vrot.slane %v3365, 2
        %v3367 = vadd.f32 %v3365, %v3366
        %v3368 = vrot.slane %v3367, 1
        %v3369 = vadd.f32 %v3367, %v3368
        %v3370 = vsel %vm815, %v3356, 0.0
        %v3371 = vrot.slane %v3370, 4
        %v3372 = vadd.f32 %v3370, %v3371
        %v3373 = vrot.slane %v3372, 2
        %v3374 = vadd.f32 %v3372, %v3373
        %v3375 = vrot.slane %v3374, 1
        %v3376 = vadd.f32 %v3374, %v3375
        %v3377 = vsel %vm815, %v3357, 0.0
        %v3378 = vrot.slane %v3377, 4
        %v3379 = vadd.f32 %v3377, %v3378
        %v3380 = vrot.slane %v3379, 2
        %v3381 = vadd.f32 %v3379, %v3380
        %v3382 = vrot.slane %v3381, 1
        %v3383 = vadd.f32 %v3381, %v3382
        %v3384 = vsel %vm815, %v3358, 0.0
        %v3385 = vrot.slane %v3384, 4
        %v3386 = vadd.f32 %v3384, %v3385
        %v3387 = vrot.slane %v3386, 2
        %v3388 = vadd.f32 %v3386, %v3387
        %v3389 = vrot.slane %v3388, 1
        %v3390 = vadd.f32 %v3388, %v3389
        %v3391 = vsel %vm815, %v3359, 0.0
        %v3392 = vrot.slane %v3391, 4
        %v3393 = vadd.f32 %v3391, %v3392
        %v3394 = vrot.slane %v3393, 2
        %v3395 = vadd.f32 %v3393, %v3394
        %v3396 = vrot.slane %v3395, 1
        %v3397 = vadd.f32 %v3395, %v3396
        %v3398 = vsel %vm815, %v3360, 0.0
        %v3399 = vrot.slane %v3398, 4
        %v3400 = vadd.f32 %v3398, %v3399
        %v3401 = vrot.slane %v3400, 2
        %v3402 = vadd.f32 %v3400, %v3401
        %v3403 = vrot.slane %v3402, 1
        %v3404 = vadd.f32 %v3402, %v3403
        %v3405 = vsel %vm815, %v3361, 0.0
        %v3406 = vrot.slane %v3405, 4
        %v3407 = vadd.f32 %v3405, %v3406
        %v3408 = vrot.slane %v3407, 2
        %v3409 = vadd.f32 %v3407, %v3408
        %v3410 = vrot.slane %v3409, 1
        %v3411 = vadd.f32 %v3409, %v3410
        %v3412 = vsel %vm815, %v3362, 0.0
        %v3413 = vrot.slane %v3412, 4
        %v3414 = vadd.f32 %v3412, %v3413
        %v3415 = vrot.slane %v3414, 2
        %v3416 = vadd.f32 %v3414, %v3415
        %v3417 = vrot.slane %v3416, 1
        %v3418 = vadd.f32 %v3416, %v3417
        %v3419 = vpack.c.bf16 %v3369, %v3369
        %v3420 = vpack.c.bf16 %v3376, %v3376
        %v3421 = vpack.c.bf16 %v3383, %v3383
        %v3422 = vpack.c.bf16 %v3390, %v3390
        %v3423 = vpack.c.bf16 %v3397, %v3397
        %v3424 = vpack.c.bf16 %v3404, %v3404
        %v3425 = vpack.c.bf16 %v3411, %v3411
        %v3426 = vpack.c.bf16 %v3418, %v3418
        %v3435 = vunpack.c.l.b16 %v3419
        %v3436 = vunpack.c.l.b16 %v3420
        %v3437 = vunpack.c.l.b16 %v3421
        %v3438 = vunpack.c.l.b16 %v3422
        %v3439 = vunpack.c.l.b16 %v3423
        %v3440 = vunpack.c.l.b16 %v3424
        %v3441 = vunpack.c.l.b16 %v3425
        %v3442 = vunpack.c.l.b16 %v3426
        %v3443 = vsel %vm1235, %v3436, %v3435
        %v3444 = vsel %vm1237, %v3437, %v3443
        %v3445 = vsel %vm1239, %v3438, %v3444
        %v3446 = vsel %vm1241, %v3439, %v3445
        %v3447 = vsel %vm1243, %v3440, %v3446
        %v3448 = vsel %vm1245, %v3441, %v3447
        %v3449 = vsel %vm1247, %v3442, %v3448
        %v3450 = vpack.c.b16 %v3449, %v3449
        %v3452 = vsel %vm815, %v3450, 0
        %3454 = vmatprep.subr.bf16.mxu0 0
        %3455 = vmatpush1.bf16.msra.mxu0 %v1629
        %3456 = vmatprep.subr.bf16.mxu0 0
        %3457 = vmatpush1.bf16.msra.mxu0 %v1630
        %3458 = vmatprep.subr.bf16.mxu0 0
        %3459 = vmatpush1.bf16.msra.mxu0 0
        %3460 = vmatprep.subr.bf16.mxu0 0
        %3461 = vmatpush1.bf16.msra.mxu0 0
        %3462 = vmatprep.subr.bf16.mxu0 0
        %3463 = vmatpush1.bf16.msra.mxu0 0
        %3464 = vmatprep.subr.bf16.mxu0 0
        %3465 = vmatpush1.bf16.msra.mxu0 0
        %3466 = vmatprep.subr.bf16.mxu0 0
        %3467 = vmatpush1.bf16.msra.mxu0 0
        %3468 = vmatprep.subr.bf16.mxu0 0
        %3469 = vmatpush1.bf16.msra.mxu0 0
        %3470 = vmatprep.subr.bf16.mxu0 0
        %3471 = vmatpush1.bf16.msra.mxu0 0
        %3472 = vmatprep.subr.bf16.mxu0 0
        %3473 = vmatpush1.bf16.msra.mxu0 0
        %3474 = vmatprep.subr.bf16.mxu0 0
        %3475 = vmatpush1.bf16.msra.mxu0 0
        %3476 = vmatprep.subr.bf16.mxu0 0
        %3477 = vmatpush1.bf16.msra.mxu0 0
        %3478 = vmatprep.subr.bf16.mxu0 0
        %3479 = vmatpush1.bf16.msra.mxu0 0
        %3480 = vmatprep.subr.bf16.mxu0 0
        %3481 = vmatpush1.bf16.msra.mxu0 0
        %3482 = vmatprep.subr.bf16.mxu0 0
        %3483 = vmatpush1.bf16.msra.mxu0 0
        %3484 = vmatprep.subr.bf16.mxu0 0
        %3485 = vmatpush1.bf16.msra.mxu0 0
        %3486 = vmatprep.mubr.bf16.mxu0 0
        %3487 = vmatmul.mubr.bf16.gmra.mrb[0].mxu0 %v3452
        %v3488 = vpop.f32.mrb[0].mxu0
        %v3489 = vadd.f32 0.0, %v3488
        %v3490 = vpop.f32.mrb[0].mxu0
        %v3491 = vpop.f32.mrb[0].mxu0
        %v3492 = vpop.f32.mrb[0].mxu0
        %3493 = vdwg.mxu0
        %v3495 = vsel %vm1682, %v2853, 0
        %3497 = vmatprep.subr.bf16.mxu0 0
        %3498 = vmatpush1.bf16.msra.mxu0 %v1680
        %3499 = vmatprep.subr.bf16.mxu0 0
        %3500 = vmatpush1.bf16.msra.mxu0 0
        %3501 = vmatprep.subr.bf16.mxu0 0
        %3502 = vmatpush1.bf16.msra.mxu0 0
        %3503 = vmatprep.subr.bf16.mxu0 0
        %3504 = vmatpush1.bf16.msra.mxu0 0
        %3505 = vmatprep.subr.bf16.mxu0 0
        %3506 = vmatpush1.bf16.msra.mxu0 0
        %3507 = vmatprep.subr.bf16.mxu0 0
        %3508 = vmatpush1.bf16.msra.mxu0 0
        %3509 = vmatprep.subr.bf16.mxu0 0
        %3510 = vmatpush1.bf16.msra.mxu0 0
        %3511 = vmatprep.subr.bf16.mxu0 0
        %3512 = vmatpush1.bf16.msra.mxu0 0
        %3513 = vmatprep.subr.bf16.mxu0 0
        %3514 = vmatpush1.bf16.msra.mxu0 0
        %3515 = vmatprep.subr.bf16.mxu0 0
        %3516 = vmatpush1.bf16.msra.mxu0 0
        %3517 = vmatprep.subr.bf16.mxu0 0
        %3518 = vmatpush1.bf16.msra.mxu0 0
        %3519 = vmatprep.subr.bf16.mxu0 0
        %3520 = vmatpush1.bf16.msra.mxu0 0
        %3521 = vmatprep.subr.bf16.mxu0 0
        %3522 = vmatpush1.bf16.msra.mxu0 0
        %3523 = vmatprep.subr.bf16.mxu0 0
        %3524 = vmatpush1.bf16.msra.mxu0 0
        %3525 = vmatprep.subr.bf16.mxu0 0
        %3526 = vmatpush1.bf16.msra.mxu0 0
        %3527 = vmatprep.subr.bf16.mxu0 0
        %3528 = vmatpush1.bf16.msra.mxu0 0
        %3529 = vmatprep.mubr.bf16.mxu0 0
        %3530 = vmatmul.mubr.bf16.gmra.mrb[0].mxu0 %v3495
        %v3531 = vpop.f32.mrb[0].mxu0
        %v3532 = vadd.f32 %v3489, %v3531
        %v3533 = vpop.f32.mrb[0].mxu0
        %v3534 = vpop.f32.mrb[0].mxu0
        %v3535 = vpop.f32.mrb[0].mxu0
        %3536 = vdwg.mxu0
        %v3537 = vadd.f32 %v3532, %v957
        %3538 = vmatprep.subr.bf16.mxu0 0
        %3539 = vmatpush1.bf16.msra.mxu0 %v1735
        %3540 = vmatprep.subr.bf16.mxu0 0
        %3541 = vmatpush1.bf16.msra.mxu0 %v1736
        %3542 = vmatprep.subr.bf16.mxu0 0
        %3543 = vmatpush1.bf16.msra.mxu0 0
        %3544 = vmatprep.subr.bf16.mxu0 0
        %3545 = vmatpush1.bf16.msra.mxu0 0
        %3546 = vmatprep.subr.bf16.mxu0 0
        %3547 = vmatpush1.bf16.msra.mxu0 0
        %3548 = vmatprep.subr.bf16.mxu0 0
        %3549 = vmatpush1.bf16.msra.mxu0 0
        %3550 = vmatprep.subr.bf16.mxu0 0
        %3551 = vmatpush1.bf16.msra.mxu0 0
        %3552 = vmatprep.subr.bf16.mxu0 0
        %3553 = vmatpush1.bf16.msra.mxu0 0
        %3554 = vmatprep.subr.bf16.mxu0 0
        %3555 = vmatpush1.bf16.msra.mxu0 0
        %3556 = vmatprep.subr.bf16.mxu0 0
        %3557 = vmatpush1.bf16.msra.mxu0 0
        %3558 = vmatprep.subr.bf16.mxu0 0
        %3559 = vmatpush1.bf16.msra.mxu0 0
        %3560 = vmatprep.subr.bf16.mxu0 0
        %3561 = vmatpush1.bf16.msra.mxu0 0
        %3562 = vmatprep.subr.bf16.mxu0 0
        %3563 = vmatpush1.bf16.msra.mxu0 0
        %3564 = vmatprep.subr.bf16.mxu0 0
        %3565 = vmatpush1.bf16.msra.mxu0 0
        %3566 = vmatprep.subr.bf16.mxu0 0
        %3567 = vmatpush1.bf16.msra.mxu0 0
        %3568 = vmatprep.subr.bf16.mxu0 0
        %3569 = vmatpush1.bf16.msra.mxu0 0
        %3570 = vmatprep.mubr.bf16.mxu0 0
        %3571 = vmatmul.mubr.bf16.gmra.mrb[0].mxu0 %v2766
        %v3572 = vpop.f32.mrb[0].mxu0
        %v3573 = vadd.f32 %v964, %v3572
        %v3574 = vpop.f32.mrb[0].mxu0
        %v3575 = vpop.f32.mrb[0].mxu0
        %v3576 = vpop.f32.mrb[0].mxu0
        %3577 = vdwg.mxu0
        %v3578 = vadd.f32 %v3537, %v3573
        %v3579 = vxor.u32 %v3578, 2147483648
        %v3580 = vmul.f32 %v3579, 1.442695
        %v3581 = vpow.pop %v3580
        %v3582 = vadd.f32 %v3581, 1.0
        %v3583 = vrcp.pop %v3582
        %v3584 = vmul.f32 1.0, %v3583
        %3586 = vrot.lane.b32.xlu0 %v3573, 64
        %v3587 = vpop.permute.xlu0 %3586
        %v3589 = vmul.f32 %v3584, %v3587
        %3591 = vrot.lane.b32.xlu0 %v3589, 64
        %v3592 = vpop.permute.xlu0 %3591
        %v3594 = vadd.f32 %v3537, %v3592
        %v3595 = vtanh.pop %v3594
        %v3596 = vsub.f32 1.0, %v3584
        %3598 = vrot.lane.b32.xlu0 %v3595, 96
        %v3599 = vpop.permute.xlu0 %3598
        %v3601 = vmul.f32 %v3596, %v3599
        %v3602 = vmul.f32 %v3584, %v2720
        %v3603 = vadd.f32 %v3601, %v3602
        %v3604 = vpack.c.bf16 %v3603, %v3603
        %3605 = vmatprep.subr.bf16.mxu0 0
        %3606 = vmatpush1.bf16.msra.mxu0 %v1818
        %3607 = vmatprep.subr.bf16.mxu0 0
        %3608 = vmatpush1.bf16.msra.mxu0 %v1819
        %3609 = vmatprep.subr.bf16.mxu0 0
        %3610 = vmatpush1.bf16.msra.mxu0 0
        %3611 = vmatprep.subr.bf16.mxu0 0
        %3612 = vmatpush1.bf16.msra.mxu0 0
        %3613 = vmatprep.subr.bf16.mxu0 0
        %3614 = vmatpush1.bf16.msra.mxu0 0
        %3615 = vmatprep.subr.bf16.mxu0 0
        %3616 = vmatpush1.bf16.msra.mxu0 0
        %3617 = vmatprep.subr.bf16.mxu0 0
        %3618 = vmatpush1.bf16.msra.mxu0 0
        %3619 = vmatprep.subr.bf16.mxu0 0
        %3620 = vmatpush1.bf16.msra.mxu0 0
        %3621 = vmatprep.subr.bf16.mxu0 0
        %3622 = vmatpush1.bf16.msra.mxu0 0
        %3623 = vmatprep.subr.bf16.mxu0 0
        %3624 = vmatpush1.bf16.msra.mxu0 0
        %3625 = vmatprep.subr.bf16.mxu0 0
        %3626 = vmatpush1.bf16.msra.mxu0 0
        %3627 = vmatprep.subr.bf16.mxu0 0
        %3628 = vmatpush1.bf16.msra.mxu0 0
        %3629 = vmatprep.subr.bf16.mxu0 0
        %3630 = vmatpush1.bf16.msra.mxu0 0
        %3631 = vmatprep.subr.bf16.mxu0 0
        %3632 = vmatpush1.bf16.msra.mxu0 0
        %3633 = vmatprep.subr.bf16.mxu0 0
        %3634 = vmatpush1.bf16.msra.mxu0 0
        %3635 = vmatprep.subr.bf16.mxu0 0
        %3636 = vmatpush1.bf16.msra.mxu0 0
        %3637 = vmatprep.mubr.bf16.mxu0 0
        %3638 = vmatmul.mubr.bf16.gmra.mrb[0].mxu0 %v3452
        %v3639 = vpop.f32.mrb[0].mxu0
        %v3640 = vadd.f32 0.0, %v3639
        %v3641 = vpop.f32.mrb[0].mxu0
        %v3642 = vpop.f32.mrb[0].mxu0
        %v3643 = vpop.f32.mrb[0].mxu0
        %3644 = vdwg.mxu0
        %3646 = vrot.lane.b32.xlu0 %v3604, 96
        %v3647 = vpop.permute.xlu0 %3646
        %v3649 = vsel %vm815, %v3647, 0
        %3651 = vmatprep.subr.bf16.mxu0 0
        %3652 = vmatpush1.bf16.msra.mxu0 %v1873
        %3653 = vmatprep.subr.bf16.mxu0 0
        %3654 = vmatpush1.bf16.msra.mxu0 %v1874
        %3655 = vmatprep.subr.bf16.mxu0 0
        %3656 = vmatpush1.bf16.msra.mxu0 0
        %3657 = vmatprep.subr.bf16.mxu0 0
        %3658 = vmatpush1.bf16.msra.mxu0 0
        %3659 = vmatprep.subr.bf16.mxu0 0
        %3660 = vmatpush1.bf16.msra.mxu0 0
        %3661 = vmatprep.subr.bf16.mxu0 0
        %3662 = vmatpush1.bf16.msra.mxu0 0
        %3663 = vmatprep.subr.bf16.mxu0 0
        %3664 = vmatpush1.bf16.msra.mxu0 0
        %3665 = vmatprep.subr.bf16.mxu0 0
        %3666 = vmatpush1.bf16.msra.mxu0 0
        %3667 = vmatprep.subr.bf16.mxu0 0
        %3668 = vmatpush1.bf16.msra.mxu0 0
        %3669 = vmatprep.subr.bf16.mxu0 0
        %3670 = vmatpush1.bf16.msra.mxu0 0
        %3671 = vmatprep.subr.bf16.mxu0 0
        %3672 = vmatpush1.bf16.msra.mxu0 0
        %3673 = vmatprep.subr.bf16.mxu0 0
        %3674 = vmatpush1.bf16.msra.mxu0 0
        %3675 = vmatprep.subr.bf16.mxu0 0
        %3676 = vmatpush1.bf16.msra.mxu0 0
        %3677 = vmatprep.subr.bf16.mxu0 0
        %3678 = vmatpush1.bf16.msra.mxu0 0
        %3679 = vmatprep.subr.bf16.mxu0 0
        %3680 = vmatpush1.bf16.msra.mxu0 0
        %3681 = vmatprep.subr.bf16.mxu0 0
        %3682 = vmatpush1.bf16.msra.mxu0 0
        %3683 = vmatprep.mubr.bf16.mxu0 0
        %3684 = vmatmul.mubr.bf16.gmra.mrb[0].mxu0 %v3649
        %v3685 = vpop.f32.mrb[0].mxu0
        %v3686 = vadd.f32 %v3640, %v3685
        %v3687 = vpop.f32.mrb[0].mxu0
        %v3688 = vpop.f32.mrb[0].mxu0
        %v3689 = vpop.f32.mrb[0].mxu0
        %3690 = vdwg.mxu0
        %3691 = vmatprep.subr.bf16.mxu0 0
        %3692 = vmatpush1.bf16.msra.mxu0 %v1924
        %3693 = vmatprep.subr.bf16.mxu0 0
        %3694 = vmatpush1.bf16.msra.mxu0 0
        %3695 = vmatprep.subr.bf16.mxu0 0
        %3696 = vmatpush1.bf16.msra.mxu0 0
        %3697 = vmatprep.subr.bf16.mxu0 0
        %3698 = vmatpush1.bf16.msra.mxu0 0
        %3699 = vmatprep.subr.bf16.mxu0 0
        %3700 = vmatpush1.bf16.msra.mxu0 0
        %3701 = vmatprep.subr.bf16.mxu0 0
        %3702 = vmatpush1.bf16.msra.mxu0 0
        %3703 = vmatprep.subr.bf16.mxu0 0
        %3704 = vmatpush1.bf16.msra.mxu0 0
        %3705 = vmatprep.subr.bf16.mxu0 0
        %3706 = vmatpush1.bf16.msra.mxu0 0
        %3707 = vmatprep.subr.bf16.mxu0 0
        %3708 = vmatpush1.bf16.msra.mxu0 0
        %3709 = vmatprep.subr.bf16.mxu0 0
        %3710 = vmatpush1.bf16.msra.mxu0 0
        %3711 = vmatprep.subr.bf16.mxu0 0
        %3712 = vmatpush1.bf16.msra.mxu0 0
        %3713 = vmatprep.subr.bf16.mxu0 0
        %3714 = vmatpush1.bf16.msra.mxu0 0
        %3715 = vmatprep.subr.bf16.mxu0 0
        %3716 = vmatpush1.bf16.msra.mxu0 0
        %3717 = vmatprep.subr.bf16.mxu0 0
        %3718 = vmatpush1.bf16.msra.mxu0 0
        %3719 = vmatprep.subr.bf16.mxu0 0
        %3720 = vmatpush1.bf16.msra.mxu0 0
        %3721 = vmatprep.subr.bf16.mxu0 0
        %3722 = vmatpush1.bf16.msra.mxu0 0
        %3723 = vmatprep.mubr.bf16.mxu0 0
        %3724 = vmatmul.mubr.bf16.gmra.mrb[0].mxu0 %v3495
        %v3725 = vpop.f32.mrb[0].mxu0
        %v3726 = vadd.f32 0.0, %v3725
        %v3727 = vpop.f32.mrb[0].mxu0
        %v3728 = vpop.f32.mrb[0].mxu0
        %v3729 = vpop.f32.mrb[0].mxu0
        %3730 = vdwg.mxu0
        %v3731 = vadd.f32 %v3686, %v3726
        %v3732 = vadd.f32 %v3731, %v971
        %s3733 = scalar_lea.vmem %s780, 16 [#allocation20]
        %3734 = vst [vmem:[%s3733] sm:$0xff] %v3732
        %s3735 = scalar_lea.vmem %s672, 12 [#allocation2]
        %v3736 = vld [vmem:[%s3735] sm:$0xf]
        %3737 = vmatprep.subr.bf16.mxu0 0
        %3738 = vmatpush1.bf16.msra.mxu0 %v1008
        %3739 = vmatprep.subr.bf16.mxu0 0
        %3740 = vmatpush1.bf16.msra.mxu0 %v1009
        %3741 = vmatprep.subr.bf16.mxu0 0
        %3742 = vmatpush1.bf16.msra.mxu0 0
        %3743 = vmatprep.subr.bf16.mxu0 0
        %3744 = vmatpush1.bf16.msra.mxu0 0
        %3745 = vmatprep.subr.bf16.mxu0 0
        %3746 = vmatpush1.bf16.msra.mxu0 0
        %3747 = vmatprep.subr.bf16.mxu0 0
        %3748 = vmatpush1.bf16.msra.mxu0 0
        %3749 = vmatprep.subr.bf16.mxu0 0
        %3750 = vmatpush1.bf16.msra.mxu0 0
        %3751 = vmatprep.subr.bf16.mxu0 0
        %3752 = vmatpush1.bf16.msra.mxu0 0
        %3753 = vmatprep.subr.bf16.mxu0 0
        %3754 = vmatpush1.bf16.msra.mxu0 0
        %3755 = vmatprep.subr.bf16.mxu0 0
        %3756 = vmatpush1.bf16.msra.mxu0 0
        %3757 = vmatprep.subr.bf16.mxu0 0
        %3758 = vmatpush1.bf16.msra.mxu0 0
        %3759 = vmatprep.subr.bf16.mxu0 0
        %3760 = vmatpush1.bf16.msra.mxu0 0
        %3761 = vmatprep.subr.bf16.mxu0 0
        %3762 = vmatpush1.bf16.msra.mxu0 0
        %3763 = vmatprep.subr.bf16.mxu0 0
        %3764 = vmatpush1.bf16.msra.mxu0 0
        %3765 = vmatprep.subr.bf16.mxu0 0
        %3766 = vmatpush1.bf16.msra.mxu0 0
        %3767 = vmatprep.subr.bf16.mxu0 0
        %3768 = vmatpush1.bf16.msra.mxu0 0
        %3769 = vmatprep.mubr.bf16.mxu0 0
        %3770 = vmatmul.mubr.bf16.gmra.mrb[0].mxu0 %v3649
        %v3771 = vpop.f32.mrb[0].mxu0
        %v3772 = vadd.f32 0.0, %v3771
        %v3773 = vpop.f32.mrb[0].mxu0
        %v3774 = vpop.f32.mrb[0].mxu0
        %v3775 = vpop.f32.mrb[0].mxu0
        %3776 = vdwg.mxu0
        %v3778 = vcombine.high %v3772, %v3772
        %v3780 = vunpack.c.l.s4 1966171168
        %v3781 = vunpack.c.0.s8 %v3780
        %v3782 = vlaneseq
        %v3783 = vshrl.u32 %v3782, 7
        %v3784 = vsub.s32 %v3781, %v3783
        %v3785 = vrot.slane %v3772, %v3784
        %v3787 = vunpack.c.l.s4 1966171168
        %v3788 = vunpack.c.0.s8 %v3787
        %v3789 = vlaneseq
        %v3790 = vshrl.u32 %v3789, 7
        %v3791 = vsub.s32 %v3788, %v3790
        %v3792 = vrot.slane %v3778, %v3791
        %v3793 = vcombine.high %v3785, %v3785
        %v3794 = vcombine.high %v3792, %v3792
        %v3796 = vunpack.c.l.s4 1966171168
        %v3797 = vunpack.c.0.s8 %v3796
        %v3798 = vlaneseq
        %v3799 = vshrl.u32 %v3798, 7
        %v3800 = vsub.s32 %v3797, %v3799
        %v3801 = vrot.slane %v3785, %v3800
        %v3803 = vunpack.c.l.s4 1966171168
        %v3804 = vunpack.c.0.s8 %v3803
        %v3805 = vlaneseq
        %v3806 = vshrl.u32 %v3805, 7
        %v3807 = vsub.s32 %v3804, %v3806
        %v3808 = vrot.slane %v3792, %v3807
        %v3810 = vunpack.c.l.s4 1966171168
        %v3811 = vunpack.c.0.s8 %v3810
        %v3812 = vlaneseq
        %v3813 = vshrl.u32 %v3812, 7
        %v3814 = vsub.s32 %v3811, %v3813
        %v3815 = vrot.slane %v3793, %v3814
        %v3817 = vunpack.c.l.s4 1966171168
        %v3818 = vunpack.c.0.s8 %v3817
        %v3819 = vlaneseq
        %v3820 = vshrl.u32 %v3819, 7
        %v3821 = vsub.s32 %v3818, %v3820
        %v3822 = vrot.slane %v3794, %v3821
        %v3823 = vcombine.high %v3801, %v3801
        %v3824 = vcombine.high %v3808, %v3808
        %v3825 = vcombine.high %v3815, %v3815
        %v3826 = vcombine.high %v3822, %v3822
        %v3827 = vlaneseq
        %v3828 = vshrl.u32 %v3827, 7
        %v3829 = vsub.s32 0, %v3828
        %v3830 = vrot.slane %v3801, %v3829
        %v3831 = vlaneseq
        %v3832 = vshrl.u32 %v3831, 7
        %v3833 = vsub.s32 0, %v3832
        %v3834 = vrot.slane %v3815, %v3833
        %v3835 = vlaneseq
        %v3836 = vshrl.u32 %v3835, 7
        %v3837 = vsub.s32 0, %v3836
        %v3838 = vrot.slane %v3823, %v3837
        %v3839 = vlaneseq
        %v3840 = vshrl.u32 %v3839, 7
        %v3841 = vsub.s32 0, %v3840
        %v3842 = vrot.slane %v3825, %v3841
        %v3843 = vlaneseq
        %v3844 = vshrl.u32 %v3843, 7
        %v3845 = vsub.s32 0, %v3844
        %v3846 = vrot.slane %v3808, %v3845
        %v3847 = vlaneseq
        %v3848 = vshrl.u32 %v3847, 7
        %v3849 = vsub.s32 0, %v3848
        %v3850 = vrot.slane %v3822, %v3849
        %v3851 = vlaneseq
        %v3852 = vshrl.u32 %v3851, 7
        %v3853 = vsub.s32 0, %v3852
        %v3854 = vrot.slane %v3824, %v3853
        %v3855 = vlaneseq
        %v3856 = vshrl.u32 %v3855, 7
        %v3857 = vsub.s32 0, %v3856
        %v3858 = vrot.slane %v3826, %v3857
        %v3867 = vadd.f32 %v907, %v3830
        %v3868 = vadd.f32 %v912, %v3834
        %v3869 = vadd.f32 %v917, %v3838
        %v3870 = vadd.f32 %v922, %v3842
        %v3871 = vadd.f32 %v927, %v3846
        %v3872 = vadd.f32 %v932, %v3850
        %v3873 = vadd.f32 %v937, %v3854
        %v3874 = vadd.f32 %v942, %v3858
        %v3875 = vtanh.pop %v3867
        %v3876 = vtanh.pop %v3868
        %v3877 = vtanh.pop %v3869
        %v3878 = vtanh.pop %v3870
        %v3879 = vtanh.pop %v3871
        %v3880 = vtanh.pop %v3872
        %v3881 = vtanh.pop %v3873
        %v3882 = vtanh.pop %v3874
        %v3883 = vmul.f32 %v3875, %v950
        %v3884 = vmul.f32 %v3876, %v950
        %v3885 = vmul.f32 %v3877, %v950
        %v3886 = vmul.f32 %v3878, %v950
        %v3887 = vmul.f32 %v3879, %v950
        %v3888 = vmul.f32 %v3880, %v950
        %v3889 = vmul.f32 %v3881, %v950
        %v3890 = vmul.f32 %v3882, %v950
        %v3891 = vsel %vm815, %v3883, 0.0
        %3892 = vadd.xlane.f32.xlu0 %v3891
        %v3893 = vpop.xlane.xlu0 %3892
        %v3894 = vsel %vm815, %v3884, 0.0
        %3895 = vadd.xlane.f32.xlu0 %v3894
        %v3896 = vpop.xlane.xlu0 %3895
        %v3897 = vsel %vm815, %v3885, 0.0
        %3898 = vadd.xlane.f32.xlu0 %v3897
        %v3899 = vpop.xlane.xlu0 %3898
        %v3900 = vsel %vm815, %v3886, 0.0
        %3901 = vadd.xlane.f32.xlu0 %v3900
        %v3902 = vpop.xlane.xlu0 %3901
        %v3903 = vsel %vm815, %v3887, 0.0
        %3904 = vadd.xlane.f32.xlu0 %v3903
        %v3905 = vpop.xlane.xlu0 %3904
        %v3906 = vsel %vm815, %v3888, 0.0
        %3907 = vadd.xlane.f32.xlu0 %v3906
        %v3908 = vpop.xlane.xlu0 %3907
        %v3909 = vsel %vm815, %v3889, 0.0
        %3910 = vadd.xlane.f32.xlu0 %v3909
        %v3911 = vpop.xlane.xlu0 %3910
        %v3912 = vsel %vm815, %v3890, 0.0
        %3913 = vadd.xlane.f32.xlu0 %v3912
        %v3914 = vpop.xlane.xlu0 %3913
        %v3923 = vlaneseq
        %v3924 = vshrl.u32 %v3923, 7
        %v3925 = vsub.s32 %v1202, %v3924
        %v3926 = vrot.slane %v3893, %v3925
        %v3927 = vlaneseq
        %v3928 = vshrl.u32 %v3927, 7
        %v3929 = vsub.s32 %v1202, %v3928
        %v3930 = vrot.slane %v3896, %v3929
        %v3931 = vlaneseq
        %v3932 = vshrl.u32 %v3931, 7
        %v3933 = vsub.s32 %v1202, %v3932
        %v3934 = vrot.slane %v3899, %v3933
        %v3935 = vlaneseq
        %v3936 = vshrl.u32 %v3935, 7
        %v3937 = vsub.s32 %v1202, %v3936
        %v3938 = vrot.slane %v3902, %v3937
        %v3939 = vlaneseq
        %v3940 = vshrl.u32 %v3939, 7
        %v3941 = vsub.s32 %v1202, %v3940
        %v3942 = vrot.slane %v3905, %v3941
        %v3943 = vlaneseq
        %v3944 = vshrl.u32 %v3943, 7
        %v3945 = vsub.s32 %v1202, %v3944
        %v3946 = vrot.slane %v3908, %v3945
        %v3947 = vlaneseq
        %v3948 = vshrl.u32 %v3947, 7
        %v3949 = vsub.s32 %v1202, %v3948
        %v3950 = vrot.slane %v3911, %v3949
        %v3951 = vlaneseq
        %v3952 = vshrl.u32 %v3951, 7
        %v3953 = vsub.s32 %v1202, %v3952
        %v3954 = vrot.slane %v3914, %v3953
        %v3955 = vsel %vm1235, %v3930, %v3926
        %v3956 = vsel %vm1237, %v3934, %v3955
        %v3957 = vsel %vm1239, %v3938, %v3956
        %v3958 = vsel %vm1241, %v3942, %v3957
        %v3959 = vsel %vm1243, %v3946, %v3958
        %v3960 = vsel %vm1245, %v3950, %v3959
        %v3961 = vsel %vm1247, %v3954, %v3960
        %v3963 = vsel %vm1250, %v3961, -inf
        %3964 = vmax.xlane.f32.xlu0 %v3963
        %v3965 = vpop.xlane.xlu0 %3964
        %v3967 = vlaneseq
        %v3968 = vshrl.u32 %v3967, 7
        %v3969 = vsub.s32 0, %v3968
        %v3970 = vrot.slane %v3965, %v3969
        %v3971 = vlaneseq
        %v3972 = vshrl.u32 %v3971, 7
        %v3973 = vsub.s32 1, %v3972
        %v3974 = vrot.slane %v3965, %v3973
        %v3975 = vlaneseq
        %v3976 = vshrl.u32 %v3975, 7
        %v3977 = vsub.s32 2, %v3976
        %v3978 = vrot.slane %v3965, %v3977
        %v3979 = vlaneseq
        %v3980 = vshrl.u32 %v3979, 7
        %v3981 = vsub.s32 3, %v3980
        %v3982 = vrot.slane %v3965, %v3981
        %v3983 = vlaneseq
        %v3984 = vshrl.u32 %v3983, 7
        %v3985 = vsub.s32 4, %v3984
        %v3986 = vrot.slane %v3965, %v3985
        %v3987 = vlaneseq
        %v3988 = vshrl.u32 %v3987, 7
        %v3989 = vsub.s32 5, %v3988
        %v3990 = vrot.slane %v3965, %v3989
        %v3991 = vlaneseq
        %v3992 = vshrl.u32 %v3991, 7
        %v3993 = vsub.s32 6, %v3992
        %v3994 = vrot.slane %v3965, %v3993
        %v3995 = vlaneseq
        %v3996 = vshrl.u32 %v3995, 7
        %v3997 = vsub.s32 7, %v3996
        %v3998 = vrot.slane %v3965, %v3997
        %v4007 = vsub.f32 %v3893, %v3970
        %v4008 = vsub.f32 %v3896, %v3974
        %v4009 = vsub.f32 %v3899, %v3978
        %v4010 = vsub.f32 %v3902, %v3982
        %v4011 = vsub.f32 %v3905, %v3986
        %v4012 = vsub.f32 %v3908, %v3990
        %v4013 = vsub.f32 %v3911, %v3994
        %v4014 = vsub.f32 %v3914, %v3998
        %v4015 = vmul.f32 %v4007, 1.442695
        %v4016 = vpow.pop %v4015
        %v4017 = vmul.f32 %v4008, 1.442695
        %v4018 = vpow.pop %v4017
        %v4019 = vmul.f32 %v4009, 1.442695
        %v4020 = vpow.pop %v4019
        %v4021 = vmul.f32 %v4010, 1.442695
        %v4022 = vpow.pop %v4021
        %v4023 = vmul.f32 %v4011, 1.442695
        %v4024 = vpow.pop %v4023
        %v4025 = vmul.f32 %v4012, 1.442695
        %v4026 = vpow.pop %v4025
        %v4027 = vmul.f32 %v4013, 1.442695
        %v4028 = vpow.pop %v4027
        %v4029 = vmul.f32 %v4014, 1.442695
        %v4030 = vpow.pop %v4029
        %4039 = vset.pattern.permute.xlu0 0
        %4040 = vperm.xlu0 %4039, %v4016
        %v4041 = vpop.permute.xlu0 %4040
        %4042 = vset.pattern.permute.xlu0 0
        %4043 = vperm.xlu0 %4042, %v4018
        %v4044 = vpop.permute.xlu0 %4043
        %4045 = vset.pattern.permute.xlu0 0
        %4046 = vperm.xlu0 %4045, %v4020
        %v4047 = vpop.permute.xlu0 %4046
        %4048 = vset.pattern.permute.xlu0 0
        %4049 = vperm.xlu0 %4048, %v4022
        %v4050 = vpop.permute.xlu0 %4049
        %4051 = vset.pattern.permute.xlu0 0
        %4052 = vperm.xlu0 %4051, %v4024
        %v4053 = vpop.permute.xlu0 %4052
        %4054 = vset.pattern.permute.xlu0 0
        %4055 = vperm.xlu0 %4054, %v4026
        %v4056 = vpop.permute.xlu0 %4055
        %4057 = vset.pattern.permute.xlu0 0
        %4058 = vperm.xlu0 %4057, %v4028
        %v4059 = vpop.permute.xlu0 %4058
        %4060 = vset.pattern.permute.xlu0 0
        %4061 = vperm.xlu0 %4060, %v4030
        %v4062 = vpop.permute.xlu0 %4061
        %v4063 = vlaneseq
        %v4064 = vshrl.u32 %v4063, 7
        %v4065 = vsub.s32 %v1202, %v4064
        %v4066 = vrot.slane %v4041, %v4065
        %v4067 = vlaneseq
        %v4068 = vshrl.u32 %v4067, 7
        %v4069 = vsub.s32 %v1202, %v4068
        %v4070 = vrot.slane %v4044, %v4069
        %v4071 = vlaneseq
        %v4072 = vshrl.u32 %v4071, 7
        %v4073 = vsub.s32 %v1202, %v4072
        %v4074 = vrot.slane %v4047, %v4073
        %v4075 = vlaneseq
        %v4076 = vshrl.u32 %v4075, 7
        %v4077 = vsub.s32 %v1202, %v4076
        %v4078 = vrot.slane %v4050, %v4077
        %v4079 = vlaneseq
        %v4080 = vshrl.u32 %v4079, 7
        %v4081 = vsub.s32 %v1202, %v4080
        %v4082 = vrot.slane %v4053, %v4081
        %v4083 = vlaneseq
        %v4084 = vshrl.u32 %v4083, 7
        %v4085 = vsub.s32 %v1202, %v4084
        %v4086 = vrot.slane %v4056, %v4085
        %v4087 = vlaneseq
        %v4088 = vshrl.u32 %v4087, 7
        %v4089 = vsub.s32 %v1202, %v4088
        %v4090 = vrot.slane %v4059, %v4089
        %v4091 = vlaneseq
        %v4092 = vshrl.u32 %v4091, 7
        %v4093 = vsub.s32 %v1202, %v4092
        %v4094 = vrot.slane %v4062, %v4093
        %v4095 = vsel %vm1235, %v4070, %v4066
        %v4096 = vsel %vm1237, %v4074, %v4095
        %v4097 = vsel %vm1239, %v4078, %v4096
        %v4098 = vsel %vm1241, %v4082, %v4097
        %v4099 = vsel %vm1243, %v4086, %v4098
        %v4100 = vsel %vm1245, %v4090, %v4099
        %v4101 = vsel %vm1247, %v4094, %v4100
        %v4103 = vsel %vm1250, %v4101, 0.0
        %4104 = vadd.xlane.f32.xlu0 %v4103
        %v4105 = vpop.xlane.xlu0 %4104
        %v4106 = vrcp.pop %v4105
        %v4108 = vlaneseq
        %v4109 = vshrl.u32 %v4108, 7
        %v4110 = vsub.s32 0, %v4109
        %v4111 = vrot.slane %v4106, %v4110
        %v4112 = vlaneseq
        %v4113 = vshrl.u32 %v4112, 7
        %v4114 = vsub.s32 1, %v4113
        %v4115 = vrot.slane %v4106, %v4114
        %v4116 = vlaneseq
        %v4117 = vshrl.u32 %v4116, 7
        %v4118 = vsub.s32 2, %v4117
        %v4119 = vrot.slane %v4106, %v4118
        %v4120 = vlaneseq
        %v4121 = vshrl.u32 %v4120, 7
        %v4122 = vsub.s32 3, %v4121
        %v4123 = vrot.slane %v4106, %v4122
        %v4124 = vlaneseq
        %v4125 = vshrl.u32 %v4124, 7
        %v4126 = vsub.s32 4, %v4125
        %v4127 = vrot.slane %v4106, %v4126
        %v4128 = vlaneseq
        %v4129 = vshrl.u32 %v4128, 7
        %v4130 = vsub.s32 5, %v4129
        %v4131 = vrot.slane %v4106, %v4130
        %v4132 = vlaneseq
        %v4133 = vshrl.u32 %v4132, 7
        %v4134 = vsub.s32 6, %v4133
        %v4135 = vrot.slane %v4106, %v4134
        %v4136 = vlaneseq
        %v4137 = vshrl.u32 %v4136, 7
        %v4138 = vsub.s32 7, %v4137
        %v4139 = vrot.slane %v4106, %v4138
        %v4148 = vmul.f32 %v4016, %v4111
        %v4149 = vmul.f32 %v4018, %v4115
        %v4150 = vmul.f32 %v4020, %v4119
        %v4151 = vmul.f32 %v4022, %v4123
        %v4152 = vmul.f32 %v4024, %v4127
        %v4153 = vmul.f32 %v4026, %v4131
        %v4154 = vmul.f32 %v4028, %v4135
        %v4155 = vmul.f32 %v4030, %v4139
        %4164 = vset.pattern.permute.xlu0 0
        %4165 = vperm.xlu0 %4164, %v4148
        %v4166 = vpop.permute.xlu0 %4165
        %4167 = vset.pattern.permute.xlu0 0
        %4168 = vperm.xlu0 %4167, %v4149
        %v4169 = vpop.permute.xlu0 %4168
        %4170 = vset.pattern.permute.xlu0 0
        %4171 = vperm.xlu0 %4170, %v4150
        %v4172 = vpop.permute.xlu0 %4171
        %4173 = vset.pattern.permute.xlu0 0
        %4174 = vperm.xlu0 %4173, %v4151
        %v4175 = vpop.permute.xlu0 %4174
        %4176 = vset.pattern.permute.xlu0 0
        %4177 = vperm.xlu0 %4176, %v4152
        %v4178 = vpop.permute.xlu0 %4177
        %4179 = vset.pattern.permute.xlu0 0
        %4180 = vperm.xlu0 %4179, %v4153
        %v4181 = vpop.permute.xlu0 %4180
        %4182 = vset.pattern.permute.xlu0 0
        %4183 = vperm.xlu0 %4182, %v4154
        %v4184 = vpop.permute.xlu0 %4183
        %4185 = vset.pattern.permute.xlu0 0
        %4186 = vperm.xlu0 %4185, %v4155
        %v4187 = vpop.permute.xlu0 %4186
        %v4188 = vlaneseq
        %v4189 = vshrl.u32 %v4188, 7
        %v4190 = vsub.s32 %v1202, %v4189
        %v4191 = vrot.slane %v4166, %v4190
        %v4192 = vlaneseq
        %v4193 = vshrl.u32 %v4192, 7
        %v4194 = vsub.s32 %v1202, %v4193
        %v4195 = vrot.slane %v4169, %v4194
        %v4196 = vlaneseq
        %v4197 = vshrl.u32 %v4196, 7
        %v4198 = vsub.s32 %v1202, %v4197
        %v4199 = vrot.slane %v4172, %v4198
        %v4200 = vlaneseq
        %v4201 = vshrl.u32 %v4200, 7
        %v4202 = vsub.s32 %v1202, %v4201
        %v4203 = vrot.slane %v4175, %v4202
        %v4204 = vlaneseq
        %v4205 = vshrl.u32 %v4204, 7
        %v4206 = vsub.s32 %v1202, %v4205
        %v4207 = vrot.slane %v4178, %v4206
        %v4208 = vlaneseq
        %v4209 = vshrl.u32 %v4208, 7
        %v4210 = vsub.s32 %v1202, %v4209
        %v4211 = vrot.slane %v4181, %v4210
        %v4212 = vlaneseq
        %v4213 = vshrl.u32 %v4212, 7
        %v4214 = vsub.s32 %v1202, %v4213
        %v4215 = vrot.slane %v4184, %v4214
        %v4216 = vlaneseq
        %v4217 = vshrl.u32 %v4216, 7
        %v4218 = vsub.s32 %v1202, %v4217
        %v4219 = vrot.slane %v4187, %v4218
        %v4220 = vsel %vm1235, %v4195, %v4191
        %v4221 = vsel %vm1237, %v4199, %v4220
        %v4222 = vsel %vm1239, %v4203, %v4221
        %v4223 = vsel %vm1241, %v4207, %v4222
        %v4224 = vsel %vm1243, %v4211, %v4223
        %v4225 = vsel %vm1245, %v4215, %v4224
        %v4226 = vsel %vm1247, %v4219, %v4225
        %s4228 = scalar_lea.vmem %s793, 24 [#allocation23]
        %4229 = vst.msk [vmem:[%s4228] sm:$0xff] %vm1250, %v4226
        %v4238 = vmul.f32 %v4166, %v796
        %v4239 = vmul.f32 %v4169, %v797
        %v4240 = vmul.f32 %v4172, %v798
        %v4241 = vmul.f32 %v4175, %v799
        %v4242 = vmul.f32 %v4178, %v800
        %v4243 = vmul.f32 %v4181, %v801
        %v4244 = vmul.f32 %v4184, %v802
        %v4245 = vmul.f32 %v4187, %v803
        %v4246 = vsel %vm815, %v4238, 0.0
        %v4247 = vrot.slane %v4246, 4
        %v4248 = vadd.f32 %v4246, %v4247
        %v4249 = vrot.slane %v4248, 2
        %v4250 = vadd.f32 %v4248, %v4249
        %v4251 = vrot.slane %v4250, 1
        %v4252 = vadd.f32 %v4250, %v4251
        %v4253 = vsel %vm815, %v4239, 0.0
        %v4254 = vrot.slane %v4253, 4
        %v4255 = vadd.f32 %v4253, %v4254
        %v4256 = vrot.slane %v4255, 2
        %v4257 = vadd.f32 %v4255, %v4256
        %v4258 = vrot.slane %v4257, 1
        %v4259 = vadd.f32 %v4257, %v4258
        %v4260 = vsel %vm815, %v4240, 0.0
        %v4261 = vrot.slane %v4260, 4
        %v4262 = vadd.f32 %v4260, %v4261
        %v4263 = vrot.slane %v4262, 2
        %v4264 = vadd.f32 %v4262, %v4263
        %v4265 = vrot.slane %v4264, 1
        %v4266 = vadd.f32 %v4264, %v4265
        %v4267 = vsel %vm815, %v4241, 0.0
        %v4268 = vrot.slane %v4267, 4
        %v4269 = vadd.f32 %v4267, %v4268
        %v4270 = vrot.slane %v4269, 2
        %v4271 = vadd.f32 %v4269, %v4270
        %v4272 = vrot.slane %v4271, 1
        %v4273 = vadd.f32 %v4271, %v4272
        %v4274 = vsel %vm815, %v4242, 0.0
        %v4275 = vrot.slane %v4274, 4
        %v4276 = vadd.f32 %v4274, %v4275
        %v4277 = vrot.slane %v4276, 2
        %v4278 = vadd.f32 %v4276, %v4277
        %v4279 = vrot.slane %v4278, 1
        %v4280 = vadd.f32 %v4278, %v4279
        %v4281 = vsel %vm815, %v4243, 0.0
        %v4282 = vrot.slane %v4281, 4
        %v4283 = vadd.f32 %v4281, %v4282
        %v4284 = vrot.slane %v4283, 2
        %v4285 = vadd.f32 %v4283, %v4284
        %v4286 = vrot.slane %v4285, 1
        %v4287 = vadd.f32 %v4285, %v4286
        %v4288 = vsel %vm815, %v4244, 0.0
        %v4289 = vrot.slane %v4288, 4
        %v4290 = vadd.f32 %v4288, %v4289
        %v4291 = vrot.slane %v4290, 2
        %v4292 = vadd.f32 %v4290, %v4291
        %v4293 = vrot.slane %v4292, 1
        %v4294 = vadd.f32 %v4292, %v4293
        %v4295 = vsel %vm815, %v4245, 0.0
        %v4296 = vrot.slane %v4295, 4
        %v4297 = vadd.f32 %v4295, %v4296
        %v4298 = vrot.slane %v4297, 2
        %v4299 = vadd.f32 %v4297, %v4298
        %v4300 = vrot.slane %v4299, 1
        %v4301 = vadd.f32 %v4299, %v4300
        %v4302 = vpack.c.bf16 %v4252, %v4252
        %v4303 = vpack.c.bf16 %v4259, %v4259
        %v4304 = vpack.c.bf16 %v4266, %v4266
        %v4305 = vpack.c.bf16 %v4273, %v4273
        %v4306 = vpack.c.bf16 %v4280, %v4280
        %v4307 = vpack.c.bf16 %v4287, %v4287
        %v4308 = vpack.c.bf16 %v4294, %v4294
        %v4309 = vpack.c.bf16 %v4301, %v4301
        %v4318 = vunpack.c.l.b16 %v4302
        %v4319 = vunpack.c.l.b16 %v4303
        %v4320 = vunpack.c.l.b16 %v4304
        %v4321 = vunpack.c.l.b16 %v4305
        %v4322 = vunpack.c.l.b16 %v4306
        %v4323 = vunpack.c.l.b16 %v4307
        %v4324 = vunpack.c.l.b16 %v4308
        %v4325 = vunpack.c.l.b16 %v4309
        %v4326 = vsel %vm1235, %v4319, %v4318
        %v4327 = vsel %vm1237, %v4320, %v4326
        %v4328 = vsel %vm1239, %v4321, %v4327
        %v4329 = vsel %vm1241, %v4322, %v4328
        %v4330 = vsel %vm1243, %v4323, %v4329
        %v4331 = vsel %vm1245, %v4324, %v4330
        %v4332 = vsel %vm1247, %v4325, %v4331
        %v4333 = vpack.c.b16 %v4332, %v4332
        %v4335 = vsel %vm815, %v4333, 0
        %4337 = vmatprep.subr.bf16.mxu0 0
        %4338 = vmatpush1.bf16.msra.mxu0 %v1629
        %4339 = vmatprep.subr.bf16.mxu0 0
        %4340 = vmatpush1.bf16.msra.mxu0 %v1630
        %4341 = vmatprep.subr.bf16.mxu0 0
        %4342 = vmatpush1.bf16.msra.mxu0 0
        %4343 = vmatprep.subr.bf16.mxu0 0
        %4344 = vmatpush1.bf16.msra.mxu0 0
        %4345 = vmatprep.subr.bf16.mxu0 0
        %4346 = vmatpush1.bf16.msra.mxu0 0
        %4347 = vmatprep.subr.bf16.mxu0 0
        %4348 = vmatpush1.bf16.msra.mxu0 0
        %4349 = vmatprep.subr.bf16.mxu0 0
        %4350 = vmatpush1.bf16.msra.mxu0 0
        %4351 = vmatprep.subr.bf16.mxu0 0
        %4352 = vmatpush1.bf16.msra.mxu0 0
        %4353 = vmatprep.subr.bf16.mxu0 0
        %4354 = vmatpush1.bf16.msra.mxu0 0
        %4355 = vmatprep.subr.bf16.mxu0 0
        %4356 = vmatpush1.bf16.msra.mxu0 0
        %4357 = vmatprep.subr.bf16.mxu0 0
        %4358 = vmatpush1.bf16.msra.mxu0 0
        %4359 = vmatprep.subr.bf16.mxu0 0
        %4360 = vmatpush1.bf16.msra.mxu0 0
        %4361 = vmatprep.subr.bf16.mxu0 0
        %4362 = vmatpush1.bf16.msra.mxu0 0
        %4363 = vmatprep.subr.bf16.mxu0 0
        %4364 = vmatpush1.bf16.msra.mxu0 0
        %4365 = vmatprep.subr.bf16.mxu0 0
        %4366 = vmatpush1.bf16.msra.mxu0 0
        %4367 = vmatprep.subr.bf16.mxu0 0
        %4368 = vmatpush1.bf16.msra.mxu0 0
        %4369 = vmatprep.mubr.bf16.mxu0 0
        %4370 = vmatmul.mubr.bf16.gmra.mrb[0].mxu0 %v4335
        %v4371 = vpop.f32.mrb[0].mxu0
        %v4372 = vadd.f32 0.0, %v4371
        %v4373 = vpop.f32.mrb[0].mxu0
        %v4374 = vpop.f32.mrb[0].mxu0
        %v4375 = vpop.f32.mrb[0].mxu0
        %4376 = vdwg.mxu0
        %v4378 = vsel %vm1682, %v3736, 0
        %4380 = vmatprep.subr.bf16.mxu0 0
        %4381 = vmatpush1.bf16.msra.mxu0 %v1680
        %4382 = vmatprep.subr.bf16.mxu0 0
        %4383 = vmatpush1.bf16.msra.mxu0 0
        %4384 = vmatprep.subr.bf16.mxu0 0
        %4385 = vmatpush1.bf16.msra.mxu0 0
        %4386 = vmatprep.subr.bf16.mxu0 0
        %4387 = vmatpush1.bf16.msra.mxu0 0
        %4388 = vmatprep.subr.bf16.mxu0 0
        %4389 = vmatpush1.bf16.msra.mxu0 0
        %4390 = vmatprep.subr.bf16.mxu0 0
        %4391 = vmatpush1.bf16.msra.mxu0 0
        %4392 = vmatprep.subr.bf16.mxu0 0
        %4393 = vmatpush1.bf16.msra.mxu0 0
        %4394 = vmatprep.subr.bf16.mxu0 0
        %4395 = vmatpush1.bf16.msra.mxu0 0
        %4396 = vmatprep.subr.bf16.mxu0 0
        %4397 = vmatpush1.bf16.msra.mxu0 0
        %4398 = vmatprep.subr.bf16.mxu0 0
        %4399 = vmatpush1.bf16.msra.mxu0 0
        %4400 = vmatprep.subr.bf16.mxu0 0
        %4401 = vmatpush1.bf16.msra.mxu0 0
        %4402 = vmatprep.subr.bf16.mxu0 0
        %4403 = vmatpush1.bf16.msra.mxu0 0
        %4404 = vmatprep.subr.bf16.mxu0 0
        %4405 = vmatpush1.bf16.msra.mxu0 0
        %4406 = vmatprep.subr.bf16.mxu0 0
        %4407 = vmatpush1.bf16.msra.mxu0 0
        %4408 = vmatprep.subr.bf16.mxu0 0
        %4409 = vmatpush1.bf16.msra.mxu0 0
        %4410 = vmatprep.subr.bf16.mxu0 0
        %4411 = vmatpush1.bf16.msra.mxu0 0
        %4412 = vmatprep.mubr.bf16.mxu0 0
        %4413 = vmatmul.mubr.bf16.gmra.mrb[0].mxu0 %v4378
        %v4414 = vpop.f32.mrb[0].mxu0
        %v4415 = vadd.f32 %v4372, %v4414
        %v4416 = vpop.f32.mrb[0].mxu0
        %v4417 = vpop.f32.mrb[0].mxu0
        %v4418 = vpop.f32.mrb[0].mxu0
        %4419 = vdwg.mxu0
        %v4420 = vadd.f32 %v4415, %v957
        %4421 = vmatprep.subr.bf16.mxu0 0
        %4422 = vmatpush1.bf16.msra.mxu0 %v1735
        %4423 = vmatprep.subr.bf16.mxu0 0
        %4424 = vmatpush1.bf16.msra.mxu0 %v1736
        %4425 = vmatprep.subr.bf16.mxu0 0
        %4426 = vmatpush1.bf16.msra.mxu0 0
        %4427 = vmatprep.subr.bf16.mxu0 0
        %4428 = vmatpush1.bf16.msra.mxu0 0
        %4429 = vmatprep.subr.bf16.mxu0 0
        %4430 = vmatpush1.bf16.msra.mxu0 0
        %4431 = vmatprep.subr.bf16.mxu0 0
        %4432 = vmatpush1.bf16.msra.mxu0 0
        %4433 = vmatprep.subr.bf16.mxu0 0
        %4434 = vmatpush1.bf16.msra.mxu0 0
        %4435 = vmatprep.subr.bf16.mxu0 0
        %4436 = vmatpush1.bf16.msra.mxu0 0
        %4437 = vmatprep.subr.bf16.mxu0 0
        %4438 = vmatpush1.bf16.msra.mxu0 0
        %4439 = vmatprep.subr.bf16.mxu0 0
        %4440 = vmatpush1.bf16.msra.mxu0 0
        %4441 = vmatprep.subr.bf16.mxu0 0
        %4442 = vmatpush1.bf16.msra.mxu0 0
        %4443 = vmatprep.subr.bf16.mxu0 0
        %4444 = vmatpush1.bf16.msra.mxu0 0
        %4445 = vmatprep.subr.bf16.mxu0 0
        %4446 = vmatpush1.bf16.msra.mxu0 0
        %4447 = vmatprep.subr.bf16.mxu0 0
        %4448 = vmatpush1.bf16.msra.mxu0 0
        %4449 = vmatprep.subr.bf16.mxu0 0
        %4450 = vmatpush1.bf16.msra.mxu0 0
        %4451 = vmatprep.subr.bf16.mxu0 0
        %4452 = vmatpush1.bf16.msra.mxu0 0
        %4453 = vmatprep.mubr.bf16.mxu0 0
        %4454 = vmatmul.mubr.bf16.gmra.mrb[0].mxu0 %v3649
        %v4455 = vpop.f32.mrb[0].mxu0
        %v4456 = vadd.f32 %v964, %v4455
        %v4457 = vpop.f32.mrb[0].mxu0
        %v4458 = vpop.f32.mrb[0].mxu0
        %v4459 = vpop.f32.mrb[0].mxu0
        %4460 = vdwg.mxu0
        %v4461 = vadd.f32 %v4420, %v4456
        %v4462 = vxor.u32 %v4461, 2147483648
        %v4463 = vmul.f32 %v4462, 1.442695
        %v4464 = vpow.pop %v4463
        %v4465 = vadd.f32 %v4464, 1.0
        %v4466 = vrcp.pop %v4465
        %v4467 = vmul.f32 1.0, %v4466
        %4469 = vrot.lane.b32.xlu0 %v4456, 64
        %v4470 = vpop.permute.xlu0 %4469
        %v4472 = vmul.f32 %v4467, %v4470
        %4474 = vrot.lane.b32.xlu0 %v4472, 64
        %v4475 = vpop.permute.xlu0 %4474
        %v4477 = vadd.f32 %v4420, %v4475
        %v4478 = vtanh.pop %v4477
        %v4479 = vsub.f32 1.0, %v4467
        %4481 = vrot.lane.b32.xlu0 %v4478, 96
        %v4482 = vpop.permute.xlu0 %4481
        %v4484 = vmul.f32 %v4479, %v4482
        %v4485 = vmul.f32 %v4467, %v3603
        %v4486 = vadd.f32 %v4484, %v4485
        %v4487 = vpack.c.bf16 %v4486, %v4486
        %4488 = vmatprep.subr.bf16.mxu0 0
        %4489 = vmatpush1.bf16.msra.mxu0 %v1818
        %4490 = vmatprep.subr.bf16.mxu0 0
        %4491 = vmatpush1.bf16.msra.mxu0 %v1819
        %4492 = vmatprep.subr.bf16.mxu0 0
        %4493 = vmatpush1.bf16.msra.mxu0 0
        %4494 = vmatprep.subr.bf16.mxu0 0
        %4495 = vmatpush1.bf16.msra.mxu0 0
        %4496 = vmatprep.subr.bf16.mxu0 0
        %4497 = vmatpush1.bf16.msra.mxu0 0
        %4498 = vmatprep.subr.bf16.mxu0 0
        %4499 = vmatpush1.bf16.msra.mxu0 0
        %4500 = vmatprep.subr.bf16.mxu0 0
        %4501 = vmatpush1.bf16.msra.mxu0 0
        %4502 = vmatprep.subr.bf16.mxu0 0
        %4503 = vmatpush1.bf16.msra.mxu0 0
        %4504 = vmatprep.subr.bf16.mxu0 0
        %4505 = vmatpush1.bf16.msra.mxu0 0
        %4506 = vmatprep.subr.bf16.mxu0 0
        %4507 = vmatpush1.bf16.msra.mxu0 0
        %4508 = vmatprep.subr.bf16.mxu0 0
        %4509 = vmatpush1.bf16.msra.mxu0 0
        %4510 = vmatprep.subr.bf16.mxu0 0
        %4511 = vmatpush1.bf16.msra.mxu0 0
        %4512 = vmatprep.subr.bf16.mxu0 0
        %4513 = vmatpush1.bf16.msra.mxu0 0
        %4514 = vmatprep.subr.bf16.mxu0 0
        %4515 = vmatpush1.bf16.msra.mxu0 0
        %4516 = vmatprep.subr.bf16.mxu0 0
        %4517 = vmatpush1.bf16.msra.mxu0 0
        %4518 = vmatprep.subr.bf16.mxu0 0
        %4519 = vmatpush1.bf16.msra.mxu0 0
        %4520 = vmatprep.mubr.bf16.mxu0 0
        %4521 = vmatmul.mubr.bf16.gmra.mrb[0].mxu0 %v4335
        %v4522 = vpop.f32.mrb[0].mxu0
        %v4523 = vadd.f32 0.0, %v4522
        %v4524 = vpop.f32.mrb[0].mxu0
        %v4525 = vpop.f32.mrb[0].mxu0
        %v4526 = vpop.f32.mrb[0].mxu0
        %4527 = vdwg.mxu0
        %4529 = vrot.lane.b32.xlu0 %v4487, 96
        %v4530 = vpop.permute.xlu0 %4529
        %v4532 = vsel %vm815, %v4530, 0
        %4534 = vmatprep.subr.bf16.mxu0 0
        %4535 = vmatpush1.bf16.msra.mxu0 %v1873
        %4536 = vmatprep.subr.bf16.mxu0 0
        %4537 = vmatpush1.bf16.msra.mxu0 %v1874
        %4538 = vmatprep.subr.bf16.mxu0 0
        %4539 = vmatpush1.bf16.msra.mxu0 0
        %4540 = vmatprep.subr.bf16.mxu0 0
        %4541 = vmatpush1.bf16.msra.mxu0 0
        %4542 = vmatprep.subr.bf16.mxu0 0
        %4543 = vmatpush1.bf16.msra.mxu0 0
        %4544 = vmatprep.subr.bf16.mxu0 0
        %4545 = vmatpush1.bf16.msra.mxu0 0
        %4546 = vmatprep.subr.bf16.mxu0 0
        %4547 = vmatpush1.bf16.msra.mxu0 0
        %4548 = vmatprep.subr.bf16.mxu0 0
        %4549 = vmatpush1.bf16.msra.mxu0 0
        %4550 = vmatprep.subr.bf16.mxu0 0
        %4551 = vmatpush1.bf16.msra.mxu0 0
        %4552 = vmatprep.subr.bf16.mxu0 0
        %4553 = vmatpush1.bf16.msra.mxu0 0
        %4554 = vmatprep.subr.bf16.mxu0 0
        %4555 = vmatpush1.bf16.msra.mxu0 0
        %4556 = vmatprep.subr.bf16.mxu0 0
        %4557 = vmatpush1.bf16.msra.mxu0 0
        %4558 = vmatprep.subr.bf16.mxu0 0
        %4559 = vmatpush1.bf16.msra.mxu0 0
        %4560 = vmatprep.subr.bf16.mxu0 0
        %4561 = vmatpush1.bf16.msra.mxu0 0
        %4562 = vmatprep.subr.bf16.mxu0 0
        %4563 = vmatpush1.bf16.msra.mxu0 0
        %4564 = vmatprep.subr.bf16.mxu0 0
        %4565 = vmatpush1.bf16.msra.mxu0 0
        %4566 = vmatprep.mubr.bf16.mxu0 0
        %4567 = vmatmul.mubr.bf16.gmra.mrb[0].mxu0 %v4532
        %v4568 = vpop.f32.mrb[0].mxu0
        %v4569 = vadd.f32 %v4523, %v4568
        %v4570 = vpop.f32.mrb[0].mxu0
        %v4571 = vpop.f32.mrb[0].mxu0
        %v4572 = vpop.f32.mrb[0].mxu0
        %4573 = vdwg.mxu0
        %4574 = vmatprep.subr.bf16.mxu0 0
        %4575 = vmatpush1.bf16.msra.mxu0 %v1924
        %4576 = vmatprep.subr.bf16.mxu0 0
        %4577 = vmatpush1.bf16.msra.mxu0 0
        %4578 = vmatprep.subr.bf16.mxu0 0
        %4579 = vmatpush1.bf16.msra.mxu0 0
        %4580 = vmatprep.subr.bf16.mxu0 0
        %4581 = vmatpush1.bf16.msra.mxu0 0
        %4582 = vmatprep.subr.bf16.mxu0 0
        %4583 = vmatpush1.bf16.msra.mxu0 0
        %4584 = vmatprep.subr.bf16.mxu0 0
        %4585 = vmatpush1.bf16.msra.mxu0 0
        %4586 = vmatprep.subr.bf16.mxu0 0
        %4587 = vmatpush1.bf16.msra.mxu0 0
        %4588 = vmatprep.subr.bf16.mxu0 0
        %4589 = vmatpush1.bf16.msra.mxu0 0
        %4590 = vmatprep.subr.bf16.mxu0 0
        %4591 = vmatpush1.bf16.msra.mxu0 0
        %4592 = vmatprep.subr.bf16.mxu0 0
        %4593 = vmatpush1.bf16.msra.mxu0 0
        %4594 = vmatprep.subr.bf16.mxu0 0
        %4595 = vmatpush1.bf16.msra.mxu0 0
        %4596 = vmatprep.subr.bf16.mxu0 0
        %4597 = vmatpush1.bf16.msra.mxu0 0
        %4598 = vmatprep.subr.bf16.mxu0 0
        %4599 = vmatpush1.bf16.msra.mxu0 0
        %4600 = vmatprep.subr.bf16.mxu0 0
        %4601 = vmatpush1.bf16.msra.mxu0 0
        %4602 = vmatprep.subr.bf16.mxu0 0
        %4603 = vmatpush1.bf16.msra.mxu0 0
        %4604 = vmatprep.subr.bf16.mxu0 0
        %4605 = vmatpush1.bf16.msra.mxu0 0
        %4606 = vmatprep.mubr.bf16.mxu0 0
        %4607 = vmatmul.mubr.bf16.gmra.mrb[0].mxu0 %v4378
        %v4608 = vpop.f32.mrb[0].mxu0
        %v4609 = vadd.f32 0.0, %v4608
        %v4610 = vpop.f32.mrb[0].mxu0
        %v4611 = vpop.f32.mrb[0].mxu0
        %v4612 = vpop.f32.mrb[0].mxu0
        %4613 = vdwg.mxu0
        %v4614 = vadd.f32 %v4569, %v4609
        %v4615 = vadd.f32 %v4614, %v971
        %s4616 = scalar_lea.vmem %s780, 24 [#allocation20]
        %4617 = vst [vmem:[%s4616] sm:$0xff] %v4615
        %s4618 = scalar_lea.vmem %s672, 16 [#allocation2]
        %v4619 = vld [vmem:[%s4618] sm:$0xf]
        %4620 = vmatprep.subr.bf16.mxu0 0
        %4621 = vmatpush1.bf16.msra.mxu0 %v1008
        %4622 = vmatprep.subr.bf16.mxu0 0
        %4623 = vmatpush1.bf16.msra.mxu0 %v1009
        %4624 = vmatprep.subr.bf16.mxu0 0
        %4625 = vmatpush1.bf16.msra.mxu0 0
        %4626 = vmatprep.subr.bf16.mxu0 0
        %4627 = vmatpush1.bf16.msra.mxu0 0
        %4628 = vmatprep.subr.bf16.mxu0 0
        %4629 = vmatpush1.bf16.msra.mxu0 0
        %4630 = vmatprep.subr.bf16.mxu0 0
        %4631 = vmatpush1.bf16.msra.mxu0 0
        %4632 = vmatprep.subr.bf16.mxu0 0
        %4633 = vmatpush1.bf16.msra.mxu0 0
        %4634 = vmatprep.subr.bf16.mxu0 0
        %4635 = vmatpush1.bf16.msra.mxu0 0
        %4636 = vmatprep.subr.bf16.mxu0 0
        %4637 = vmatpush1.bf16.msra.mxu0 0
        %4638 = vmatprep.subr.bf16.mxu0 0
        %4639 = vmatpush1.bf16.msra.mxu0 0
        %4640 = vmatprep.subr.bf16.mxu0 0
        %4641 = vmatpush1.bf16.msra.mxu0 0
        %4642 = vmatprep.subr.bf16.mxu0 0
        %4643 = vmatpush1.bf16.msra.mxu0 0
        %4644 = vmatprep.subr.bf16.mxu0 0
        %4645 = vmatpush1.bf16.msra.mxu0 0
        %4646 = vmatprep.subr.bf16.mxu0 0
        %4647 = vmatpush1.bf16.msra.mxu0 0
        %4648 = vmatprep.subr.bf16.mxu0 0
        %4649 = vmatpush1.bf16.msra.mxu0 0
        %4650 = vmatprep.subr.bf16.mxu0 0
        %4651 = vmatpush1.bf16.msra.mxu0 0
        %4652 = vmatprep.mubr.bf16.mxu0 0
        %4653 = vmatmul.mubr.bf16.gmra.mrb[0].mxu0 %v4532
        %v4654 = vpop.f32.mrb[0].mxu0
        %v4655 = vadd.f32 0.0, %v4654
        %v4656 = vpop.f32.mrb[0].mxu0
        %v4657 = vpop.f32.mrb[0].mxu0
        %v4658 = vpop.f32.mrb[0].mxu0
        %4659 = vdwg.mxu0
        %v4661 = vcombine.high %v4655, %v4655
        %v4663 = vunpack.c.l.s4 1966171168
        %v4664 = vunpack.c.0.s8 %v4663
        %v4665 = vlaneseq
        %v4666 = vshrl.u32 %v4665, 7
        %v4667 = vsub.s32 %v4664, %v4666
        %v4668 = vrot.slane %v4655, %v4667
        %v4670 = vunpack.c.l.s4 1966171168
        %v4671 = vunpack.c.0.s8 %v4670
        %v4672 = vlaneseq
        %v4673 = vshrl.u32 %v4672, 7
        %v4674 = vsub.s32 %v4671, %v4673
        %v4675 = vrot.slane %v4661, %v4674
        %v4676 = vcombine.high %v4668, %v4668
        %v4677 = vcombine.high %v4675, %v4675
        %v4679 = vunpack.c.l.s4 1966171168
        %v4680 = vunpack.c.0.s8 %v4679
        %v4681 = vlaneseq
        %v4682 = vshrl.u32 %v4681, 7
        %v4683 = vsub.s32 %v4680, %v4682
        %v4684 = vrot.slane %v4668, %v4683
        %v4686 = vunpack.c.l.s4 1966171168
        %v4687 = vunpack.c.0.s8 %v4686
        %v4688 = vlaneseq
        %v4689 = vshrl.u32 %v4688, 7
        %v4690 = vsub.s32 %v4687, %v4689
        %v4691 = vrot.slane %v4675, %v4690
        %v4693 = vunpack.c.l.s4 1966171168
        %v4694 = vunpack.c.0.s8 %v4693
        %v4695 = vlaneseq
        %v4696 = vshrl.u32 %v4695, 7
        %v4697 = vsub.s32 %v4694, %v4696
        %v4698 = vrot.slane %v4676, %v4697
        %v4700 = vunpack.c.l.s4 1966171168
        %v4701 = vunpack.c.0.s8 %v4700
        %v4702 = vlaneseq
        %v4703 = vshrl.u32 %v4702, 7
        %v4704 = vsub.s32 %v4701, %v4703
        %v4705 = vrot.slane %v4677, %v4704
        %v4706 = vcombine.high %v4684, %v4684
        %v4707 = vcombine.high %v4691, %v4691
        %v4708 = vcombine.high %v4698, %v4698
        %v4709 = vcombine.high %v4705, %v4705
        %v4710 = vlaneseq
        %v4711 = vshrl.u32 %v4710, 7
        %v4712 = vsub.s32 0, %v4711
        %v4713 = vrot.slane %v4684, %v4712
        %v4714 = vlaneseq
        %v4715 = vshrl.u32 %v4714, 7
        %v4716 = vsub.s32 0, %v4715
        %v4717 = vrot.slane %v4698, %v4716
        %v4718 = vlaneseq
        %v4719 = vshrl.u32 %v4718, 7
        %v4720 = vsub.s32 0, %v4719
        %v4721 = vrot.slane %v4706, %v4720
        %v4722 = vlaneseq
        %v4723 = vshrl.u32 %v4722, 7
        %v4724 = vsub.s32 0, %v4723
        %v4725 = vrot.slane %v4708, %v4724
        %v4726 = vlaneseq
        %v4727 = vshrl.u32 %v4726, 7
        %v4728 = vsub.s32 0, %v4727
        %v4729 = vrot.slane %v4691, %v4728
        %v4730 = vlaneseq
        %v4731 = vshrl.u32 %v4730, 7
        %v4732 = vsub.s32 0, %v4731
        %v4733 = vrot.slane %v4705, %v4732
        %v4734 = vlaneseq
        %v4735 = vshrl.u32 %v4734, 7
        %v4736 = vsub.s32 0, %v4735
        %v4737 = vrot.slane %v4707, %v4736
        %v4738 = vlaneseq
        %v4739 = vshrl.u32 %v4738, 7
        %v4740 = vsub.s32 0, %v4739
        %v4741 = vrot.slane %v4709, %v4740
        %v4750 = vadd.f32 %v907, %v4713
        %v4751 = vadd.f32 %v912, %v4717
        %v4752 = vadd.f32 %v917, %v4721
        %v4753 = vadd.f32 %v922, %v4725
        %v4754 = vadd.f32 %v927, %v4729
        %v4755 = vadd.f32 %v932, %v4733
        %v4756 = vadd.f32 %v937, %v4737
        %v4757 = vadd.f32 %v942, %v4741
        %v4758 = vtanh.pop %v4750
        %v4759 = vtanh.pop %v4751
        %v4760 = vtanh.pop %v4752
        %v4761 = vtanh.pop %v4753
        %v4762 = vtanh.pop %v4754
        %v4763 = vtanh.pop %v4755
        %v4764 = vtanh.pop %v4756
        %v4765 = vtanh.pop %v4757
        %v4766 = vmul.f32 %v4758, %v950
        %v4767 = vmul.f32 %v4759, %v950
        %v4768 = vmul.f32 %v4760, %v950
        %v4769 = vmul.f32 %v4761, %v950
        %v4770 = vmul.f32 %v4762, %v950
        %v4771 = vmul.f32 %v4763, %v950
        %v4772 = vmul.f32 %v4764, %v950
        %v4773 = vmul.f32 %v4765, %v950
        %v4774 = vsel %vm815, %v4766, 0.0
        %4775 = vadd.xlane.f32.xlu0 %v4774
        %v4776 = vpop.xlane.xlu0 %4775
        %v4777 = vsel %vm815, %v4767, 0.0
        %4778 = vadd.xlane.f32.xlu0 %v4777
        %v4779 = vpop.xlane.xlu0 %4778
        %v4780 = vsel %vm815, %v4768, 0.0
        %4781 = vadd.xlane.f32.xlu0 %v4780
        %v4782 = vpop.xlane.xlu0 %4781
        %v4783 = vsel %vm815, %v4769, 0.0
        %4784 = vadd.xlane.f32.xlu0 %v4783
        %v4785 = vpop.xlane.xlu0 %4784
        %v4786 = vsel %vm815, %v4770, 0.0
        %4787 = vadd.xlane.f32.xlu0 %v4786
        %v4788 = vpop.xlane.xlu0 %4787
        %v4789 = vsel %vm815, %v4771, 0.0
        %4790 = vadd.xlane.f32.xlu0 %v4789
        %v4791 = vpop.xlane.xlu0 %4790
        %v4792 = vsel %vm815, %v4772, 0.0
        %4793 = vadd.xlane.f32.xlu0 %v4792
        %v4794 = vpop.xlane.xlu0 %4793
        %v4795 = vsel %vm815, %v4773, 0.0
        %4796 = vadd.xlane.f32.xlu0 %v4795
        %v4797 = vpop.xlane.xlu0 %4796
        %v4806 = vlaneseq
        %v4807 = vshrl.u32 %v4806, 7
        %v4808 = vsub.s32 %v1202, %v4807
        %v4809 = vrot.slane %v4776, %v4808
        %v4810 = vlaneseq
        %v4811 = vshrl.u32 %v4810, 7
        %v4812 = vsub.s32 %v1202, %v4811
        %v4813 = vrot.slane %v4779, %v4812
        %v4814 = vlaneseq
        %v4815 = vshrl.u32 %v4814, 7
        %v4816 = vsub.s32 %v1202, %v4815
        %v4817 = vrot.slane %v4782, %v4816
        %v4818 = vlaneseq
        %v4819 = vshrl.u32 %v4818, 7
        %v4820 = vsub.s32 %v1202, %v4819
        %v4821 = vrot.slane %v4785, %v4820
        %v4822 = vlaneseq
        %v4823 = vshrl.u32 %v4822, 7
        %v4824 = vsub.s32 %v1202, %v4823
        %v4825 = vrot.slane %v4788, %v4824
        %v4826 = vlaneseq
        %v4827 = vshrl.u32 %v4826, 7
        %v4828 = vsub.s32 %v1202, %v4827
        %v4829 = vrot.slane %v4791, %v4828
        %v4830 = vlaneseq
        %v4831 = vshrl.u32 %v4830, 7
        %v4832 = vsub.s32 %v1202, %v4831
        %v4833 = vrot.slane %v4794, %v4832
        %v4834 = vlaneseq
        %v4835 = vshrl.u32 %v4834, 7
        %v4836 = vsub.s32 %v1202, %v4835
        %v4837 = vrot.slane %v4797, %v4836
        %v4838 = vsel %vm1235, %v4813, %v4809
        %v4839 = vsel %vm1237, %v4817, %v4838
        %v4840 = vsel %vm1239, %v4821, %v4839
        %v4841 = vsel %vm1241, %v4825, %v4840
        %v4842 = vsel %vm1243, %v4829, %v4841
        %v4843 = vsel %vm1245, %v4833, %v4842
        %v4844 = vsel %vm1247, %v4837, %v4843
        %v4846 = vsel %vm1250, %v4844, -inf
        %4847 = vmax.xlane.f32.xlu0 %v4846
        %v4848 = vpop.xlane.xlu0 %4847
        %v4850 = vlaneseq
        %v4851 = vshrl.u32 %v4850, 7
        %v4852 = vsub.s32 0, %v4851
        %v4853 = vrot.slane %v4848, %v4852
        %v4854 = vlaneseq
        %v4855 = vshrl.u32 %v4854, 7
        %v4856 = vsub.s32 1, %v4855
        %v4857 = vrot.slane %v4848, %v4856
        %v4858 = vlaneseq
        %v4859 = vshrl.u32 %v4858, 7
        %v4860 = vsub.s32 2, %v4859
        %v4861 = vrot.slane %v4848, %v4860
        %v4862 = vlaneseq
        %v4863 = vshrl.u32 %v4862, 7
        %v4864 = vsub.s32 3, %v4863
        %v4865 = vrot.slane %v4848, %v4864
        %v4866 = vlaneseq
        %v4867 = vshrl.u32 %v4866, 7
        %v4868 = vsub.s32 4, %v4867
        %v4869 = vrot.slane %v4848, %v4868
        %v4870 = vlaneseq
        %v4871 = vshrl.u32 %v4870, 7
        %v4872 = vsub.s32 5, %v4871
        %v4873 = vrot.slane %v4848, %v4872
        %v4874 = vlaneseq
        %v4875 = vshrl.u32 %v4874, 7
        %v4876 = vsub.s32 6, %v4875
        %v4877 = vrot.slane %v4848, %v4876
        %v4878 = vlaneseq
        %v4879 = vshrl.u32 %v4878, 7
        %v4880 = vsub.s32 7, %v4879
        %v4881 = vrot.slane %v4848, %v4880
        %v4890 = vsub.f32 %v4776, %v4853
        %v4891 = vsub.f32 %v4779, %v4857
        %v4892 = vsub.f32 %v4782, %v4861
        %v4893 = vsub.f32 %v4785, %v4865
        %v4894 = vsub.f32 %v4788, %v4869
        %v4895 = vsub.f32 %v4791, %v4873
        %v4896 = vsub.f32 %v4794, %v4877
        %v4897 = vsub.f32 %v4797, %v4881
        %v4898 = vmul.f32 %v4890, 1.442695
        %v4899 = vpow.pop %v4898
        %v4900 = vmul.f32 %v4891, 1.442695
        %v4901 = vpow.pop %v4900
        %v4902 = vmul.f32 %v4892, 1.442695
        %v4903 = vpow.pop %v4902
        %v4904 = vmul.f32 %v4893, 1.442695
        %v4905 = vpow.pop %v4904
        %v4906 = vmul.f32 %v4894, 1.442695
        %v4907 = vpow.pop %v4906
        %v4908 = vmul.f32 %v4895, 1.442695
        %v4909 = vpow.pop %v4908
        %v4910 = vmul.f32 %v4896, 1.442695
        %v4911 = vpow.pop %v4910
        %v4912 = vmul.f32 %v4897, 1.442695
        %v4913 = vpow.pop %v4912
        %4922 = vset.pattern.permute.xlu0 0
        %4923 = vperm.xlu0 %4922, %v4899
        %v4924 = vpop.permute.xlu0 %4923
        %4925 = vset.pattern.permute.xlu0 0
        %4926 = vperm.xlu0 %4925, %v4901
        %v4927 = vpop.permute.xlu0 %4926
        %4928 = vset.pattern.permute.xlu0 0
        %4929 = vperm.xlu0 %4928, %v4903
        %v4930 = vpop.permute.xlu0 %4929
        %4931 = vset.pattern.permute.xlu0 0
        %4932 = vperm.xlu0 %4931, %v4905
        %v4933 = vpop.permute.xlu0 %4932
        %4934 = vset.pattern.permute.xlu0 0
        %4935 = vperm.xlu0 %4934, %v4907
        %v4936 = vpop.permute.xlu0 %4935
        %4937 = vset.pattern.permute.xlu0 0
        %4938 = vperm.xlu0 %4937, %v4909
        %v4939 = vpop.permute.xlu0 %4938
        %4940 = vset.pattern.permute.xlu0 0
        %4941 = vperm.xlu0 %4940, %v4911
        %v4942 = vpop.permute.xlu0 %4941
        %4943 = vset.pattern.permute.xlu0 0
        %4944 = vperm.xlu0 %4943, %v4913
        %v4945 = vpop.permute.xlu0 %4944
        %v4946 = vlaneseq
        %v4947 = vshrl.u32 %v4946, 7
        %v4948 = vsub.s32 %v1202, %v4947
        %v4949 = vrot.slane %v4924, %v4948
        %v4950 = vlaneseq
        %v4951 = vshrl.u32 %v4950, 7
        %v4952 = vsub.s32 %v1202, %v4951
        %v4953 = vrot.slane %v4927, %v4952
        %v4954 = vlaneseq
        %v4955 = vshrl.u32 %v4954, 7
        %v4956 = vsub.s32 %v1202, %v4955
        %v4957 = vrot.slane %v4930, %v4956
        %v4958 = vlaneseq
        %v4959 = vshrl.u32 %v4958, 7
        %v4960 = vsub.s32 %v1202, %v4959
        %v4961 = vrot.slane %v4933, %v4960
        %v4962 = vlaneseq
        %v4963 = vshrl.u32 %v4962, 7
        %v4964 = vsub.s32 %v1202, %v4963
        %v4965 = vrot.slane %v4936, %v4964
        %v4966 = vlaneseq
        %v4967 = vshrl.u32 %v4966, 7
        %v4968 = vsub.s32 %v1202, %v4967
        %v4969 = vrot.slane %v4939, %v4968
        %v4970 = vlaneseq
        %v4971 = vshrl.u32 %v4970, 7
        %v4972 = vsub.s32 %v1202, %v4971
        %v4973 = vrot.slane %v4942, %v4972
        %v4974 = vlaneseq
        %v4975 = vshrl.u32 %v4974, 7
        %v4976 = vsub.s32 %v1202, %v4975
        %v4977 = vrot.slane %v4945, %v4976
        %v4978 = vsel %vm1235, %v4953, %v4949
        %v4979 = vsel %vm1237, %v4957, %v4978
        %v4980 = vsel %vm1239, %v4961, %v4979
        %v4981 = vsel %vm1241, %v4965, %v4980
        %v4982 = vsel %vm1243, %v4969, %v4981
        %v4983 = vsel %vm1245, %v4973, %v4982
        %v4984 = vsel %vm1247, %v4977, %v4983
        %v4986 = vsel %vm1250, %v4984, 0.0
        %4987 = vadd.xlane.f32.xlu0 %v4986
        %v4988 = vpop.xlane.xlu0 %4987
        %v4989 = vrcp.pop %v4988
        %v4991 = vlaneseq
        %v4992 = vshrl.u32 %v4991, 7
        %v4993 = vsub.s32 0, %v4992
        %v4994 = vrot.slane %v4989, %v4993
        %v4995 = vlaneseq
        %v4996 = vshrl.u32 %v4995, 7
        %v4997 = vsub.s32 1, %v4996
        %v4998 = vrot.slane %v4989, %v4997
        %v4999 = vlaneseq
        %v5000 = vshrl.u32 %v4999, 7
        %v5001 = vsub.s32 2, %v5000
        %v5002 = vrot.slane %v4989, %v5001
        %v5003 = vlaneseq
        %v5004 = vshrl.u32 %v5003, 7
        %v5005 = vsub.s32 3, %v5004
        %v5006 = vrot.slane %v4989, %v5005
        %v5007 = vlaneseq
        %v5008 = vshrl.u32 %v5007, 7
        %v5009 = vsub.s32 4, %v5008
        %v5010 = vrot.slane %v4989, %v5009
        %v5011 = vlaneseq
        %v5012 = vshrl.u32 %v5011, 7
        %v5013 = vsub.s32 5, %v5012
        %v5014 = vrot.slane %v4989, %v5013
        %v5015 = vlaneseq
        %v5016 = vshrl.u32 %v5015, 7
        %v5017 = vsub.s32 6, %v5016
        %v5018 = vrot.slane %v4989, %v5017
        %v5019 = vlaneseq
        %v5020 = vshrl.u32 %v5019, 7
        %v5021 = vsub.s32 7, %v5020
        %v5022 = vrot.slane %v4989, %v5021
        %v5031 = vmul.f32 %v4899, %v4994
        %v5032 = vmul.f32 %v4901, %v4998
        %v5033 = vmul.f32 %v4903, %v5002
        %v5034 = vmul.f32 %v4905, %v5006
        %v5035 = vmul.f32 %v4907, %v5010
        %v5036 = vmul.f32 %v4909, %v5014
        %v5037 = vmul.f32 %v4911, %v5018
        %v5038 = vmul.f32 %v4913, %v5022
        %5047 = vset.pattern.permute.xlu0 0
        %5048 = vperm.xlu0 %5047, %v5031
        %v5049 = vpop.permute.xlu0 %5048
        %5050 = vset.pattern.permute.xlu0 0
        %5051 = vperm.xlu0 %5050, %v5032
        %v5052 = vpop.permute.xlu0 %5051
        %5053 = vset.pattern.permute.xlu0 0
        %5054 = vperm.xlu0 %5053, %v5033
        %v5055 = vpop.permute.xlu0 %5054
        %5056 = vset.pattern.permute.xlu0 0
        %5057 = vperm.xlu0 %5056, %v5034
        %v5058 = vpop.permute.xlu0 %5057
        %5059 = vset.pattern.permute.xlu0 0
        %5060 = vperm.xlu0 %5059, %v5035
        %v5061 = vpop.permute.xlu0 %5060
        %5062 = vset.pattern.permute.xlu0 0
        %5063 = vperm.xlu0 %5062, %v5036
        %v5064 = vpop.permute.xlu0 %5063
        %5065 = vset.pattern.permute.xlu0 0
        %5066 = vperm.xlu0 %5065, %v5037
        %v5067 = vpop.permute.xlu0 %5066
        %5068 = vset.pattern.permute.xlu0 0
        %5069 = vperm.xlu0 %5068, %v5038
        %v5070 = vpop.permute.xlu0 %5069
        %v5071 = vlaneseq
        %v5072 = vshrl.u32 %v5071, 7
        %v5073 = vsub.s32 %v1202, %v5072
        %v5074 = vrot.slane %v5049, %v5073
        %v5075 = vlaneseq
        %v5076 = vshrl.u32 %v5075, 7
        %v5077 = vsub.s32 %v1202, %v5076
        %v5078 = vrot.slane %v5052, %v5077
        %v5079 = vlaneseq
        %v5080 = vshrl.u32 %v5079, 7
        %v5081 = vsub.s32 %v1202, %v5080
        %v5082 = vrot.slane %v5055, %v5081
        %v5083 = vlaneseq
        %v5084 = vshrl.u32 %v5083, 7
        %v5085 = vsub.s32 %v1202, %v5084
        %v5086 = vrot.slane %v5058, %v5085
        %v5087 = vlaneseq
        %v5088 = vshrl.u32 %v5087, 7
        %v5089 = vsub.s32 %v1202, %v5088
        %v5090 = vrot.slane %v5061, %v5089
        %v5091 = vlaneseq
        %v5092 = vshrl.u32 %v5091, 7
        %v5093 = vsub.s32 %v1202, %v5092
        %v5094 = vrot.slane %v5064, %v5093
        %v5095 = vlaneseq
        %v5096 = vshrl.u32 %v5095, 7
        %v5097 = vsub.s32 %v1202, %v5096
        %v5098 = vrot.slane %v5067, %v5097
        %v5099 = vlaneseq
        %v5100 = vshrl.u32 %v5099, 7
        %v5101 = vsub.s32 %v1202, %v5100
        %v5102 = vrot.slane %v5070, %v5101
        %v5103 = vsel %vm1235, %v5078, %v5074
        %v5104 = vsel %vm1237, %v5082, %v5103
        %v5105 = vsel %vm1239, %v5086, %v5104
        %v5106 = vsel %vm1241, %v5090, %v5105
        %v5107 = vsel %vm1243, %v5094, %v5106
        %v5108 = vsel %vm1245, %v5098, %v5107
        %v5109 = vsel %vm1247, %v5102, %v5108
        %s5111 = scalar_lea.vmem %s793, 32 [#allocation23]
        %5112 = vst.msk [vmem:[%s5111] sm:$0xff] %vm1250, %v5109
        %v5121 = vmul.f32 %v5049, %v796
        %v5122 = vmul.f32 %v5052, %v797
        %v5123 = vmul.f32 %v5055, %v798
        %v5124 = vmul.f32 %v5058, %v799
        %v5125 = vmul.f32 %v5061, %v800
        %v5126 = vmul.f32 %v5064, %v801
        %v5127 = vmul.f32 %v5067, %v802
        %v5128 = vmul.f32 %v5070, %v803
        %v5129 = vsel %vm815, %v5121, 0.0
        %v5130 = vrot.slane %v5129, 4
        %v5131 = vadd.f32 %v5129, %v5130
        %v5132 = vrot.slane %v5131, 2
        %v5133 = vadd.f32 %v5131, %v5132
        %v5134 = vrot.slane %v5133, 1
        %v5135 = vadd.f32 %v5133, %v5134
        %v5136 = vsel %vm815, %v5122, 0.0
        %v5137 = vrot.slane %v5136, 4
        %v5138 = vadd.f32 %v5136, %v5137
        %v5139 = vrot.slane %v5138, 2
        %v5140 = vadd.f32 %v5138, %v5139
        %v5141 = vrot.slane %v5140, 1
        %v5142 = vadd.f32 %v5140, %v5141
        %v5143 = vsel %vm815, %v5123, 0.0
        %v5144 = vrot.slane %v5143, 4
        %v5145 = vadd.f32 %v5143, %v5144
        %v5146 = vrot.slane %v5145, 2
        %v5147 = vadd.f32 %v5145, %v5146
        %v5148 = vrot.slane %v5147, 1
        %v5149 = vadd.f32 %v5147, %v5148
        %v5150 = vsel %vm815, %v5124, 0.0
        %v5151 = vrot.slane %v5150, 4
        %v5152 = vadd.f32 %v5150, %v5151
        %v5153 = vrot.slane %v5152, 2
        %v5154 = vadd.f32 %v5152, %v5153
        %v5155 = vrot.slane %v5154, 1
        %v5156 = vadd.f32 %v5154, %v5155
        %v5157 = vsel %vm815, %v5125, 0.0
        %v5158 = vrot.slane %v5157, 4
        %v5159 = vadd.f32 %v5157, %v5158
        %v5160 = vrot.slane %v5159, 2
        %v5161 = vadd.f32 %v5159, %v5160
        %v5162 = vrot.slane %v5161, 1
        %v5163 = vadd.f32 %v5161, %v5162
        %v5164 = vsel %vm815, %v5126, 0.0
        %v5165 = vrot.slane %v5164, 4
        %v5166 = vadd.f32 %v5164, %v5165
        %v5167 = vrot.slane %v5166, 2
        %v5168 = vadd.f32 %v5166, %v5167
        %v5169 = vrot.slane %v5168, 1
        %v5170 = vadd.f32 %v5168, %v5169
        %v5171 = vsel %vm815, %v5127, 0.0
        %v5172 = vrot.slane %v5171, 4
        %v5173 = vadd.f32 %v5171, %v5172
        %v5174 = vrot.slane %v5173, 2
        %v5175 = vadd.f32 %v5173, %v5174
        %v5176 = vrot.slane %v5175, 1
        %v5177 = vadd.f32 %v5175, %v5176
        %v5178 = vsel %vm815, %v5128, 0.0
        %v5179 = vrot.slane %v5178, 4
        %v5180 = vadd.f32 %v5178, %v5179
        %v5181 = vrot.slane %v5180, 2
        %v5182 = vadd.f32 %v5180, %v5181
        %v5183 = vrot.slane %v5182, 1
        %v5184 = vadd.f32 %v5182, %v5183
        %v5185 = vpack.c.bf16 %v5135, %v5135
        %v5186 = vpack.c.bf16 %v5142, %v5142
        %v5187 = vpack.c.bf16 %v5149, %v5149
        %v5188 = vpack.c.bf16 %v5156, %v5156
        %v5189 = vpack.c.bf16 %v5163, %v5163
        %v5190 = vpack.c.bf16 %v5170, %v5170
        %v5191 = vpack.c.bf16 %v5177, %v5177
        %v5192 = vpack.c.bf16 %v5184, %v5184
        %v5201 = vunpack.c.l.b16 %v5185
        %v5202 = vunpack.c.l.b16 %v5186
        %v5203 = vunpack.c.l.b16 %v5187
        %v5204 = vunpack.c.l.b16 %v5188
        %v5205 = vunpack.c.l.b16 %v5189
        %v5206 = vunpack.c.l.b16 %v5190
        %v5207 = vunpack.c.l.b16 %v5191
        %v5208 = vunpack.c.l.b16 %v5192
        %v5209 = vsel %vm1235, %v5202, %v5201
        %v5210 = vsel %vm1237, %v5203, %v5209
        %v5211 = vsel %vm1239, %v5204, %v5210
        %v5212 = vsel %vm1241, %v5205, %v5211
        %v5213 = vsel %vm1243, %v5206, %v5212
        %v5214 = vsel %vm1245, %v5207, %v5213
        %v5215 = vsel %vm1247, %v5208, %v5214
        %v5216 = vpack.c.b16 %v5215, %v5215
        %v5218 = vsel %vm815, %v5216, 0
        %5220 = vmatprep.subr.bf16.mxu0 0
        %5221 = vmatpush1.bf16.msra.mxu0 %v1629
        %5222 = vmatprep.subr.bf16.mxu0 0
        %5223 = vmatpush1.bf16.msra.mxu0 %v1630
        %5224 = vmatprep.subr.bf16.mxu0 0
        %5225 = vmatpush1.bf16.msra.mxu0 0
        %5226 = vmatprep.subr.bf16.mxu0 0
        %5227 = vmatpush1.bf16.msra.mxu0 0
        %5228 = vmatprep.subr.bf16.mxu0 0
        %5229 = vmatpush1.bf16.msra.mxu0 0
        %5230 = vmatprep.subr.bf16.mxu0 0
        %5231 = vmatpush1.bf16.msra.mxu0 0
        %5232 = vmatprep.subr.bf16.mxu0 0
        %5233 = vmatpush1.bf16.msra.mxu0 0
        %5234 = vmatprep.subr.bf16.mxu0 0
        %5235 = vmatpush1.bf16.msra.mxu0 0
        %5236 = vmatprep.subr.bf16.mxu0 0
        %5237 = vmatpush1.bf16.msra.mxu0 0
        %5238 = vmatprep.subr.bf16.mxu0 0
        %5239 = vmatpush1.bf16.msra.mxu0 0
        %5240 = vmatprep.subr.bf16.mxu0 0
        %5241 = vmatpush1.bf16.msra.mxu0 0
        %5242 = vmatprep.subr.bf16.mxu0 0
        %5243 = vmatpush1.bf16.msra.mxu0 0
        %5244 = vmatprep.subr.bf16.mxu0 0
        %5245 = vmatpush1.bf16.msra.mxu0 0
        %5246 = vmatprep.subr.bf16.mxu0 0
        %5247 = vmatpush1.bf16.msra.mxu0 0
        %5248 = vmatprep.subr.bf16.mxu0 0
        %5249 = vmatpush1.bf16.msra.mxu0 0
        %5250 = vmatprep.subr.bf16.mxu0 0
        %5251 = vmatpush1.bf16.msra.mxu0 0
        %5252 = vmatprep.mubr.bf16.mxu0 0
        %5253 = vmatmul.mubr.bf16.gmra.mrb[0].mxu0 %v5218
        %v5254 = vpop.f32.mrb[0].mxu0
        %v5255 = vadd.f32 0.0, %v5254
        %v5256 = vpop.f32.mrb[0].mxu0
        %v5257 = vpop.f32.mrb[0].mxu0
        %v5258 = vpop.f32.mrb[0].mxu0
        %5259 = vdwg.mxu0
        %v5261 = vsel %vm1682, %v4619, 0
        %5263 = vmatprep.subr.bf16.mxu0 0
        %5264 = vmatpush1.bf16.msra.mxu0 %v1680
        %5265 = vmatprep.subr.bf16.mxu0 0
        %5266 = vmatpush1.bf16.msra.mxu0 0
        %5267 = vmatprep.subr.bf16.mxu0 0
        %5268 = vmatpush1.bf16.msra.mxu0 0
        %5269 = vmatprep.subr.bf16.mxu0 0
        %5270 = vmatpush1.bf16.msra.mxu0 0
        %5271 = vmatprep.subr.bf16.mxu0 0
        %5272 = vmatpush1.bf16.msra.mxu0 0
        %5273 = vmatprep.subr.bf16.mxu0 0
        %5274 = vmatpush1.bf16.msra.mxu0 0
        %5275 = vmatprep.subr.bf16.mxu0 0
        %5276 = vmatpush1.bf16.msra.mxu0 0
        %5277 = vmatprep.subr.bf16.mxu0 0
        %5278 = vmatpush1.bf16.msra.mxu0 0
        %5279 = vmatprep.subr.bf16.mxu0 0
        %5280 = vmatpush1.bf16.msra.mxu0 0
        %5281 = vmatprep.subr.bf16.mxu0 0
        %5282 = vmatpush1.bf16.msra.mxu0 0
        %5283 = vmatprep.subr.bf16.mxu0 0
        %5284 = vmatpush1.bf16.msra.mxu0 0
        %5285 = vmatprep.subr.bf16.mxu0 0
        %5286 = vmatpush1.bf16.msra.mxu0 0
        %5287 = vmatprep.subr.bf16.mxu0 0
        %5288 = vmatpush1.bf16.msra.mxu0 0
        %5289 = vmatprep.subr.bf16.mxu0 0
        %5290 = vmatpush1.bf16.msra.mxu0 0
        %5291 = vmatprep.subr.bf16.mxu0 0
        %5292 = vmatpush1.bf16.msra.mxu0 0
        %5293 = vmatprep.subr.bf16.mxu0 0
        %5294 = vmatpush1.bf16.msra.mxu0 0
        %5295 = vmatprep.mubr.bf16.mxu0 0
        %5296 = vmatmul.mubr.bf16.gmra.mrb[0].mxu0 %v5261
        %v5297 = vpop.f32.mrb[0].mxu0
        %v5298 = vadd.f32 %v5255, %v5297
        %v5299 = vpop.f32.mrb[0].mxu0
        %v5300 = vpop.f32.mrb[0].mxu0
        %v5301 = vpop.f32.mrb[0].mxu0
        %5302 = vdwg.mxu0
        %v5303 = vadd.f32 %v5298, %v957
        %5304 = vmatprep.subr.bf16.mxu0 0
        %5305 = vmatpush1.bf16.msra.mxu0 %v1735
        %5306 = vmatprep.subr.bf16.mxu0 0
        %5307 = vmatpush1.bf16.msra.mxu0 %v1736
        %5308 = vmatprep.subr.bf16.mxu0 0
        %5309 = vmatpush1.bf16.msra.mxu0 0
        %5310 = vmatprep.subr.bf16.mxu0 0
        %5311 = vmatpush1.bf16.msra.mxu0 0
        %5312 = vmatprep.subr.bf16.mxu0 0
        %5313 = vmatpush1.bf16.msra.mxu0 0
        %5314 = vmatprep.subr.bf16.mxu0 0
        %5315 = vmatpush1.bf16.msra.mxu0 0
        %5316 = vmatprep.subr.bf16.mxu0 0
        %5317 = vmatpush1.bf16.msra.mxu0 0
        %5318 = vmatprep.subr.bf16.mxu0 0
        %5319 = vmatpush1.bf16.msra.mxu0 0
        %5320 = vmatprep.subr.bf16.mxu0 0
        %5321 = vmatpush1.bf16.msra.mxu0 0
        %5322 = vmatprep.subr.bf16.mxu0 0
        %5323 = vmatpush1.bf16.msra.mxu0 0
        %5324 = vmatprep.subr.bf16.mxu0 0
        %5325 = vmatpush1.bf16.msra.mxu0 0
        %5326 = vmatprep.subr.bf16.mxu0 0
        %5327 = vmatpush1.bf16.msra.mxu0 0
        %5328 = vmatprep.subr.bf16.mxu0 0
        %5329 = vmatpush1.bf16.msra.mxu0 0
        %5330 = vmatprep.subr.bf16.mxu0 0
        %5331 = vmatpush1.bf16.msra.mxu0 0
        %5332 = vmatprep.subr.bf16.mxu0 0
        %5333 = vmatpush1.bf16.msra.mxu0 0
        %5334 = vmatprep.subr.bf16.mxu0 0
        %5335 = vmatpush1.bf16.msra.mxu0 0
        %5336 = vmatprep.mubr.bf16.mxu0 0
        %5337 = vmatmul.mubr.bf16.gmra.mrb[0].mxu0 %v4532
        %v5338 = vpop.f32.mrb[0].mxu0
        %v5339 = vadd.f32 %v964, %v5338
        %v5340 = vpop.f32.mrb[0].mxu0
        %v5341 = vpop.f32.mrb[0].mxu0
        %v5342 = vpop.f32.mrb[0].mxu0
        %5343 = vdwg.mxu0
        %v5344 = vadd.f32 %v5303, %v5339
        %v5345 = vxor.u32 %v5344, 2147483648
        %v5346 = vmul.f32 %v5345, 1.442695
        %v5347 = vpow.pop %v5346
        %v5348 = vadd.f32 %v5347, 1.0
        %v5349 = vrcp.pop %v5348
        %v5350 = vmul.f32 1.0, %v5349
        %5352 = vrot.lane.b32.xlu0 %v5339, 64
        %v5353 = vpop.permute.xlu0 %5352
        %v5355 = vmul.f32 %v5350, %v5353
        %5357 = vrot.lane.b32.xlu0 %v5355, 64
        %v5358 = vpop.permute.xlu0 %5357
        %v5360 = vadd.f32 %v5303, %v5358
        %v5361 = vtanh.pop %v5360
        %v5362 = vsub.f32 1.0, %v5350
        %5364 = vrot.lane.b32.xlu0 %v5361, 96
        %v5365 = vpop.permute.xlu0 %5364
        %v5367 = vmul.f32 %v5362, %v5365
        %v5368 = vmul.f32 %v5350, %v4486
        %v5369 = vadd.f32 %v5367, %v5368
        %v5370 = vpack.c.bf16 %v5369, %v5369
        %5371 = vmatprep.subr.bf16.mxu0 0
        %5372 = vmatpush1.bf16.msra.mxu0 %v1818
        %5373 = vmatprep.subr.bf16.mxu0 0
        %5374 = vmatpush1.bf16.msra.mxu0 %v1819
        %5375 = vmatprep.subr.bf16.mxu0 0
        %5376 = vmatpush1.bf16.msra.mxu0 0
        %5377 = vmatprep.subr.bf16.mxu0 0
        %5378 = vmatpush1.bf16.msra.mxu0 0
        %5379 = vmatprep.subr.bf16.mxu0 0
        %5380 = vmatpush1.bf16.msra.mxu0 0
        %5381 = vmatprep.subr.bf16.mxu0 0
        %5382 = vmatpush1.bf16.msra.mxu0 0
        %5383 = vmatprep.subr.bf16.mxu0 0
        %5384 = vmatpush1.bf16.msra.mxu0 0
        %5385 = vmatprep.subr.bf16.mxu0 0
        %5386 = vmatpush1.bf16.msra.mxu0 0
        %5387 = vmatprep.subr.bf16.mxu0 0
        %5388 = vmatpush1.bf16.msra.mxu0 0
        %5389 = vmatprep.subr.bf16.mxu0 0
        %5390 = vmatpush1.bf16.msra.mxu0 0
        %5391 = vmatprep.subr.bf16.mxu0 0
        %5392 = vmatpush1.bf16.msra.mxu0 0
        %5393 = vmatprep.subr.bf16.mxu0 0
        %5394 = vmatpush1.bf16.msra.mxu0 0
        %5395 = vmatprep.subr.bf16.mxu0 0
        %5396 = vmatpush1.bf16.msra.mxu0 0
        %5397 = vmatprep.subr.bf16.mxu0 0
        %5398 = vmatpush1.bf16.msra.mxu0 0
        %5399 = vmatprep.subr.bf16.mxu0 0
        %5400 = vmatpush1.bf16.msra.mxu0 0
        %5401 = vmatprep.subr.bf16.mxu0 0
        %5402 = vmatpush1.bf16.msra.mxu0 0
        %5403 = vmatprep.mubr.bf16.mxu0 0
        %5404 = vmatmul.mubr.bf16.gmra.mrb[0].mxu0 %v5218
        %v5405 = vpop.f32.mrb[0].mxu0
        %v5406 = vadd.f32 0.0, %v5405
        %v5407 = vpop.f32.mrb[0].mxu0
        %v5408 = vpop.f32.mrb[0].mxu0
        %v5409 = vpop.f32.mrb[0].mxu0
        %5410 = vdwg.mxu0
        %5412 = vrot.lane.b32.xlu0 %v5370, 96
        %v5413 = vpop.permute.xlu0 %5412
        %v5415 = vsel %vm815, %v5413, 0
        %5417 = vmatprep.subr.bf16.mxu0 0
        %5418 = vmatpush1.bf16.msra.mxu0 %v1873
        %5419 = vmatprep.subr.bf16.mxu0 0
        %5420 = vmatpush1.bf16.msra.mxu0 %v1874
        %5421 = vmatprep.subr.bf16.mxu0 0
        %5422 = vmatpush1.bf16.msra.mxu0 0
        %5423 = vmatprep.subr.bf16.mxu0 0
        %5424 = vmatpush1.bf16.msra.mxu0 0
        %5425 = vmatprep.subr.bf16.mxu0 0
        %5426 = vmatpush1.bf16.msra.mxu0 0
        %5427 = vmatprep.subr.bf16.mxu0 0
        %5428 = vmatpush1.bf16.msra.mxu0 0
        %5429 = vmatprep.subr.bf16.mxu0 0
        %5430 = vmatpush1.bf16.msra.mxu0 0
        %5431 = vmatprep.subr.bf16.mxu0 0
        %5432 = vmatpush1.bf16.msra.mxu0 0
        %5433 = vmatprep.subr.bf16.mxu0 0
        %5434 = vmatpush1.bf16.msra.mxu0 0
        %5435 = vmatprep.subr.bf16.mxu0 0
        %5436 = vmatpush1.bf16.msra.mxu0 0
        %5437 = vmatprep.subr.bf16.mxu0 0
        %5438 = vmatpush1.bf16.msra.mxu0 0
        %5439 = vmatprep.subr.bf16.mxu0 0
        %5440 = vmatpush1.bf16.msra.mxu0 0
        %5441 = vmatprep.subr.bf16.mxu0 0
        %5442 = vmatpush1.bf16.msra.mxu0 0
        %5443 = vmatprep.subr.bf16.mxu0 0
        %5444 = vmatpush1.bf16.msra.mxu0 0
        %5445 = vmatprep.subr.bf16.mxu0 0
        %5446 = vmatpush1.bf16.msra.mxu0 0
        %5447 = vmatprep.subr.bf16.mxu0 0
        %5448 = vmatpush1.bf16.msra.mxu0 0
        %5449 = vmatprep.mubr.bf16.mxu0 0
        %5450 = vmatmul.mubr.bf16.gmra.mrb[0].mxu0 %v5415
        %v5451 = vpop.f32.mrb[0].mxu0
        %v5452 = vadd.f32 %v5406, %v5451
        %v5453 = vpop.f32.mrb[0].mxu0
        %v5454 = vpop.f32.mrb[0].mxu0
        %v5455 = vpop.f32.mrb[0].mxu0
        %5456 = vdwg.mxu0
        %5457 = vmatprep.subr.bf16.mxu0 0
        %5458 = vmatpush1.bf16.msra.mxu0 %v1924
        %5459 = vmatprep.subr.bf16.mxu0 0
        %5460 = vmatpush1.bf16.msra.mxu0 0
        %5461 = vmatprep.subr.bf16.mxu0 0
        %5462 = vmatpush1.bf16.msra.mxu0 0
        %5463 = vmatprep.subr.bf16.mxu0 0
        %5464 = vmatpush1.bf16.msra.mxu0 0
        %5465 = vmatprep.subr.bf16.mxu0 0
        %5466 = vmatpush1.bf16.msra.mxu0 0
        %5467 = vmatprep.subr.bf16.mxu0 0
        %5468 = vmatpush1.bf16.msra.mxu0 0
        %5469 = vmatprep.subr.bf16.mxu0 0
        %5470 = vmatpush1.bf16.msra.mxu0 0
        %5471 = vmatprep.subr.bf16.mxu0 0
        %5472 = vmatpush1.bf16.msra.mxu0 0
        %5473 = vmatprep.subr.bf16.mxu0 0
        %5474 = vmatpush1.bf16.msra.mxu0 0
        %5475 = vmatprep.subr.bf16.mxu0 0
        %5476 = vmatpush1.bf16.msra.mxu0 0
        %5477 = vmatprep.subr.bf16.mxu0 0
        %5478 = vmatpush1.bf16.msra.mxu0 0
        %5479 = vmatprep.subr.bf16.mxu0 0
        %5480 = vmatpush1.bf16.msra.mxu0 0
        %5481 = vmatprep.subr.bf16.mxu0 0
        %5482 = vmatpush1.bf16.msra.mxu0 0
        %5483 = vmatprep.subr.bf16.mxu0 0
        %5484 = vmatpush1.bf16.msra.mxu0 0
        %5485 = vmatprep.subr.bf16.mxu0 0
        %5486 = vmatpush1.bf16.msra.mxu0 0
        %5487 = vmatprep.subr.bf16.mxu0 0
        %5488 = vmatpush1.bf16.msra.mxu0 0
        %5489 = vmatprep.mubr.bf16.mxu0 0
        %5490 = vmatmul.mubr.bf16.gmra.mrb[0].mxu0 %v5261
        %v5491 = vpop.f32.mrb[0].mxu0
        %v5492 = vadd.f32 0.0, %v5491
        %v5493 = vpop.f32.mrb[0].mxu0
        %v5494 = vpop.f32.mrb[0].mxu0
        %v5495 = vpop.f32.mrb[0].mxu0
        %5496 = vdwg.mxu0
        %v5497 = vadd.f32 %v5452, %v5492
        %v5498 = vadd.f32 %v5497, %v971
        %s5499 = scalar_lea.vmem %s780, 32 [#allocation20]
        %5500 = vst [vmem:[%s5499] sm:$0xff] %v5498
        %5502 = vrot.lane.b32.xlu0 %v5369, 96
        %v5503 = vpop.permute.xlu0 %5502
        %5505 = vst.msk [vmem:[%s787] sm:$0xff] %vm815, %v5503
        %s5506 = sand.u32 %s405, 1
        %s5507 = scalar_lea.sflag [#allocation4], %s5506
        %s5508 = sand.u32 %s405, 1
        %s5509 = smul.addr %s5508, 40
        %s5510 = scalar_lea.vmem [#allocation20], %s5509
        %s5511 = sand.u32 %s431, 1
        %s5512 = scalar_lea.sflag [#allocation22], %s5511
        %s5513 = sand.u32 %s431, 1
        %s5514 = smul.addr %s5513, 8
        %s5515 = scalar_lea.vmem [#allocation21], %s5514
        %s5516 = sand.u32 %s457, 1
        %s5517 = sand.u32 %s457, 1
        %s5518 = smul.addr %s5517, 40
        %s5519 = scalar_lea.vmem [#allocation23], %s5518
        // Predicated region
        $region129: #{tpu_custom_call.1} parent=83 // pred_check
          %p5520 = pneg %p415
        $region130: #{tpu_custom_call.1} parent=83 // pred_check_branch
          %5522 = sbr.rel (%p5520) target = $region132
        $region131: #{tpu_custom_call.1} parent=83 // pred_region
          %s5524 = ssub.s32 640, 640
          %5525 = vsyncadd %s5507, %s5524
          %s5526 = smul.addr %s46, 128
          %s5527 = scalar_lea.hbm %s16, %s5526
          %s5528 = sshll.u32 %s5510, 4
          %s5529 = int_to_ptr.vmem [resolvable:$true] %s5528
          %5534 = dma.vmem_to_hbm [thread:$0]  %s5529, 640, %s5527, %s5507, 128, 256, 8
        $region132: #{tpu_custom_call.1} parent=83 // pred_fallthru
          _
        // Predicated region
        $region133: #{tpu_custom_call.1} parent=83 // pred_check
          %p5535 = pneg %p441
        $region134: #{tpu_custom_call.1} parent=83 // pred_check_branch
          %5537 = sbr.rel (%p5535) target = $region136
        $region135: #{tpu_custom_call.1} parent=83 // pred_region
          %s5539 = ssub.s32 128, 128
          %5540 = vsyncadd %s5512, %s5539
          %s5541 = smul.addr %s46, 128
          %s5542 = scalar_lea.hbm %s17, %s5541
          %s5544 = sshll.u32 %s5515, 4
          %s5545 = int_to_ptr.vmem [resolvable:$true] %s5544
          %5547 = dma.vmem_to_hbm [thread:$0]  %s5545, 128, %s5542, %s5512
        $region136: #{tpu_custom_call.1} parent=83 // pred_fallthru
          _
        // Predicated region
        $region137: #{tpu_custom_call.1} parent=83 // pred_check
          %p5548 = pneg %p467
        $region138: #{tpu_custom_call.1} parent=83 // pred_check_branch
          %5550 = sbr.rel (%p5548) target = $region140
        $region139: #{tpu_custom_call.1} parent=83 // pred_region
          %s5551 = smul.addr %s46, 8
          %s5552 = scalar_lea.vmem %s18, %s5551
          // Predicated region
          $region141: #{tpu_custom_call.1} parent=139 // pred_check
            _
          $region142: #{tpu_custom_call.1} parent=139 // pred_check_branch
            %5554 = sbr.rel (0) target = $region144
          $region143: #{tpu_custom_call.1} parent=139 // pred_region
            // Predicated region
            $region145: #{tpu_custom_call.1} parent=143 // pred_check
              _
            $region146: #{tpu_custom_call.1} parent=143 // pred_check_branch
              %5556 = sbr.rel (0) target = $region148
            $region147: #{tpu_custom_call.1} parent=143 // pred_region
              // Predicated region
              $region160: #{tpu_custom_call.1} parent=147 // pred_check
                _
              $region161: #{tpu_custom_call.1} parent=147 // pred_check_branch
                %5579 = sbr.rel (0) target = $region163
              $region162: #{tpu_custom_call.1} parent=147 // pred_region
                loop: start=0, step=1, limit=1
                $region164: #{tpu_custom_call.1} parent=162 // loop_pre_header
                  _
                $region165: #{tpu_custom_call.1} parent=162 // loop_header
                  %s5581 = sphi 0, %s5585
                  %p5582 = scmp.ge.s32.totalorder %s5581, 1
                  %s5586 = sphi %s5519, %s5519
                  %s5587 = sphi %s5552, %s5552
                $region166: #{tpu_custom_call.1} parent=162 // loop_header_branch
                  %5584 = sbr.rel (%p5582) target = $region170
                $region167: #{tpu_custom_call.1} parent=162 // loop_body
                  %v5588 = vld [vmem:[%s5586] sm:$0xff]
                  %5589 = vst [vmem:[%s5587] sm:$0xff] %v5588
                  %v5590 = vld [vmem:[%s5586 + $0x8] sm:$0xff]
                  %5591 = vst [vmem:[%s5587 + $0x10] sm:$0xff] %v5590
                  %v5592 = vld [vmem:[%s5586 + $0x10] sm:$0xff]
                  %5593 = vst [vmem:[%s5587 + $0x20] sm:$0xff] %v5592
                  %v5594 = vld [vmem:[%s5586 + $0x18] sm:$0xff]
                  %5595 = vst [vmem:[%s5587 + $0x30] sm:$0xff] %v5594
                  %v5596 = vld [vmem:[%s5586 + $0x20] sm:$0xff]
                  %5597 = vst [vmem:[%s5587 + $0x40] sm:$0xff] %v5596
                $region168: #{tpu_custom_call.1} parent=162 // loop_footer
                  %s5585 = sadd.s32 1, %s5581
                $region169: #{tpu_custom_call.1} parent=162 // loop_footer_branch
                  %5580 = sbr.rel target = $region165
                $region170: #{tpu_custom_call.1} parent=162 // loop_exit
                  _
              $region163: #{tpu_custom_call.1} parent=147 // pred_fallthru
                _
              // Predicated region
              $region171: #{tpu_custom_call.1} parent=147 // pred_check
                _
              $region172: #{tpu_custom_call.1} parent=147 // pred_check_branch
                %5599 = sbr.rel target = $region174
              $region173: #{tpu_custom_call.1} parent=147 // pred_region
                _
              $region174: #{tpu_custom_call.1} parent=147 // pred_fallthru
                _
            $region148: #{tpu_custom_call.1} parent=143 // pred_fallthru
              _
            // Predicated region
            $region149: #{tpu_custom_call.1} parent=143 // pred_check
              _
            $region150: #{tpu_custom_call.1} parent=143 // pred_check_branch
              %5558 = sbr.rel target = $region152
            $region151: #{tpu_custom_call.1} parent=143 // pred_region
              loop: start=0, step=1, limit=1
              $region153: #{tpu_custom_call.1} parent=151 // loop_pre_header
                _
              $region154: #{tpu_custom_call.1} parent=151 // loop_header
                %s5561 = sphi 0, %s5565
                %p5562 = scmp.ge.s32.totalorder %s5561, 1
                %s5566 = sphi %s5519, %s5519
                %s5567 = sphi %s5552, %s5552
              $region155: #{tpu_custom_call.1} parent=151 // loop_header_branch
                %5564 = sbr.rel (%p5562) target = $region159
              $region156: #{tpu_custom_call.1} parent=151 // loop_body
                %v5568 = vld [vmem:[%s5566] sm:$0xff]
                %5569 = vst [vmem:[%s5567] sm:$0xff] %v5568
                %v5570 = vld [vmem:[%s5566 + $0x8] sm:$0xff]
                %5571 = vst [vmem:[%s5567 + $0x10] sm:$0xff] %v5570
                %v5572 = vld [vmem:[%s5566 + $0x10] sm:$0xff]
                %5573 = vst [vmem:[%s5567 + $0x20] sm:$0xff] %v5572
                %v5574 = vld [vmem:[%s5566 + $0x18] sm:$0xff]
                %5575 = vst [vmem:[%s5567 + $0x30] sm:$0xff] %v5574
                %v5576 = vld [vmem:[%s5566 + $0x20] sm:$0xff]
                %5577 = vst [vmem:[%s5567 + $0x40] sm:$0xff] %v5576
              $region157: #{tpu_custom_call.1} parent=151 // loop_footer
                %s5565 = sadd.s32 1, %s5561
              $region158: #{tpu_custom_call.1} parent=151 // loop_footer_branch
                %5560 = sbr.rel target = $region154
              $region159: #{tpu_custom_call.1} parent=151 // loop_exit
                _
            $region152: #{tpu_custom_call.1} parent=143 // pred_fallthru
              _
          $region144: #{tpu_custom_call.1} parent=139 // pred_fallthru
            _
          %5600 = vnop
        $region140: #{tpu_custom_call.1} parent=83 // pred_fallthru
          _
      $region84: #{tpu_custom_call.1} parent=5 // pred_fallthru
        _
      %p5601 = scmp.le.s32.totalorder 2, %s41
      // Predicated region
      $region175: #{tpu_custom_call.1} parent=5 // pred_check
        %p5602 = pneg %p5601
      $region176: #{tpu_custom_call.1} parent=5 // pred_check_branch
        %5604 = sbr.rel (%p5602) target = $region178
      $region177: #{tpu_custom_call.1} parent=5 // pred_region
        %s5605 = ssub.s32 %s41, 2
        // Predicated region
        $region179: #{tpu_custom_call.1} parent=177 // pred_check
          %p5606 = pneg %p421
        $region180: #{tpu_custom_call.1} parent=177 // pred_check_branch
          %5608 = sbr.rel (%p5606) target = $region182
        $region181: #{tpu_custom_call.1} parent=177 // pred_region
          %s5609 = sand.u32 %s406, 1
          %s5610 = scalar_lea.sflag [#allocation4], %s5609
          %s5611 = sand.u32 %s406, 1
          %s5612 = smul.addr %s5611, 40
          %s5613 = scalar_lea.vmem [#allocation20], %s5612
          %5614 = dma.done %s5610, 640
        $region182: #{tpu_custom_call.1} parent=177 // pred_fallthru
          _
        // Predicated region
        $region183: #{tpu_custom_call.1} parent=177 // pred_check
          %p5615 = pneg %p447
        $region184: #{tpu_custom_call.1} parent=177 // pred_check_branch
          %5617 = sbr.rel (%p5615) target = $region186
        $region185: #{tpu_custom_call.1} parent=177 // pred_region
          %s5618 = sand.u32 %s432, 1
          %s5619 = scalar_lea.sflag [#allocation22], %s5618
          %s5620 = sand.u32 %s432, 1
          %s5621 = smul.addr %s5620, 8
          %s5622 = scalar_lea.vmem [#allocation21], %s5621
          %5623 = dma.done %s5619, 128
        $region186: #{tpu_custom_call.1} parent=177 // pred_fallthru
          _
        // Predicated region
        $region187: #{tpu_custom_call.1} parent=177 // pred_check
          %p5624 = pneg %p473
        $region188: #{tpu_custom_call.1} parent=177 // pred_check_branch
          %5626 = sbr.rel (%p5624) target = $region190
        $region189: #{tpu_custom_call.1} parent=177 // pred_region
          %s5627 = sand.u32 %s458, 1
          %s5628 = sand.u32 %s458, 1
          %s5629 = smul.addr %s5628, 40
          %s5630 = scalar_lea.vmem [#allocation23], %s5629
        $region190: #{tpu_custom_call.1} parent=177 // pred_fallthru
          _
      $region178: #{tpu_custom_call.1} parent=5 // pred_fallthru
        _
    $region6: #{tpu_custom_call.1} parent=1 // loop_footer
      %s45 = sadd.s32 1, %s41
    $region7: #{tpu_custom_call.1} parent=1 // loop_footer_branch
      %40 = sbr.rel target = $region3
    $region8: #{tpu_custom_call.1} parent=1 // loop_exit
      _
    %5631 = vsyncpa [#allocation3], 1
    %s5632 = scalar_lea.sflag [#allocation3], 1
    %5633 = vsyncpa %s5632, 1
    %5634 = vsyncpa [#allocation6], 1
    %s5635 = scalar_lea.sflag [#allocation6], 1
    %5636 = vsyncpa %s5635, 1
    %5637 = vsyncpa [#allocation9], 1
    %5638 = vsyncpa [#allocation12], 1
    %5639 = vsyncpa [#allocation15], 1
    %5640 = vsyncpa [#allocation18], 1
    %5641 = vsyncpa [#allocation4], 1
    %s5642 = scalar_lea.sflag [#allocation4], 1
    %5643 = vsyncpa %s5642, 1
    %5644 = vsyncpa [#allocation22], 1
    %s5645 = scalar_lea.sflag [#allocation22], 1
    %5646 = vsyncpa %s5645, 1

</llo_original>
